<compile_context>
chip_gen: v5e
topology: v5e:2x2
jax: 0.10.0
libtpu: 0.0.40
codegen_flags: <defaults>
</compile_context>

<pallas_src>
import functools

import jax
import jax.numpy as jnp
from jax.experimental import pallas as pl
from jax.experimental.pallas import tpu as pltpu


LANE = 128   # channel dims are zero-padded to the TPU lane width


def _round_up(x, m):
    return (x + m - 1) // m * m


@functools.lru_cache(maxsize=None)
def _vmem_capacity_bytes():
    """Physical VMEM per core; conservative (v7x) fallback if the query fails."""
    try:
        return int(pltpu.get_tpu_info().vmem_capacity_bytes)
    except Exception:
        return 64 * 1024 * 1024


def _vmem_limit_bytes():
    # Leave ~20% headroom for Mosaic internal scratch / pipeline buffers:
    # ~51 MiB on v7x (64 MiB parts), ~102 MiB on v5e/v6e (128 MiB parts).
    return int(_vmem_capacity_bytes() * 0.8)


def _default_tm():
    # Bigger row tiles on 128-MiB-VMEM parts push the HBM-bound 1x1 matmuls
    # toward the HBM roofline and amortize per-grid-step overhead.
    return 1024 if _vmem_capacity_bytes() >= 96 * 1024 * 1024 else 512


def _compiler_params():
    return pltpu.CompilerParams(
        dimension_semantics=("parallel",),
        vmem_limit_bytes=_vmem_limit_bytes(),
    )


def _const_spec(shape):
    """BlockSpec for a grid-invariant operand (weights / folded-BN scale+bias).

    Single-buffered (pipeline_mode=pl.Buffered(1)) since its index_map is
    constant for every grid step; falls back to the default spec on JAX
    versions without pipeline_mode support.
    """
    index_map = lambda *_: (0,) * len(shape)
    try:
        return pl.BlockSpec(shape, index_map, pipeline_mode=pl.Buffered(1))
    except Exception:
        return pl.BlockSpec(shape, index_map)


# ---------------------------------------------------------------------------
# Kernel 1: row-tiled matmul + folded-BN affine (+ optional residual) (+ReLU)
#   out = [relu]( a @ w * scale + bias [+ residual] )
# ---------------------------------------------------------------------------
def _matmul_bn_kernel(a_ref, w_ref, scale_ref, bias_ref, o_ref, *, relu):
    acc = jnp.dot(a_ref[...], w_ref[...], preferred_element_type=jnp.float32)
    y = acc * scale_ref[...] + bias_ref[...]
    if relu:
        y = jnp.maximum(y, 0.0)
    o_ref[...] = y.astype(o_ref.dtype)


def _matmul_bn_add_relu_kernel(a_ref, w_ref, scale_ref, bias_ref, res_ref, o_ref):
    acc = jnp.dot(a_ref[...], w_ref[...], preferred_element_type=jnp.float32)
    y = acc * scale_ref[...] + bias_ref[...] + res_ref[...].astype(jnp.float32)
    o_ref[...] = jnp.maximum(y, 0.0).astype(o_ref.dtype)


def matmul_bn(a, w, scale, bias, *, relu=False, residual=None,
              out_dtype=jnp.bfloat16, tm=None):
    """out = [relu](a @ w * scale + bias [+ residual]), tiled over rows of a."""
    M, K = a.shape
    _, N = w.shape

    if tm is None:
        tm = _default_tm()            # generation-aware row tile (512 / 1024)
    tm = min(tm, _round_up(M, 8))
    Mp = _round_up(M, tm)
    if Mp != M:
        a = jnp.pad(a, ((0, Mp - M), (0, 0)))
        if residual is not None:
            residual = jnp.pad(residual, ((0, Mp - M), (0, 0)))

    scale2 = scale.reshape(1, N).astype(jnp.float32)
    bias2 = bias.reshape(1, N).astype(jnp.float32)

    in_specs = [
        pl.BlockSpec((tm, K), lambda i: (i, 0)),     # activation row tile
        _const_spec((K, N)),                         # resident weight (1 buf)
        _const_spec((1, N)),                         # folded-BN scale
        _const_spec((1, N)),                         # folded-BN bias
    ]
    args = [a, w, scale2, bias2]
    if residual is None:
        kernel = functools.partial(_matmul_bn_kernel, relu=relu)
    else:
        in_specs.append(pl.BlockSpec((tm, N), lambda i: (i, 0)))
        args.append(residual)
        kernel = _matmul_bn_add_relu_kernel

    out = pl.pallas_call(
        kernel,
        out_shape=jax.ShapeDtypeStruct((Mp, N), out_dtype),
        grid=(Mp // tm,),
        in_specs=in_specs,
        out_specs=pl.BlockSpec((tm, N), lambda i: (i, 0)),
        compiler_params=_compiler_params(),
    )(*args)
    return out[:M] if Mp != M else out


# ---------------------------------------------------------------------------
# Kernel 2: 3x3 conv (pad=1, stride 1 or 2) + folded BN + ReLU, one image per
# grid step.  Per kernel row dh the (Ho, Wo, 3C) tap strip is filled with
# whole-plane static copies (direct tap stores, no concatenate, no per-row
# loop) and one (Ho*Wo, 3C) @ (3C, Cout) matmul is accumulated in f32.
# ---------------------------------------------------------------------------
def _conv3x3_s1_kernel(x_ref, w_ref, scale_ref, bias_ref, out_ref,
                       xp_ref, strip0, strip1, acc_ref, *, H, W, C, relu):
    # x_ref: (1, H, W, C) bf16; xp_ref: (H+2, W+2, C) zero-halo VMEM scratch.
    # Zero only the 1-pixel border every step (cheap, and robust under
    # megacore grid sharding); the interior is fully rewritten per image.
    xp_ref[0:1, :, :] = jnp.zeros((1, W + 2, C), xp_ref.dtype)
    xp_ref[H + 1:H + 2, :, :] = jnp.zeros((1, W + 2, C), xp_ref.dtype)
    xp_ref[:, 0:1, :] = jnp.zeros((H + 2, 1, C), xp_ref.dtype)
    xp_ref[:, W + 1:W + 2, :] = jnp.zeros((H + 2, 1, C), xp_ref.dtype)
    xp_ref[1:H + 1, 1:W + 1, :] = x_ref[0]

    for dh in range(3):
        buf = strip0 if dh % 2 == 0 else strip1      # alternate strip buffers
        for dw in range(3):                          # lane-aligned tap slices
            buf[:, :, dw * C:(dw + 1) * C] = xp_ref[dh:dh + H, dw:dw + W, :]
        part = jnp.dot(buf[...].reshape(H * W, 3 * C), w_ref[dh],
                       preferred_element_type=jnp.float32)
        acc_ref[...] = part if dh == 0 else acc_ref[...] + part

    y = acc_ref[...] * scale_ref[...] + bias_ref[...]
    if relu:
        y = jnp.maximum(y, 0.0)
    out_ref[0] = y.astype(out_ref.dtype)


def _conv3x3_s2_kernel(e_ref, o_in_ref, w_ref, scale_ref, bias_ref, out_ref,
                       strip0, strip1, acc_ref, *, Ho, Wo, C, relu):
    # e_ref / o_in_ref: (1, Ho, 2, Wo, C) even / odd W-parity slabs with H
    # pre-split into (row-pair, row-parity), so every read below is a static
    # contiguous slice (no strided loads).  Halo taps are explicit zeros.
    for dh in range(3):
        buf = strip0 if dh % 2 == 0 else strip1
        if dh == 0:          # input rows 2*oh - 1: pad row for oh=0, odd rows
            lo = 1
            e_rows = e_ref[0, 0:Ho - 1, 1, :, :]
            o_rows = o_in_ref[0, 0:Ho - 1, 1, :, :]
            buf[0:1] = jnp.zeros((1, Wo, 3 * C), buf.dtype)
        elif dh == 1:        # input rows 2*oh: even rows
            lo = 0
            e_rows = e_ref[0, :, 0, :, :]
            o_rows = o_in_ref[0, :, 0, :, :]
        else:                # input rows 2*oh + 1: odd rows
            lo = 0
            e_rows = e_ref[0, :, 1, :, :]
            o_rows = o_in_ref[0, :, 1, :, :]

        # dw=0 taps: left pad column, then odd input columns shifted by one.
        buf[:, 0:1, 0:C] = jnp.zeros((Ho, 1, C), buf.dtype)
        buf[lo:Ho, 1:Wo, 0:C] = o_rows[:, 0:Wo - 1, :]
        # dw=1 taps: even input columns.
        buf[lo:Ho, :, C:2 * C] = e_rows
        # dw=2 taps: odd input columns.
        buf[lo:Ho, :, 2 * C:3 * C] = o_rows

        part = jnp.dot(buf[...].reshape(Ho * Wo, 3 * C), w_ref[dh],
                       preferred_element_type=jnp.float32)
        acc_ref[...] = part if dh == 0 else acc_ref[...] + part

    y = acc_ref[...] * scale_ref[...] + bias_ref[...]
    if relu:
        y = jnp.maximum(y, 0.0)
    out_ref[0] = y.astype(out_ref.dtype)


def conv3x3_bn(x, w_hwio, scale, bias, *, stride, relu=True,
               out_dtype=jnp.bfloat16):
    """3x3 conv (pad=1, stride in {1,2}) with fused folded-BN (+ReLU).

    x: (N, H, W, C) bf16, channels already padded to LANE.  For stride=2,
    H and W must be even.  Returns a (N*Ho*Wo, Cout) matrix.
    """
    N, H, W, C = x.shape
    kh, kw, _, Cout = w_hwio.shape
    assert (kh, kw) == (3, 3)
    w3 = w_hwio.reshape(3, 3 * C, Cout)               # per-dh (3C, Cout) slabs
    scale2 = scale.reshape(1, Cout).astype(jnp.float32)
    bias2 = bias.reshape(1, Cout).astype(jnp.float32)

    if stride == 1:
        Ho, Wo = H, W
        kernel = functools.partial(_conv3x3_s1_kernel, H=H, W=W, C=C, relu=relu)
        data = [x]
        data_specs = [pl.BlockSpec((1, H, W, C), lambda n: (n, 0, 0, 0))]
        scratch = [pltpu.VMEM((H + 2, W + 2, C), jnp.bfloat16)]
    else:
        assert stride == 2 and H % 2 == 0 and W % 2 == 0, \
            "stride-2 conv2 expects even spatial dims"
        Ho, Wo = H // 2, W // 2
        # Single glue pass: W-parity split; the H split into (pair, parity) is
        # a free reshape.  All halo / subsample handling is in-kernel.
        even = x[:, :, 0::2, :].reshape(N, Ho, 2, Wo, C)
        odd = x[:, :, 1::2, :].reshape(N, Ho, 2, Wo, C)
        kernel = functools.partial(_conv3x3_s2_kernel, Ho=Ho, Wo=Wo, C=C,
                                   relu=relu)
        data = [even, odd]
        data_specs = [
            pl.BlockSpec((1, Ho, 2, Wo, C), lambda n: (n, 0, 0, 0, 0)),
            pl.BlockSpec((1, Ho, 2, Wo, C), lambda n: (n, 0, 0, 0, 0)),
        ]
        scratch = []

    scratch += [
        pltpu.VMEM((Ho, Wo, 3 * C), jnp.bfloat16),     # strip buffer 0
        pltpu.VMEM((Ho, Wo, 3 * C), jnp.bfloat16),     # strip buffer 1
        pltpu.VMEM((Ho * Wo, Cout), jnp.float32),      # f32 accumulator
    ]
    in_specs = data_specs + [
        _const_spec((3, 3 * C, Cout)),
        _const_spec((1, Cout)),
        _const_spec((1, Cout)),
    ]

    out = pl.pallas_call(
        kernel,
        out_shape=jax.ShapeDtypeStruct((N, Ho * Wo, Cout), out_dtype),
        grid=(N,),
        in_specs=in_specs,
        out_specs=pl.BlockSpec((1, Ho * Wo, Cout), lambda n: (n, 0, 0)),
        scratch_shapes=scratch,
        compiler_params=_compiler_params(),
    )(*data, w3, scale2, bias2)
    return out.reshape(N * Ho * Wo, Cout)


# ---------------------------------------------------------------------------
# Glue: BN folding, parameter init
# ---------------------------------------------------------------------------
def fold_bn(gamma, beta, mean, var, eps=1e-5):
    scale = gamma / jnp.sqrt(var + eps)
    return scale, beta - mean * scale


def _pad_vec(v, n):
    return jnp.pad(v, (0, n - v.shape[0]))


def init_bottleneck_params(key, in_planes, planes, stride):
    exp = 4
    ks = jax.random.split(key, 8)

    def conv_w(k, kh, kw, cin, cout):  # HWIO weight layout
        return 0.1 * jax.random.normal(k, (kh, kw, cin, cout), jnp.float32)

    def bn(k, c):
        k1, k2, k3, k4 = jax.random.split(k, 4)
        gamma = 1.0 + 0.1 * jax.random.normal(k1, (c,), jnp.float32)
        beta = 0.1 * jax.random.normal(k2, (c,), jnp.float32)
        mean = 0.1 * jax.random.normal(k3, (c,), jnp.float32)
        var = 0.5 + 0.5 * jnp.abs(jax.random.normal(k4, (c,), jnp.float32))
        return gamma, beta, mean, var

    params = {
        "w1": conv_w(ks[0], 1, 1, in_planes, planes),
        "bn1": bn(ks[1], planes),
        "w2": conv_w(ks[2], 3, 3, planes, planes),
        "bn2": bn(ks[3], planes),
        "w3": conv_w(ks[4], 1, 1, planes, exp * planes),
        "bn3": bn(ks[5], exp * planes),
    }
    if stride != 1 or in_planes != exp * planes:
        params["ws"] = conv_w(ks[6], 1, 1, in_planes, exp * planes)
        params["bns"] = bn(ks[7], exp * planes)
    return params


# ---------------------------------------------------------------------------
# Bottleneck forward (Pallas)
# ---------------------------------------------------------------------------
def bottleneck_forward(x_nchw, params, stride, out_dtype=jnp.float32):
    # NCHW -> NHWC (channels on the lane axis).  In a full network this
    # transpose / channel-pad would be done once outside the residual stack,
    # and out_dtype=bf16 would halve the final writeback traffic.
    x = jnp.transpose(x_nchw, (0, 2, 3, 1))
    N, H, W, Cin = x.shape
    planes = params["w1"].shape[-1]
    exp_planes = params["w3"].shape[-1]

    cin_p = _round_up(Cin, LANE)
    mid_p = _round_up(planes, LANE)
    exp_p = _round_up(exp_planes, LANE)

    # channel-pad + bf16 cast once (lane-dense, MXU-native operands)
    xc = jnp.pad(x, ((0, 0), (0, 0), (0, 0), (0, cin_p - Cin))).astype(jnp.bfloat16)

    s1, b1 = fold_bn(*params["bn1"])
    s2, b2 = fold_bn(*params["bn2"])
    s3, b3 = fold_bn(*params["bn3"])

    w1p = jnp.pad(params["w1"].reshape(Cin, planes),
                  ((0, cin_p - Cin), (0, mid_p - planes))).astype(jnp.bfloat16)
    w2p = jnp.pad(params["w2"],
                  ((0, 0), (0, 0), (0, mid_p - planes), (0, mid_p - planes))
                  ).astype(jnp.bfloat16)
    w3p = jnp.pad(params["w3"].reshape(planes, exp_planes),
                  ((0, mid_p - planes), (0, exp_p - exp_planes))).astype(jnp.bfloat16)

    # conv1 (1x1) + bn1 + relu: one lane-dense matmul over all pixels
    out1 = matmul_bn(xc.reshape(N * H * W, cin_p), w1p,
                     _pad_vec(s1, mid_p), _pad_vec(b1, mid_p), relu=True)
    out1 = out1.reshape(N, H, W, mid_p)

    # conv2 (3x3, stride, pad=1) + bn2 + relu: per-dh strip accumulation,
    # halo handled in-kernel (no host-side pad round trip).
    out2 = conv3x3_bn(out1, w2p, _pad_vec(s2, mid_p), _pad_vec(b2, mid_p),
                      stride=stride, relu=True)
    Ho = (H + 2 - 3) // stride + 1
    Wo = (W + 2 - 3) // stride + 1

    # shortcut branch
    if "ws" in params:
        ss, bs = fold_bn(*params["bns"])
        wsp = jnp.pad(params["ws"].reshape(Cin, exp_planes),
                      ((0, cin_p - Cin), (0, exp_p - exp_planes))).astype(jnp.bfloat16)
        xs = xc if stride == 1 else xc[:, ::stride, ::stride, :]
        shortcut = matmul_bn(xs.reshape(N * Ho * Wo, cin_p), wsp,
                             _pad_vec(ss, exp_p), _pad_vec(bs, exp_p),
                             relu=False)
    else:
        shortcut = xc.reshape(N * H * W, cin_p)   # identity: cin_p == exp_p here

    # conv3 (1x1) + bn3 + residual add + relu, fused in one kernel
    out3 = matmul_bn(out2, w3p, _pad_vec(s3, exp_p), _pad_vec(b3, exp_p),
                     residual=shortcut, out_dtype=out_dtype)
    out3 = out3.reshape(N, Ho, Wo, exp_p)[..., :exp_planes]
    return jnp.transpose(out3, (0, 3, 1, 2))  # back to NCHW


# ---------------------------------------------------------------------------
# Pure-JAX f32 reference (correctness check)
# ---------------------------------------------------------------------------
def ref_forward(x_nchw, params, stride):
    x = jnp.transpose(x_nchw, (0, 2, 3, 1))

    def conv(h, w, s, pad):
        return jax.lax.conv_general_dilated(
            h, w, (s, s), ((pad, pad), (pad, pad)),
            dimension_numbers=("NHWC", "HWIO", "NHWC"))

    def bn(h, bnp):
        sc, bi = fold_bn(*bnp)
        return h * sc + bi

    out = jax.nn.relu(bn(conv(x, params["w1"], 1, 0), params["bn1"]))
    out = jax.nn.relu(bn(conv(out, params["w2"], stride, 1), params["bn2"]))
    out = bn(conv(out, params["w3"], 1, 0), params["bn3"])
    if "ws" in params:
        sc = bn(conv(x, params["ws"], stride, 0), params["bns"])
    else:
        sc = x
    out = jax.nn.relu(out + sc)
    return jnp.transpose(out, (0, 3, 1, 2))


if __name__ == "__main__":
    key = jax.random.PRNGKey(0)
    kx, kp = jax.random.split(key)

    in_planes, planes, stride = 8, 4, 2          # expansion*planes = 16
    x = jax.random.normal(kx, (2, in_planes, 16, 16), jnp.float32)  # NCHW

    params = init_bottleneck_params(kp, in_planes, planes, stride)

    fwd = jax.jit(bottleneck_forward, static_argnames=("stride",))
    out = jax.block_until_ready(fwd(x, params, stride=stride))

    assert out.shape == (2, 4 * planes, 8, 8), out.shape
    ref = ref_forward(x, params, stride)
    err = float(jnp.max(jnp.abs(out - ref)))
    assert jnp.allclose(out, ref, atol=5e-2, rtol=5e-2), err

    print("KERNEL_OK")
</pallas_src>

<mosaic_0001>
module attributes {stable_mosaic.version = 11 : i64} {
  func.func @_matmul_bn_kernel(%arg0: i32, %arg1: memref<512x128xbf16, #tpu.memory_space<vmem>>, %arg2: memref<128x128xbf16, #tpu.memory_space<vmem>>, %arg3: memref<1x128xf32, #tpu.memory_space<vmem>>, %arg4: memref<1x128xf32, #tpu.memory_space<vmem>>, %arg5: memref<512x128xbf16, #tpu.memory_space<vmem>>) attributes {dimension_semantics = [#tpu.dimension_semantics<parallel>], iteration_bounds = array<i64: 1>, scalar_prefetch = 0 : i64, scratch_operands = 0 : i64, tpu.core_type = #tpu.core_type<tc>, window_params = [{transform_indices = @transform_0, window_bounds = array<i64: 512, 128>}, {pipeline_mode = #tpu.pipeline_mode<synchronous>, transform_indices = @transform_1, window_bounds = array<i64: 128, 128>}, {pipeline_mode = #tpu.pipeline_mode<synchronous>, transform_indices = @transform_2, window_bounds = array<i64: 1, 128>}, {pipeline_mode = #tpu.pipeline_mode<synchronous>, transform_indices = @transform_3, window_bounds = array<i64: 1, 128>}, {transform_indices = @transform_4, window_bounds = array<i64: 512, 128>}]} {
    %c0 = arith.constant 0 : index
    %c0_0 = arith.constant 0 : index
    %0 = vector.load %arg1[%c0, %c0_0] : memref<512x128xbf16, #tpu.memory_space<vmem>>, vector<512x128xbf16>
    %c0_1 = arith.constant 0 : index
    %c0_2 = arith.constant 0 : index
    %1 = vector.load %arg2[%c0_1, %c0_2] : memref<128x128xbf16, #tpu.memory_space<vmem>>, vector<128x128xbf16>
    %cst = arith.constant dense<0.000000e+00> : vector<512x128xf32>
    %2 = tpu.matmul %0, %1, %cst {dimension_numbers = #tpu.dot_dimension_numbers<[1], [0], [0], [1], [0, 0, 1, 1], [], []>} : vector<512x128xbf16>, vector<128x128xbf16>, vector<512x128xf32> -> vector<512x128xf32>
    %c0_3 = arith.constant 0 : index
    %c0_4 = arith.constant 0 : index
    %3 = vector.load %arg3[%c0_3, %c0_4] : memref<1x128xf32, #tpu.memory_space<vmem>>, vector<1x128xf32>
    %4 = vector.broadcast %3 : vector<1x128xf32> to vector<512x128xf32>
    %5 = arith.mulf %2, %4 : vector<512x128xf32>
    %c0_5 = arith.constant 0 : index
    %c0_6 = arith.constant 0 : index
    %6 = vector.load %arg4[%c0_5, %c0_6] : memref<1x128xf32, #tpu.memory_space<vmem>>, vector<1x128xf32>
    %7 = vector.broadcast %6 : vector<1x128xf32> to vector<512x128xf32>
    %8 = arith.addf %5, %7 : vector<512x128xf32>
    %cst_7 = arith.constant 0.000000e+00 : f32
    %9 = vector.broadcast %cst_7 : f32 to vector<512x128xf32>
    %10 = arith.maximumf %8, %9 : vector<512x128xf32>
    %11 = arith.truncf %10 : vector<512x128xf32> to vector<512x128xbf16>
    %c0_8 = arith.constant 0 : index
    %c0_9 = arith.constant 0 : index
    %12 = vector.load %arg5[%c0_8, %c0_9] : memref<512x128xbf16, #tpu.memory_space<vmem>>, vector<512x128xbf16>
    tpu.vector_store %arg5[%c0_8, %c0_9], %11 {strides = array<i32>} : memref<512x128xbf16, #tpu.memory_space<vmem>>, vector<512x128xbf16>,
    return
  }
  func.func @transform_0(%arg0: i32) -> (i32, i32) {
    %c0_i32 = arith.constant 0 : i32
    %c0_i32_0 = arith.constant 0 : i32
    return %arg0, %c0_i32 : i32, i32
  }
  func.func @transform_1(%arg0: i32) -> (i32, i32) {
    %c0_i32 = arith.constant 0 : i32
    %c0_i32_0 = arith.constant 0 : i32
    %c0_i32_1 = arith.constant 0 : i32
    return %c0_i32, %c0_i32_0 : i32, i32
  }
  func.func @transform_2(%arg0: i32) -> (i32, i32) {
    %c0_i32 = arith.constant 0 : i32
    %c0_i32_0 = arith.constant 0 : i32
    %c0_i32_1 = arith.constant 0 : i32
    return %c0_i32, %c0_i32_0 : i32, i32
  }
  func.func @transform_3(%arg0: i32) -> (i32, i32) {
    %c0_i32 = arith.constant 0 : i32
    %c0_i32_0 = arith.constant 0 : i32
    %c0_i32_1 = arith.constant 0 : i32
    return %c0_i32, %c0_i32_0 : i32, i32
  }
  func.func @transform_4(%arg0: i32) -> (i32, i32) {
    %c0_i32 = arith.constant 0 : i32
    %c0_i32_0 = arith.constant 0 : i32
    return %arg0, %c0_i32 : i32, i32
  }
}

module attributes {stable_mosaic.version = 11 : i64} {
  func.func @_conv3x3_s2_kernel(%arg0: i32, %arg1: memref<1x8x2x8x128xbf16, #tpu.memory_space<vmem>>, %arg2: memref<1x8x2x8x128xbf16, #tpu.memory_space<vmem>>, %arg3: memref<3x384x128xbf16, #tpu.memory_space<vmem>>, %arg4: memref<1x128xf32, #tpu.memory_space<vmem>>, %arg5: memref<1x128xf32, #tpu.memory_space<vmem>>, %arg6: memref<1x64x128xbf16, #tpu.memory_space<vmem>>, %arg7: memref<8x8x384xbf16, #tpu.memory_space<vmem>>, %arg8: memref<8x8x384xbf16, #tpu.memory_space<vmem>>, %arg9: memref<64x128xf32, #tpu.memory_space<vmem>>) attributes {dimension_semantics = [#tpu.dimension_semantics<parallel>], iteration_bounds = array<i64: 2>, scalar_prefetch = 0 : i64, scratch_operands = 3 : i64, tpu.core_type = #tpu.core_type<tc>, window_params = [{transform_indices = @transform_0, window_bounds = array<i64: 1, 8, 2, 8, 128>}, {transform_indices = @transform_1, window_bounds = array<i64: 1, 8, 2, 8, 128>}, {pipeline_mode = #tpu.pipeline_mode<synchronous>, transform_indices = @transform_2, window_bounds = array<i64: 3, 384, 128>}, {pipeline_mode = #tpu.pipeline_mode<synchronous>, transform_indices = @transform_3, window_bounds = array<i64: 1, 128>}, {pipeline_mode = #tpu.pipeline_mode<synchronous>, transform_indices = @transform_4, window_bounds = array<i64: 1, 128>}, {transform_indices = @transform_5, window_bounds = array<i64: 1, 64, 128>}]} {
    %c0 = arith.constant 0 : index
    %c0_0 = arith.constant 0 : index
    %c1 = arith.constant 1 : index
    %c0_1 = arith.constant 0 : index
    %c0_2 = arith.constant 0 : index
    %0 = vector.load %arg1[%c0, %c0_0, %c1, %c0_1, %c0_2] : memref<1x8x2x8x128xbf16, #tpu.memory_space<vmem>>, vector<1x7x1x8x128xbf16>
    %1 = vector.shape_cast %0 : vector<1x7x1x8x128xbf16> to vector<7x8x128xbf16>
    %c0_3 = arith.constant 0 : index
    %c0_4 = arith.constant 0 : index
    %c1_5 = arith.constant 1 : index
    %c0_6 = arith.constant 0 : index
    %c0_7 = arith.constant 0 : index
    %2 = vector.load %arg2[%c0_3, %c0_4, %c1_5, %c0_6, %c0_7] : memref<1x8x2x8x128xbf16, #tpu.memory_space<vmem>>, vector<1x7x1x8x128xbf16>
    %3 = vector.shape_cast %2 : vector<1x7x1x8x128xbf16> to vector<7x8x128xbf16>
    %cst = arith.constant 0.000000e+00 : bf16
    %4 = vector.broadcast %cst : bf16 to vector<1x8x384xbf16>
    %c0_8 = arith.constant 0 : index
    %c0_9 = arith.constant 0 : index
    %c0_10 = arith.constant 0 : index
    %5 = vector.load %arg7[%c0_8, %c0_9, %c0_10] : memref<8x8x384xbf16, #tpu.memory_space<vmem>>, vector<1x8x384xbf16>
    tpu.vector_store %arg7[%c0_8, %c0_9, %c0_10], %4 {strides = array<i32>} : memref<8x8x384xbf16, #tpu.memory_space<vmem>>, vector<1x8x384xbf16>,
    %cst_11 = arith.constant 0.000000e+00 : bf16
    %6 = vector.broadcast %cst_11 : bf16 to vector<8x1x128xbf16>
    %c0_12 = arith.constant 0 : index
    %c0_13 = arith.constant 0 : index
    %c0_14 = arith.constant 0 : index
    %7 = vector.load %arg7[%c0_12, %c0_13, %c0_14] : memref<8x8x384xbf16, #tpu.memory_space<vmem>>, vector<8x1x128xbf16>
    tpu.vector_store %arg7[%c0_12, %c0_13, %c0_14], %6 {strides = array<i32>} : memref<8x8x384xbf16, #tpu.memory_space<vmem>>, vector<8x1x128xbf16>,
    %8 = vector.extract_strided_slice %3 {offsets = [0, 0, 0], sizes = [7, 7, 128], strides = [1, 1, 1]} : vector<7x8x128xbf16> to vector<7x7x128xbf16>
    %c1_15 = arith.constant 1 : index
    %c1_16 = arith.constant 1 : index
    %c0_17 = arith.constant 0 : index
    %9 = vector.load %arg7[%c1_15, %c1_16, %c0_17] : memref<8x8x384xbf16, #tpu.memory_space<vmem>>, vector<7x7x128xbf16>
    tpu.vector_store %arg7[%c1_15, %c1_16, %c0_17], %8 {strides = array<i32>} : memref<8x8x384xbf16, #tpu.memory_space<vmem>>, vector<7x7x128xbf16>,
    %c1_18 = arith.constant 1 : index
    %c0_19 = arith.constant 0 : index
    %c128 = arith.constant 128 : index
    %10 = vector.load %arg7[%c1_18, %c0_19, %c128] : memref<8x8x384xbf16, #tpu.memory_space<vmem>>, vector<7x8x128xbf16>
    tpu.vector_store %arg7[%c1_18, %c0_19, %c128], %1 {strides = array<i32>} : memref<8x8x384xbf16, #tpu.memory_space<vmem>>, vector<7x8x128xbf16>,
    %c1_20 = arith.constant 1 : index
    %c0_21 = arith.constant 0 : index
    %c256 = arith.constant 256 : index
    %11 = vector.load %arg7[%c1_20, %c0_21, %c256] : memref<8x8x384xbf16, #tpu.memory_space<vmem>>, vector<7x8x128xbf16>
    tpu.vector_store %arg7[%c1_20, %c0_21, %c256], %3 {strides = array<i32>} : memref<8x8x384xbf16, #tpu.memory_space<vmem>>, vector<7x8x128xbf16>,
    %c0_22 = arith.constant 0 : index
    %c0_23 = arith.constant 0 : index
    %c0_24 = arith.constant 0 : index
    %12 = vector.load %arg7[%c0_22, %c0_23, %c0_24] : memref<8x8x384xbf16, #tpu.memory_space<vmem>>, vector<8x8x384xbf16>
    %13 = vector.shape_cast %12 : vector<8x8x384xbf16> to vector<64x384xbf16>
    %c0_25 = arith.constant 0 : index
    %c0_26 = arith.constant 0 : index
    %c0_27 = arith.constant 0 : index
    %14 = vector.load %arg3[%c0_25, %c0_26, %c0_27] : memref<3x384x128xbf16, #tpu.memory_space<vmem>>, vector<1x384x128xbf16>
    %15 = vector.shape_cast %14 : vector<1x384x128xbf16> to vector<384x128xbf16>
    %cst_28 = arith.constant dense<0.000000e+00> : vector<64x128xf32>
    %16 = tpu.matmul %13, %15, %cst_28 {dimension_numbers = #tpu.dot_dimension_numbers<[1], [0], [0], [1], [0, 0, 1, 1], [], []>} : vector<64x384xbf16>, vector<384x128xbf16>, vector<64x128xf32> -> vector<64x128xf32>
    %c0_29 = arith.constant 0 : index
    %c0_30 = arith.constant 0 : index
    %17 = vector.load %arg9[%c0_29, %c0_30] : memref<64x128xf32, #tpu.memory_space<vmem>>, vector<64x128xf32>
    tpu.vector_store %arg9[%c0_29, %c0_30], %16 {strides = array<i32>} : memref<64x128xf32, #tpu.memory_space<vmem>>, vector<64x128xf32>,
    %c0_31 = arith.constant 0 : index
    %c0_32 = arith.constant 0 : index
    %c0_33 = arith.constant 0 : index
    %c0_34 = arith.constant 0 : index
    %c0_35 = arith.constant 0 : index
    %18 = vector.load %arg1[%c0_31, %c0_32, %c0_33, %c0_34, %c0_35] : memref<1x8x2x8x128xbf16, #tpu.memory_space<vmem>>, vector<1x8x1x8x128xbf16>
    %19 = vector.shape_cast %18 : vector<1x8x1x8x128xbf16> to vector<8x8x128xbf16>
    %c0_36 = arith.constant 0 : index
    %c0_37 = arith.constant 0 : index
    %c0_38 = arith.constant 0 : index
    %c0_39 = arith.constant 0 : index
    %c0_40 = arith.constant 0 : index
    %20 = vector.load %arg2[%c0_36, %c0_37, %c0_38, %c0_39, %c0_40] : memref<1x8x2x8x128xbf16, #tpu.memory_space<vmem>>, vector<1x8x1x8x128xbf16>
    %21 = vector.shape_cast %20 : vector<1x8x1x8x128xbf16> to vector<8x8x128xbf16>
    %cst_41 = arith.constant 0.000000e+00 : bf16
    %22 = vector.broadcast %cst_41 : bf16 to vector<8x1x128xbf16>
    %c0_42 = arith.constant 0 : index
    %c0_43 = arith.constant 0 : index
    %c0_44 = arith.constant 0 : index
    %23 = vector.load %arg8[%c0_42, %c0_43, %c0_44] : memref<8x8x384xbf16, #tpu.memory_space<vmem>>, vector<8x1x128xbf16>
    tpu.vector_store %arg8[%c0_42, %c0_43, %c0_44], %22 {strides = array<i32>} : memref<8x8x384xbf16, #tpu.memory_space<vmem>>, vector<8x1x128xbf16>,
    %24 = vector.extract_strided_slice %21 {offsets = [0, 0, 0], sizes = [8, 7, 128], strides = [1, 1, 1]} : vector<8x8x128xbf16> to vector<8x7x128xbf16>
    %c0_45 = arith.constant 0 : index
    %c1_46 = arith.constant 1 : index
    %c0_47 = arith.constant 0 : index
    %25 = vector.load %arg8[%c0_45, %c1_46, %c0_47] : memref<8x8x384xbf16, #tpu.memory_space<vmem>>, vector<8x7x128xbf16>
    tpu.vector_store %arg8[%c0_45, %c1_46, %c0_47], %24 {strides = array<i32>} : memref<8x8x384xbf16, #tpu.memory_space<vmem>>, vector<8x7x128xbf16>,
    %c0_48 = arith.constant 0 : index
    %c0_49 = arith.constant 0 : index
    %c128_50 = arith.constant 128 : index
    %26 = vector.load %arg8[%c0_48, %c0_49, %c128_50] : memref<8x8x384xbf16, #tpu.memory_space<vmem>>, vector<8x8x128xbf16>
    tpu.vector_store %arg8[%c0_48, %c0_49, %c128_50], %19 {strides = array<i32>} : memref<8x8x384xbf16, #tpu.memory_space<vmem>>, vector<8x8x128xbf16>,
    %c0_51 = arith.constant 0 : index
    %c0_52 = arith.constant 0 : index
    %c256_53 = arith.constant 256 : index
    %27 = vector.load %arg8[%c0_51, %c0_52, %c256_53] : memref<8x8x384xbf16, #tpu.memory_space<vmem>>, vector<8x8x128xbf16>
    tpu.vector_store %arg8[%c0_51, %c0_52, %c256_53], %21 {strides = array<i32>} : memref<8x8x384xbf16, #tpu.memory_space<vmem>>, vector<8x8x128xbf16>,
    %c0_54 = arith.constant 0 : index
    %c0_55 = arith.constant 0 : index
    %c0_56 = arith.constant 0 : index
    %28 = vector.load %arg8[%c0_54, %c0_55, %c0_56] : memref<8x8x384xbf16, #tpu.memory_space<vmem>>, vector<8x8x384xbf16>
    %29 = vector.shape_cast %28 : vector<8x8x384xbf16> to vector<64x384xbf16>
    %c1_57 = arith.constant 1 : index
    %c0_58 = arith.constant 0 : index
    %c0_59 = arith.constant 0 : index
    %30 = vector.load %arg3[%c1_57, %c0_58, %c0_59] : memref<3x384x128xbf16, #tpu.memory_space<vmem>>, vector<1x384x128xbf16>
    %31 = vector.shape_cast %30 : vector<1x384x128xbf16> to vector<384x128xbf16>
    %cst_60 = arith.constant dense<0.000000e+00> : vector<64x128xf32>
    %32 = tpu.matmul %29, %31, %cst_60 {dimension_numbers = #tpu.dot_dimension_numbers<[1], [0], [0], [1], [0, 0, 1, 1], [], []>} : vector<64x384xbf16>, vector<384x128xbf16>, vector<64x128xf32> -> vector<64x128xf32>
    %c0_61 = arith.constant 0 : index
    %c0_62 = arith.constant 0 : index
    %33 = vector.load %arg9[%c0_61, %c0_62] : memref<64x128xf32, #tpu.memory_space<vmem>>, vector<64x128xf32>
    %34 = arith.addf %33, %32 : vector<64x128xf32>
    %c0_63 = arith.constant 0 : index
    %c0_64 = arith.constant 0 : index
    %35 = vector.load %arg9[%c0_63, %c0_64] : memref<64x128xf32, #tpu.memory_space<vmem>>, vector<64x128xf32>
    tpu.vector_store %arg9[%c0_63, %c0_64], %34 {strides = array<i32>} : memref<64x128xf32, #tpu.memory_space<vmem>>, vector<64x128xf32>,
    %c0_65 = arith.constant 0 : index
    %c0_66 = arith.constant 0 : index
    %c1_67 = arith.constant 1 : index
    %c0_68 = arith.constant 0 : index
    %c0_69 = arith.constant 0 : index
    %36 = vector.load %arg1[%c0_65, %c0_66, %c1_67, %c0_68, %c0_69] : memref<1x8x2x8x128xbf16, #tpu.memory_space<vmem>>, vector<1x8x1x8x128xbf16>
    %37 = vector.shape_cast %36 : vector<1x8x1x8x128xbf16> to vector<8x8x128xbf16>
    %c0_70 = arith.constant 0 : index
    %c0_71 = arith.constant 0 : index
    %c1_72 = arith.constant 1 : index
    %c0_73 = arith.constant 0 : index
    %c0_74 = arith.constant 0 : index
    %38 = vector.load %arg2[%c0_70, %c0_71, %c1_72, %c0_73, %c0_74] : memref<1x8x2x8x128xbf16, #tpu.memory_space<vmem>>, vector<1x8x1x8x128xbf16>
    %39 = vector.shape_cast %38 : vector<1x8x1x8x128xbf16> to vector<8x8x128xbf16>
    %cst_75 = arith.constant 0.000000e+00 : bf16
    %40 = vector.broadcast %cst_75 : bf16 to vector<8x1x128xbf16>
    %c0_76 = arith.constant 0 : index
    %c0_77 = arith.constant 0 : index
    %c0_78 = arith.constant 0 : index
    %41 = vector.load %arg7[%c0_76, %c0_77, %c0_78] : memref<8x8x384xbf16, #tpu.memory_space<vmem>>, vector<8x1x128xbf16>
    tpu.vector_store %arg7[%c0_76, %c0_77, %c0_78], %40 {strides = array<i32>} : memref<8x8x384xbf16, #tpu.memory_space<vmem>>, vector<8x1x128xbf16>,
    %42 = vector.extract_strided_slice %39 {offsets = [0, 0, 0], sizes = [8, 7, 128], strides = [1, 1, 1]} : vector<8x8x128xbf16> to vector<8x7x128xbf16>
    %c0_79 = arith.constant 0 : index
    %c1_80 = arith.constant 1 : index
    %c0_81 = arith.constant 0 : index
    %43 = vector.load %arg7[%c0_79, %c1_80, %c0_81] : memref<8x8x384xbf16, #tpu.memory_space<vmem>>, vector<8x7x128xbf16>
    tpu.vector_store %arg7[%c0_79, %c1_80, %c0_81], %42 {strides = array<i32>} : memref<8x8x384xbf16, #tpu.memory_space<vmem>>, vector<8x7x128xbf16>,
    %c0_82 = arith.constant 0 : index
    %c0_83 = arith.constant 0 : index
    %c128_84 = arith.constant 128 : index
    %44 = vector.load %arg7[%c0_82, %c0_83, %c128_84] : memref<8x8x384xbf16, #tpu.memory_space<vmem>>, vector<8x8x128xbf16>
    tpu.vector_store %arg7[%c0_82, %c0_83, %c128_84], %37 {strides = array<i32>} : memref<8x8x384xbf16, #tpu.memory_space<vmem>>, vector<8x8x128xbf16>,
    %c0_85 = arith.constant 0 : index
    %c0_86 = arith.constant 0 : index
    %c256_87 = arith.constant 256 : index
    %45 = vector.load %arg7[%c0_85, %c0_86, %c256_87] : memref<8x8x384xbf16, #tpu.memory_space<vmem>>, vector<8x8x128xbf16>
    tpu.vector_store %arg7[%c0_85, %c0_86, %c256_87], %39 {strides = array<i32>} : memref<8x8x384xbf16, #tpu.memory_space<vmem>>, vector<8x8x128xbf16>,
    %c0_88 = arith.constant 0 : index
    %c0_89 = arith.constant 0 : index
    %c0_90 = arith.constant 0 : index
    %46 = vector.load %arg7[%c0_88, %c0_89, %c0_90] : memref<8x8x384xbf16, #tpu.memory_space<vmem>>, vector<8x8x384xbf16>
    %47 = vector.shape_cast %46 : vector<8x8x384xbf16> to vector<64x384xbf16>
    %c2 = arith.constant 2 : index
    %c0_91 = arith.constant 0 : index
    %c0_92 = arith.constant 0 : index
    %48 = vector.load %arg3[%c2, %c0_91, %c0_92] : memref<3x384x128xbf16, #tpu.memory_space<vmem>>, vector<1x384x128xbf16>
    %49 = vector.shape_cast %48 : vector<1x384x128xbf16> to vector<384x128xbf16>
    %cst_93 = arith.constant dense<0.000000e+00> : vector<64x128xf32>
    %50 = tpu.matmul %47, %49, %cst_93 {dimension_numbers = #tpu.dot_dimension_numbers<[1], [0], [0], [1], [0, 0, 1, 1], [], []>} : vector<64x384xbf16>, vector<384x128xbf16>, vector<64x128xf32> -> vector<64x128xf32>
    %c0_94 = arith.constant 0 : index
    %c0_95 = arith.constant 0 : index
    %51 = vector.load %arg9[%c0_94, %c0_95] : memref<64x128xf32, #tpu.memory_space<vmem>>, vector<64x128xf32>
    %52 = arith.addf %51, %50 : vector<64x128xf32>
    %c0_96 = arith.constant 0 : index
    %c0_97 = arith.constant 0 : index
    %53 = vector.load %arg9[%c0_96, %c0_97] : memref<64x128xf32, #tpu.memory_space<vmem>>, vector<64x128xf32>
    tpu.vector_store %arg9[%c0_96, %c0_97], %52 {strides = array<i32>} : memref<64x128xf32, #tpu.memory_space<vmem>>, vector<64x128xf32>,
    %c0_98 = arith.constant 0 : index
    %c0_99 = arith.constant 0 : index
    %54 = vector.load %arg9[%c0_98, %c0_99] : memref<64x128xf32, #tpu.memory_space<vmem>>, vector<64x128xf32>
    %c0_100 = arith.constant 0 : index
    %c0_101 = arith.constant 0 : index
    %55 = vector.load %arg4[%c0_100, %c0_101] : memref<1x128xf32, #tpu.memory_space<vmem>>, vector<1x128xf32>
    %56 = vector.broadcast %55 : vector<1x128xf32> to vector<64x128xf32>
    %57 = arith.mulf %54, %56 : vector<64x128xf32>
    %c0_102 = arith.constant 0 : index
    %c0_103 = arith.constant 0 : index
    %58 = vector.load %arg5[%c0_102, %c0_103] : memref<1x128xf32, #tpu.memory_space<vmem>>, vector<1x128xf32>
    %59 = vector.broadcast %58 : vector<1x128xf32> to vector<64x128xf32>
    %60 = arith.addf %57, %59 : vector<64x128xf32>
    %cst_104 = arith.constant 0.000000e+00 : f32
    %61 = vector.broadcast %cst_104 : f32 to vector<64x128xf32>
    %62 = arith.maximumf %60, %61 : vector<64x128xf32>
    %63 = arith.truncf %62 : vector<64x128xf32> to vector<64x128xbf16>
    %c0_105 = arith.constant 0 : index
    %c0_106 = arith.constant 0 : index
    %c0_107 = arith.constant 0 : index
    %64 = vector.load %arg6[%c0_105, %c0_106, %c0_107] : memref<1x64x128xbf16, #tpu.memory_space<vmem>>, vector<1x64x128xbf16>
    %65 = vector.shape_cast %64 : vector<1x64x128xbf16> to vector<64x128xbf16>
    %66 = vector.shape_cast %63 : vector<64x128xbf16> to vector<1x64x128xbf16>
    tpu.vector_store %arg6[%c0_105, %c0_106, %c0_107], %66 {strides = array<i32>} : memref<1x64x128xbf16, #tpu.memory_space<vmem>>, vector<1x64x128xbf16>,
    return
  }
  func.func @transform_0(%arg0: i32) -> (i32, i32, i32, i32, i32) {
    %c0_i32 = arith.constant 0 : i32
    %c0_i32_0 = arith.constant 0 : i32
    %c0_i32_1 = arith.constant 0 : i32
    %c0_i32_2 = arith.constant 0 : i32
    %c0_i32_3 = arith.constant 0 : i32
    return %arg0, %c0_i32, %c0_i32_0, %c0_i32_1, %c0_i32_2 : i32, i32, i32, i32, i32
  }
  func.func @transform_1(%arg0: i32) -> (i32, i32, i32, i32, i32) {
    %c0_i32 = arith.constant 0 : i32
    %c0_i32_0 = arith.constant 0 : i32
    %c0_i32_1 = arith.constant 0 : i32
    %c0_i32_2 = arith.constant 0 : i32
    %c0_i32_3 = arith.constant 0 : i32
    return %arg0, %c0_i32, %c0_i32_0, %c0_i32_1, %c0_i32_2 : i32, i32, i32, i32, i32
  }
  func.func @transform_2(%arg0: i32) -> (i32, i32, i32) {
    %c0_i32 = arith.constant 0 : i32
    %c0_i32_0 = arith.constant 0 : i32
    %c0_i32_1 = arith.constant 0 : i32
    %c0_i32_2 = arith.constant 0 : i32
    return %c0_i32, %c0_i32_0, %c0_i32_1 : i32, i32, i32
  }
  func.func @transform_3(%arg0: i32) -> (i32, i32) {
    %c0_i32 = arith.constant 0 : i32
    %c0_i32_0 = arith.constant 0 : i32
    %c0_i32_1 = arith.constant 0 : i32
    return %c0_i32, %c0_i32_0 : i32, i32
  }
  func.func @transform_4(%arg0: i32) -> (i32, i32) {
    %c0_i32 = arith.constant 0 : i32
    %c0_i32_0 = arith.constant 0 : i32
    %c0_i32_1 = arith.constant 0 : i32
    return %c0_i32, %c0_i32_0 : i32, i32
  }
  func.func @transform_5(%arg0: i32) -> (i32, i32, i32) {
    %c0_i32 = arith.constant 0 : i32
    %c0_i32_0 = arith.constant 0 : i32
    %c0_i32_1 = arith.constant 0 : i32
    return %arg0, %c0_i32, %c0_i32_0 : i32, i32, i32
  }
}

module attributes {stable_mosaic.version = 11 : i64} {
  func.func @_matmul_bn_kernel(%arg0: i32, %arg1: memref<128x128xbf16, #tpu.memory_space<vmem>>, %arg2: memref<128x128xbf16, #tpu.memory_space<vmem>>, %arg3: memref<1x128xf32, #tpu.memory_space<vmem>>, %arg4: memref<1x128xf32, #tpu.memory_space<vmem>>, %arg5: memref<128x128xbf16, #tpu.memory_space<vmem>>) attributes {dimension_semantics = [#tpu.dimension_semantics<parallel>], iteration_bounds = array<i64: 1>, scalar_prefetch = 0 : i64, scratch_operands = 0 : i64, tpu.core_type = #tpu.core_type<tc>, window_params = [{transform_indices = @transform_0, window_bounds = array<i64: 128, 128>}, {pipeline_mode = #tpu.pipeline_mode<synchronous>, transform_indices = @transform_1, window_bounds = array<i64: 128, 128>}, {pipeline_mode = #tpu.pipeline_mode<synchronous>, transform_indices = @transform_2, window_bounds = array<i64: 1, 128>}, {pipeline_mode = #tpu.pipeline_mode<synchronous>, transform_indices = @transform_3, window_bounds = array<i64: 1, 128>}, {transform_indices = @transform_4, window_bounds = array<i64: 128, 128>}]} {
    %c0 = arith.constant 0 : index
    %c0_0 = arith.constant 0 : index
    %0 = vector.load %arg1[%c0, %c0_0] : memref<128x128xbf16, #tpu.memory_space<vmem>>, vector<128x128xbf16>
    %c0_1 = arith.constant 0 : index
    %c0_2 = arith.constant 0 : index
    %1 = vector.load %arg2[%c0_1, %c0_2] : memref<128x128xbf16, #tpu.memory_space<vmem>>, vector<128x128xbf16>
    %cst = arith.constant dense<0.000000e+00> : vector<128x128xf32>
    %2 = tpu.matmul %0, %1, %cst {dimension_numbers = #tpu.dot_dimension_numbers<[1], [0], [0], [1], [0, 0, 1, 1], [], []>} : vector<128x128xbf16>, vector<128x128xbf16>, vector<128x128xf32> -> vector<128x128xf32>
    %c0_3 = arith.constant 0 : index
    %c0_4 = arith.constant 0 : index
    %3 = vector.load %arg3[%c0_3, %c0_4] : memref<1x128xf32, #tpu.memory_space<vmem>>, vector<1x128xf32>
    %4 = vector.broadcast %3 : vector<1x128xf32> to vector<128x128xf32>
    %5 = arith.mulf %2, %4 : vector<128x128xf32>
    %c0_5 = arith.constant 0 : index
    %c0_6 = arith.constant 0 : index
    %6 = vector.load %arg4[%c0_5, %c0_6] : memref<1x128xf32, #tpu.memory_space<vmem>>, vector<1x128xf32>
    %7 = vector.broadcast %6 : vector<1x128xf32> to vector<128x128xf32>
    %8 = arith.addf %5, %7 : vector<128x128xf32>
    %9 = arith.truncf %8 : vector<128x128xf32> to vector<128x128xbf16>
    %c0_7 = arith.constant 0 : index
    %c0_8 = arith.constant 0 : index
    %10 = vector.load %arg5[%c0_7, %c0_8] : memref<128x128xbf16, #tpu.memory_space<vmem>>, vector<128x128xbf16>
    tpu.vector_store %arg5[%c0_7, %c0_8], %9 {strides = array<i32>} : memref<128x128xbf16, #tpu.memory_space<vmem>>, vector<128x128xbf16>,
    return
  }
  func.func @transform_0(%arg0: i32) -> (i32, i32) {
    %c0_i32 = arith.constant 0 : i32
    %c0_i32_0 = arith.constant 0 : i32
    return %arg0, %c0_i32 : i32, i32
  }
  func.func @transform_1(%arg0: i32) -> (i32, i32) {
    %c0_i32 = arith.constant 0 : i32
    %c0_i32_0 = arith.constant 0 : i32
    %c0_i32_1 = arith.constant 0 : i32
    return %c0_i32, %c0_i32_0 : i32, i32
  }
  func.func @transform_2(%arg0: i32) -> (i32, i32) {
    %c0_i32 = arith.constant 0 : i32
    %c0_i32_0 = arith.constant 0 : i32
    %c0_i32_1 = arith.constant 0 : i32
    return %c0_i32, %c0_i32_0 : i32, i32
  }
  func.func @transform_3(%arg0: i32) -> (i32, i32) {
    %c0_i32 = arith.constant 0 : i32
    %c0_i32_0 = arith.constant 0 : i32
    %c0_i32_1 = arith.constant 0 : i32
    return %c0_i32, %c0_i32_0 : i32, i32
  }
  func.func @transform_4(%arg0: i32) -> (i32, i32) {
    %c0_i32 = arith.constant 0 : i32
    %c0_i32_0 = arith.constant 0 : i32
    return %arg0, %c0_i32 : i32, i32
  }
}

module attributes {stable_mosaic.version = 11 : i64} {
  func.func @_matmul_bn_add_relu_kernel(%arg0: i32, %arg1: memref<128x128xbf16, #tpu.memory_space<vmem>>, %arg2: memref<128x128xbf16, #tpu.memory_space<vmem>>, %arg3: memref<1x128xf32, #tpu.memory_space<vmem>>, %arg4: memref<1x128xf32, #tpu.memory_space<vmem>>, %arg5: memref<128x128xbf16, #tpu.memory_space<vmem>>, %arg6: memref<128x128xf32, #tpu.memory_space<vmem>>) attributes {dimension_semantics = [#tpu.dimension_semantics<parallel>], iteration_bounds = array<i64: 1>, scalar_prefetch = 0 : i64, scratch_operands = 0 : i64, tpu.core_type = #tpu.core_type<tc>, window_params = [{transform_indices = @transform_0, window_bounds = array<i64: 128, 128>}, {pipeline_mode = #tpu.pipeline_mode<synchronous>, transform_indices = @transform_1, window_bounds = array<i64: 128, 128>}, {pipeline_mode = #tpu.pipeline_mode<synchronous>, transform_indices = @transform_2, window_bounds = array<i64: 1, 128>}, {pipeline_mode = #tpu.pipeline_mode<synchronous>, transform_indices = @transform_3, window_bounds = array<i64: 1, 128>}, {transform_indices = @transform_4, window_bounds = array<i64: 128, 128>}, {transform_indices = @transform_5, window_bounds = array<i64: 128, 128>}]} {
    %c0 = arith.constant 0 : index
    %c0_0 = arith.constant 0 : index
    %0 = vector.load %arg1[%c0, %c0_0] : memref<128x128xbf16, #tpu.memory_space<vmem>>, vector<128x128xbf16>
    %c0_1 = arith.constant 0 : index
    %c0_2 = arith.constant 0 : index
    %1 = vector.load %arg2[%c0_1, %c0_2] : memref<128x128xbf16, #tpu.memory_space<vmem>>, vector<128x128xbf16>
    %cst = arith.constant dense<0.000000e+00> : vector<128x128xf32>
    %2 = tpu.matmul %0, %1, %cst {dimension_numbers = #tpu.dot_dimension_numbers<[1], [0], [0], [1], [0, 0, 1, 1], [], []>} : vector<128x128xbf16>, vector<128x128xbf16>, vector<128x128xf32> -> vector<128x128xf32>
    %c0_3 = arith.constant 0 : index
    %c0_4 = arith.constant 0 : index
    %3 = vector.load %arg3[%c0_3, %c0_4] : memref<1x128xf32, #tpu.memory_space<vmem>>, vector<1x128xf32>
    %4 = vector.broadcast %3 : vector<1x128xf32> to vector<128x128xf32>
    %5 = arith.mulf %2, %4 : vector<128x128xf32>
    %c0_5 = arith.constant 0 : index
    %c0_6 = arith.constant 0 : index
    %6 = vector.load %arg4[%c0_5, %c0_6] : memref<1x128xf32, #tpu.memory_space<vmem>>, vector<1x128xf32>
    %7 = vector.broadcast %6 : vector<1x128xf32> to vector<128x128xf32>
    %8 = arith.addf %5, %7 : vector<128x128xf32>
    %c0_7 = arith.constant 0 : index
    %c0_8 = arith.constant 0 : index
    %9 = vector.load %arg5[%c0_7, %c0_8] : memref<128x128xbf16, #tpu.memory_space<vmem>>, vector<128x128xbf16>
    %10 = arith.extf %9 : vector<128x128xbf16> to vector<128x128xf32>
    %11 = arith.addf %8, %10 : vector<128x128xf32>
    %cst_9 = arith.constant 0.000000e+00 : f32
    %12 = vector.broadcast %cst_9 : f32 to vector<128x128xf32>
    %13 = arith.maximumf %11, %12 : vector<128x128xf32>
    %c0_10 = arith.constant 0 : index
    %c0_11 = arith.constant 0 : index
    %14 = vector.load %arg6[%c0_10, %c0_11] : memref<128x128xf32, #tpu.memory_space<vmem>>, vector<128x128xf32>
    tpu.vector_store %arg6[%c0_10, %c0_11], %13 {strides = array<i32>} : memref<128x128xf32, #tpu.memory_space<vmem>>, vector<128x128xf32>,
    return
  }
  func.func @transform_0(%arg0: i32) -> (i32, i32) {
    %c0_i32 = arith.constant 0 : i32
    %c0_i32_0 = arith.constant 0 : i32
    return %arg0, %c0_i32 : i32, i32
  }
  func.func @transform_1(%arg0: i32) -> (i32, i32) {
    %c0_i32 = arith.constant 0 : i32
    %c0_i32_0 = arith.constant 0 : i32
    %c0_i32_1 = arith.constant 0 : i32
    return %c0_i32, %c0_i32_0 : i32, i32
  }
  func.func @transform_2(%arg0: i32) -> (i32, i32) {
    %c0_i32 = arith.constant 0 : i32
    %c0_i32_0 = arith.constant 0 : i32
    %c0_i32_1 = arith.constant 0 : i32
    return %c0_i32, %c0_i32_0 : i32, i32
  }
  func.func @transform_3(%arg0: i32) -> (i32, i32) {
    %c0_i32 = arith.constant 0 : i32
    %c0_i32_0 = arith.constant 0 : i32
    %c0_i32_1 = arith.constant 0 : i32
    return %c0_i32, %c0_i32_0 : i32, i32
  }
  func.func @transform_4(%arg0: i32) -> (i32, i32) {
    %c0_i32 = arith.constant 0 : i32
    %c0_i32_0 = arith.constant 0 : i32
    return %arg0, %c0_i32 : i32, i32
  }
  func.func @transform_5(%arg0: i32) -> (i32, i32) {
    %c0_i32 = arith.constant 0 : i32
    %c0_i32_0 = arith.constant 0 : i32
    return %arg0, %c0_i32 : i32, i32
  }
}

</mosaic_0001>

<llo_original>
// kernel: bottleneck_forward.4
$region0: #{bottleneck_forward.4}
  #allocation0 [shape = 'u32[]', space=smem, size = 0x4, offset = 0x4, fixed_abs, tag = 'smem constant byte address 0x4 - core index']
  #allocation1 [shape = 'u32[72,128]{1,0:T(1,128)}', space=vmem, size = 0x9000, scoped, tag = 'internal scratch']
  %s0 = inlined_call_operand.vmem [shape: bf16[512,128], index: 0, kind: input, shape index: {}]
  %s1 = inlined_call_operand.vmem [shape: bf16[128,128], index: 1, kind: input, shape index: {}]
  %s2 = inlined_call_operand.vmem [shape: f32[1,128], index: 2, kind: input, shape index: {}]
  %s3 = inlined_call_operand.vmem [shape: f32[1,128], index: 3, kind: input, shape index: {}]
  %s4 = inlined_call_operand.vmem [shape: bf16[512,128], index: 4, kind: output, shape index: {}]
  %s5 = sld [smem:[#allocation0]]
  $region26: #{bottleneck_forward.4} parent=0
    _
  %s7 = ssub.s32 1, %s5
  %s8 = scalar_select 0, %s7, %s5
  // Predicated region
  $region2: #{bottleneck_forward.4} parent=0 // pred_check
    _
  $region3: #{bottleneck_forward.4} parent=0 // pred_check_branch
    %10 = sbr.rel (0) target = $region5
  $region4: #{bottleneck_forward.4} parent=0 // pred_region
    _
  $region5: #{bottleneck_forward.4} parent=0 // pred_fallthru
    _
  // Predicated region
  $region6: #{bottleneck_forward.4} parent=0 // pred_check
    _
  $region7: #{bottleneck_forward.4} parent=0 // pred_check_branch
    %12 = sbr.rel (0) target = $region9
  $region8: #{bottleneck_forward.4} parent=0 // pred_region
    _
  $region9: #{bottleneck_forward.4} parent=0 // pred_fallthru
    _
  // Predicated region
  $region10: #{bottleneck_forward.4} parent=0 // pred_check
    _
  $region11: #{bottleneck_forward.4} parent=0 // pred_check_branch
    %14 = sbr.rel (0) target = $region13
  $region12: #{bottleneck_forward.4} parent=0 // pred_region
    _
  $region13: #{bottleneck_forward.4} parent=0 // pred_fallthru
    _
  // Predicated region
  $region14: #{bottleneck_forward.4} parent=0 // pred_check
    _
  $region15: #{bottleneck_forward.4} parent=0 // pred_check_branch
    %16 = sbr.rel (0) target = $region17
  $region16: #{bottleneck_forward.4} parent=0 // pred_region
    _
  $region17: #{bottleneck_forward.4} parent=0 // pred_fallthru
    _
  %v17 = vld [vmem:[%s0] sm:$0xf]
  %v18 = vld [vmem:[%s0 + $0x4] sm:$0xf]
  %v19 = vld [vmem:[%s0 + $0x8] sm:$0xf]
  %v20 = vld [vmem:[%s0 + $0xc] sm:$0xf]
  %v21 = vld [vmem:[%s0 + $0x10] sm:$0xf]
  %v22 = vld [vmem:[%s0 + $0x14] sm:$0xf]
  %v23 = vld [vmem:[%s0 + $0x18] sm:$0xf]
  %v24 = vld [vmem:[%s0 + $0x1c] sm:$0xf]
  %v25 = vld [vmem:[%s0 + $0x20] sm:$0xf]
  %v26 = vld [vmem:[%s0 + $0x24] sm:$0xf]
  %v27 = vld [vmem:[%s0 + $0x28] sm:$0xf]
  %v28 = vld [vmem:[%s0 + $0x2c] sm:$0xf]
  %v29 = vld [vmem:[%s0 + $0x30] sm:$0xf]
  %v30 = vld [vmem:[%s0 + $0x34] sm:$0xf]
  %v31 = vld [vmem:[%s0 + $0x38] sm:$0xf]
  %v32 = vld [vmem:[%s0 + $0x3c] sm:$0xf]
  %v33 = vld [vmem:[%s0 + $0x40] sm:$0xf]
  %v34 = vld [vmem:[%s0 + $0x44] sm:$0xf]
  %v35 = vld [vmem:[%s0 + $0x48] sm:$0xf]
  %v36 = vld [vmem:[%s0 + $0x4c] sm:$0xf]
  %v37 = vld [vmem:[%s0 + $0x50] sm:$0xf]
  %v38 = vld [vmem:[%s0 + $0x54] sm:$0xf]
  %v39 = vld [vmem:[%s0 + $0x58] sm:$0xf]
  %v40 = vld [vmem:[%s0 + $0x5c] sm:$0xf]
  %v41 = vld [vmem:[%s0 + $0x60] sm:$0xf]
  %v42 = vld [vmem:[%s0 + $0x64] sm:$0xf]
  %v43 = vld [vmem:[%s0 + $0x68] sm:$0xf]
  %v44 = vld [vmem:[%s0 + $0x6c] sm:$0xf]
  %v45 = vld [vmem:[%s0 + $0x70] sm:$0xf]
  %v46 = vld [vmem:[%s0 + $0x74] sm:$0xf]
  %v47 = vld [vmem:[%s0 + $0x78] sm:$0xf]
  %v48 = vld [vmem:[%s0 + $0x7c] sm:$0xf]
  %v49 = vld [vmem:[%s0 + $0x80] sm:$0xf]
  %v50 = vld [vmem:[%s0 + $0x84] sm:$0xf]
  %v51 = vld [vmem:[%s0 + $0x88] sm:$0xf]
  %v52 = vld [vmem:[%s0 + $0x8c] sm:$0xf]
  %v53 = vld [vmem:[%s0 + $0x90] sm:$0xf]
  %v54 = vld [vmem:[%s0 + $0x94] sm:$0xf]
  %v55 = vld [vmem:[%s0 + $0x98] sm:$0xf]
  %v56 = vld [vmem:[%s0 + $0x9c] sm:$0xf]
  %v57 = vld [vmem:[%s0 + $0xa0] sm:$0xf]
  %v58 = vld [vmem:[%s0 + $0xa4] sm:$0xf]
  %v59 = vld [vmem:[%s0 + $0xa8] sm:$0xf]
  %v60 = vld [vmem:[%s0 + $0xac] sm:$0xf]
  %v61 = vld [vmem:[%s0 + $0xb0] sm:$0xf]
  %v62 = vld [vmem:[%s0 + $0xb4] sm:$0xf]
  %v63 = vld [vmem:[%s0 + $0xb8] sm:$0xf]
  %v64 = vld [vmem:[%s0 + $0xbc] sm:$0xf]
  %v65 = vld [vmem:[%s0 + $0xc0] sm:$0xf]
  %v66 = vld [vmem:[%s0 + $0xc4] sm:$0xf]
  %v67 = vld [vmem:[%s0 + $0xc8] sm:$0xf]
  %v68 = vld [vmem:[%s0 + $0xcc] sm:$0xf]
  %v69 = vld [vmem:[%s0 + $0xd0] sm:$0xf]
  %v70 = vld [vmem:[%s0 + $0xd4] sm:$0xf]
  %v71 = vld [vmem:[%s0 + $0xd8] sm:$0xf]
  %v72 = vld [vmem:[%s0 + $0xdc] sm:$0xf]
  %v73 = vld [vmem:[%s0 + $0xe0] sm:$0xf]
  %v74 = vld [vmem:[%s0 + $0xe4] sm:$0xf]
  %v75 = vld [vmem:[%s0 + $0xe8] sm:$0xf]
  %v76 = vld [vmem:[%s0 + $0xec] sm:$0xf]
  %v77 = vld [vmem:[%s0 + $0xf0] sm:$0xf]
  %v78 = vld [vmem:[%s0 + $0xf4] sm:$0xf]
  %v79 = vld [vmem:[%s0 + $0xf8] sm:$0xf]
  %v80 = vld [vmem:[%s0 + $0xfc] sm:$0xf]
  %v81 = vld [vmem:[%s1] sm:$0xf]
  %v82 = vld [vmem:[%s1 + $0x4] sm:$0xf]
  %v83 = vld [vmem:[%s1 + $0x8] sm:$0xf]
  %v84 = vld [vmem:[%s1 + $0xc] sm:$0xf]
  %v85 = vld [vmem:[%s1 + $0x10] sm:$0xf]
  %v86 = vld [vmem:[%s1 + $0x14] sm:$0xf]
  %v87 = vld [vmem:[%s1 + $0x18] sm:$0xf]
  %v88 = vld [vmem:[%s1 + $0x1c] sm:$0xf]
  %v89 = vld [vmem:[%s1 + $0x20] sm:$0xf]
  %v90 = vld [vmem:[%s1 + $0x24] sm:$0xf]
  %v91 = vld [vmem:[%s1 + $0x28] sm:$0xf]
  %v92 = vld [vmem:[%s1 + $0x2c] sm:$0xf]
  %v93 = vld [vmem:[%s1 + $0x30] sm:$0xf]
  %v94 = vld [vmem:[%s1 + $0x34] sm:$0xf]
  %v95 = vld [vmem:[%s1 + $0x38] sm:$0xf]
  %v96 = vld [vmem:[%s1 + $0x3c] sm:$0xf]
  %v161 = vunpack.c.l.b16 %v17
  %v162 = vunpack.c.l.b16 %v18
  %v163 = vunpack.c.l.b16 %v19
  %v164 = vunpack.c.l.b16 %v20
  %v165 = vunpack.c.l.b16 %v21
  %v166 = vunpack.c.l.b16 %v22
  %v167 = vunpack.c.l.b16 %v23
  %v168 = vunpack.c.l.b16 %v24
  %v169 = vunpack.c.l.b16 %v25
  %v170 = vunpack.c.l.b16 %v26
  %v171 = vunpack.c.l.b16 %v27
  %v172 = vunpack.c.l.b16 %v28
  %v173 = vunpack.c.l.b16 %v29
  %v174 = vunpack.c.l.b16 %v30
  %v175 = vunpack.c.l.b16 %v31
  %v176 = vunpack.c.l.b16 %v32
  %v177 = vunpack.c.l.b16 %v33
  %v178 = vunpack.c.l.b16 %v34
  %v179 = vunpack.c.l.b16 %v35
  %v180 = vunpack.c.l.b16 %v36
  %v181 = vunpack.c.l.b16 %v37
  %v182 = vunpack.c.l.b16 %v38
  %v183 = vunpack.c.l.b16 %v39
  %v184 = vunpack.c.l.b16 %v40
  %v185 = vunpack.c.l.b16 %v41
  %v186 = vunpack.c.l.b16 %v42
  %v187 = vunpack.c.l.b16 %v43
  %v188 = vunpack.c.l.b16 %v44
  %v189 = vunpack.c.l.b16 %v45
  %v190 = vunpack.c.l.b16 %v46
  %v191 = vunpack.c.l.b16 %v47
  %v192 = vunpack.c.l.b16 %v48
  %v193 = vunpack.c.l.b16 %v49
  %v194 = vunpack.c.l.b16 %v50
  %v195 = vunpack.c.l.b16 %v51
  %v196 = vunpack.c.l.b16 %v52
  %v197 = vunpack.c.l.b16 %v53
  %v198 = vunpack.c.l.b16 %v54
  %v199 = vunpack.c.l.b16 %v55
  %v200 = vunpack.c.l.b16 %v56
  %v201 = vunpack.c.l.b16 %v57
  %v202 = vunpack.c.l.b16 %v58
  %v203 = vunpack.c.l.b16 %v59
  %v204 = vunpack.c.l.b16 %v60
  %v205 = vunpack.c.l.b16 %v61
  %v206 = vunpack.c.l.b16 %v62
  %v207 = vunpack.c.l.b16 %v63
  %v208 = vunpack.c.l.b16 %v64
  %v209 = vunpack.c.l.b16 %v65
  %v210 = vunpack.c.l.b16 %v66
  %v211 = vunpack.c.l.b16 %v67
  %v212 = vunpack.c.l.b16 %v68
  %v213 = vunpack.c.l.b16 %v69
  %v214 = vunpack.c.l.b16 %v70
  %v215 = vunpack.c.l.b16 %v71
  %v216 = vunpack.c.l.b16 %v72
  %v217 = vunpack.c.l.b16 %v73
  %v218 = vunpack.c.l.b16 %v74
  %v219 = vunpack.c.l.b16 %v75
  %v220 = vunpack.c.l.b16 %v76
  %v221 = vunpack.c.l.b16 %v77
  %v222 = vunpack.c.l.b16 %v78
  %v223 = vunpack.c.l.b16 %v79
  %v224 = vunpack.c.l.b16 %v80
  %v225 = vpack.c.b16 %v162, %v161
  %v226 = vpack.c.b16 %v164, %v163
  %v227 = vpack.c.b16 %v166, %v165
  %v228 = vpack.c.b16 %v168, %v167
  %v229 = vpack.c.b16 %v170, %v169
  %v230 = vpack.c.b16 %v172, %v171
  %v231 = vpack.c.b16 %v174, %v173
  %v232 = vpack.c.b16 %v176, %v175
  %v233 = vpack.c.b16 %v178, %v177
  %v234 = vpack.c.b16 %v180, %v179
  %v235 = vpack.c.b16 %v182, %v181
  %v236 = vpack.c.b16 %v184, %v183
  %v237 = vpack.c.b16 %v186, %v185
  %v238 = vpack.c.b16 %v188, %v187
  %v239 = vpack.c.b16 %v190, %v189
  %v240 = vpack.c.b16 %v192, %v191
  %v241 = vpack.c.b16 %v194, %v193
  %v242 = vpack.c.b16 %v196, %v195
  %v243 = vpack.c.b16 %v198, %v197
  %v244 = vpack.c.b16 %v200, %v199
  %v245 = vpack.c.b16 %v202, %v201
  %v246 = vpack.c.b16 %v204, %v203
  %v247 = vpack.c.b16 %v206, %v205
  %v248 = vpack.c.b16 %v208, %v207
  %v249 = vpack.c.b16 %v210, %v209
  %v250 = vpack.c.b16 %v212, %v211
  %v251 = vpack.c.b16 %v214, %v213
  %v252 = vpack.c.b16 %v216, %v215
  %v253 = vpack.c.b16 %v218, %v217
  %v254 = vpack.c.b16 %v220, %v219
  %v255 = vpack.c.b16 %v222, %v221
  %v256 = vpack.c.b16 %v224, %v223
  %v305 = vunpack.c.l.b16 %v81
  %v306 = vunpack.c.l.b16 %v82
  %v307 = vunpack.c.l.b16 %v83
  %v308 = vunpack.c.l.b16 %v84
  %v309 = vunpack.c.l.b16 %v85
  %v310 = vunpack.c.l.b16 %v86
  %v311 = vunpack.c.l.b16 %v87
  %v312 = vunpack.c.l.b16 %v88
  %v313 = vunpack.c.l.b16 %v89
  %v314 = vunpack.c.l.b16 %v90
  %v315 = vunpack.c.l.b16 %v91
  %v316 = vunpack.c.l.b16 %v92
  %v317 = vunpack.c.l.b16 %v93
  %v318 = vunpack.c.l.b16 %v94
  %v319 = vunpack.c.l.b16 %v95
  %v320 = vunpack.c.l.b16 %v96
  %v321 = vpack.c.b16 %v306, %v305
  %v322 = vpack.c.b16 %v308, %v307
  %v323 = vpack.c.b16 %v310, %v309
  %v324 = vpack.c.b16 %v312, %v311
  %v325 = vpack.c.b16 %v314, %v313
  %v326 = vpack.c.b16 %v316, %v315
  %v327 = vpack.c.b16 %v318, %v317
  %v328 = vpack.c.b16 %v320, %v319
  %337 = vmatpush.bf16.msra.mxu0 %v328
  %338 = vmatpush.bf16.msra.mxu0 %v327
  %339 = vmatpush.bf16.msra.mxu0 %v326
  %340 = vmatpush.bf16.msra.mxu0 %v325
  %341 = vmatpush.bf16.msra.mxu0 %v324
  %342 = vmatpush.bf16.msra.mxu0 %v323
  %343 = vmatpush.bf16.msra.mxu0 %v322
  %344 = vmatpush.bf16.msra.mxu0 %v321
  %345 = vmatmul.bf16.gmra.mxu0 %v225
  %v346 = vpop.f32.mrf.mxu0
  %v347 = vadd.f32 0.0, %v346
  %v348 = vpop.f32.mrf.mxu0
  %v349 = vadd.f32 0.0, %v348
  %350 = vmatmul.bf16.gmra.mxu0 %v226
  %v351 = vpop.f32.mrf.mxu0
  %v352 = vadd.f32 0.0, %v351
  %v353 = vpop.f32.mrf.mxu0
  %v354 = vadd.f32 0.0, %v353
  %355 = vmatmul.bf16.gmra.mxu0 %v227
  %v356 = vpop.f32.mrf.mxu0
  %v357 = vadd.f32 0.0, %v356
  %v358 = vpop.f32.mrf.mxu0
  %v359 = vadd.f32 0.0, %v358
  %360 = vmatmul.bf16.gmra.mxu0 %v228
  %v361 = vpop.f32.mrf.mxu0
  %v362 = vadd.f32 0.0, %v361
  %v363 = vpop.f32.mrf.mxu0
  %v364 = vadd.f32 0.0, %v363
  %365 = vmatmul.bf16.gmra.mxu0 %v229
  %v366 = vpop.f32.mrf.mxu0
  %v367 = vadd.f32 0.0, %v366
  %v368 = vpop.f32.mrf.mxu0
  %v369 = vadd.f32 0.0, %v368
  %370 = vmatmul.bf16.gmra.mxu0 %v230
  %v371 = vpop.f32.mrf.mxu0
  %v372 = vadd.f32 0.0, %v371
  %v373 = vpop.f32.mrf.mxu0
  %v374 = vadd.f32 0.0, %v373
  %375 = vmatmul.bf16.gmra.mxu0 %v231
  %v376 = vpop.f32.mrf.mxu0
  %v377 = vadd.f32 0.0, %v376
  %v378 = vpop.f32.mrf.mxu0
  %v379 = vadd.f32 0.0, %v378
  %380 = vmatmul.bf16.gmra.mxu0 %v232
  %v381 = vpop.f32.mrf.mxu0
  %v382 = vadd.f32 0.0, %v381
  %v383 = vpop.f32.mrf.mxu0
  %v384 = vadd.f32 0.0, %v383
  %385 = vmatmul.bf16.gmra.mxu0 %v233
  %v386 = vpop.f32.mrf.mxu0
  %v387 = vadd.f32 0.0, %v386
  %v388 = vpop.f32.mrf.mxu0
  %v389 = vadd.f32 0.0, %v388
  %390 = vmatmul.bf16.gmra.mxu0 %v234
  %v391 = vpop.f32.mrf.mxu0
  %v392 = vadd.f32 0.0, %v391
  %v393 = vpop.f32.mrf.mxu0
  %v394 = vadd.f32 0.0, %v393
  %395 = vmatmul.bf16.gmra.mxu0 %v235
  %v396 = vpop.f32.mrf.mxu0
  %v397 = vadd.f32 0.0, %v396
  %v398 = vpop.f32.mrf.mxu0
  %v399 = vadd.f32 0.0, %v398
  %400 = vmatmul.bf16.gmra.mxu0 %v236
  %v401 = vpop.f32.mrf.mxu0
  %v402 = vadd.f32 0.0, %v401
  %v403 = vpop.f32.mrf.mxu0
  %v404 = vadd.f32 0.0, %v403
  %405 = vmatmul.bf16.gmra.mxu0 %v237
  %v406 = vpop.f32.mrf.mxu0
  %v407 = vadd.f32 0.0, %v406
  %v408 = vpop.f32.mrf.mxu0
  %v409 = vadd.f32 0.0, %v408
  %410 = vmatmul.bf16.gmra.mxu0 %v238
  %v411 = vpop.f32.mrf.mxu0
  %v412 = vadd.f32 0.0, %v411
  %v413 = vpop.f32.mrf.mxu0
  %v414 = vadd.f32 0.0, %v413
  %415 = vmatmul.bf16.gmra.mxu0 %v239
  %v416 = vpop.f32.mrf.mxu0
  %v417 = vadd.f32 0.0, %v416
  %v418 = vpop.f32.mrf.mxu0
  %v419 = vadd.f32 0.0, %v418
  %420 = vmatmul.bf16.gmra.mxu0 %v240
  %v421 = vpop.f32.mrf.mxu0
  %v422 = vadd.f32 0.0, %v421
  %v423 = vpop.f32.mrf.mxu0
  %v424 = vadd.f32 0.0, %v423
  %425 = vmatmul.bf16.gmra.mxu0 %v241
  %v426 = vpop.f32.mrf.mxu0
  %v427 = vadd.f32 0.0, %v426
  %v428 = vpop.f32.mrf.mxu0
  %v429 = vadd.f32 0.0, %v428
  %430 = vmatmul.bf16.gmra.mxu0 %v242
  %v431 = vpop.f32.mrf.mxu0
  %v432 = vadd.f32 0.0, %v431
  %v433 = vpop.f32.mrf.mxu0
  %v434 = vadd.f32 0.0, %v433
  %435 = vmatmul.bf16.gmra.mxu0 %v243
  %v436 = vpop.f32.mrf.mxu0
  %v437 = vadd.f32 0.0, %v436
  %v438 = vpop.f32.mrf.mxu0
  %v439 = vadd.f32 0.0, %v438
  %440 = vmatmul.bf16.gmra.mxu0 %v244
  %v441 = vpop.f32.mrf.mxu0
  %v442 = vadd.f32 0.0, %v441
  %v443 = vpop.f32.mrf.mxu0
  %v444 = vadd.f32 0.0, %v443
  %445 = vmatmul.bf16.gmra.mxu0 %v245
  %v446 = vpop.f32.mrf.mxu0
  %v447 = vadd.f32 0.0, %v446
  %v448 = vpop.f32.mrf.mxu0
  %v449 = vadd.f32 0.0, %v448
  %450 = vmatmul.bf16.gmra.mxu0 %v246
  %v451 = vpop.f32.mrf.mxu0
  %v452 = vadd.f32 0.0, %v451
  %v453 = vpop.f32.mrf.mxu0
  %v454 = vadd.f32 0.0, %v453
  %455 = vmatmul.bf16.gmra.mxu0 %v247
  %v456 = vpop.f32.mrf.mxu0
  %v457 = vadd.f32 0.0, %v456
  %v458 = vpop.f32.mrf.mxu0
  %v459 = vadd.f32 0.0, %v458
  %460 = vmatmul.bf16.gmra.mxu0 %v248
  %v461 = vpop.f32.mrf.mxu0
  %v462 = vadd.f32 0.0, %v461
  %v463 = vpop.f32.mrf.mxu0
  %v464 = vadd.f32 0.0, %v463
  %465 = vmatmul.bf16.gmra.mxu0 %v249
  %v466 = vpop.f32.mrf.mxu0
  %v467 = vadd.f32 0.0, %v466
  %v468 = vpop.f32.mrf.mxu0
  %v469 = vadd.f32 0.0, %v468
  %470 = vmatmul.bf16.gmra.mxu0 %v250
  %v471 = vpop.f32.mrf.mxu0
  %v472 = vadd.f32 0.0, %v471
  %v473 = vpop.f32.mrf.mxu0
  %v474 = vadd.f32 0.0, %v473
  %475 = vmatmul.bf16.gmra.mxu0 %v251
  %v476 = vpop.f32.mrf.mxu0
  %v477 = vadd.f32 0.0, %v476
  %v478 = vpop.f32.mrf.mxu0
  %v479 = vadd.f32 0.0, %v478
  %480 = vmatmul.bf16.gmra.mxu0 %v252
  %v481 = vpop.f32.mrf.mxu0
  %v482 = vadd.f32 0.0, %v481
  %v483 = vpop.f32.mrf.mxu0
  %v484 = vadd.f32 0.0, %v483
  %485 = vmatmul.bf16.gmra.mxu0 %v253
  %v486 = vpop.f32.mrf.mxu0
  %v487 = vadd.f32 0.0, %v486
  %v488 = vpop.f32.mrf.mxu0
  %v489 = vadd.f32 0.0, %v488
  %490 = vmatmul.bf16.gmra.mxu0 %v254
  %v491 = vpop.f32.mrf.mxu0
  %v492 = vadd.f32 0.0, %v491
  %v493 = vpop.f32.mrf.mxu0
  %v494 = vadd.f32 0.0, %v493
  %495 = vmatmul.bf16.gmra.mxu0 %v255
  %v496 = vpop.f32.mrf.mxu0
  %v497 = vadd.f32 0.0, %v496
  %v498 = vpop.f32.mrf.mxu0
  %v499 = vadd.f32 0.0, %v498
  %500 = vmatmul.bf16.gmra.mxu0 %v256
  %v501 = vpop.f32.mrf.mxu0
  %v502 = vadd.f32 0.0, %v501
  %v503 = vpop.f32.mrf.mxu0
  %v504 = vadd.f32 0.0, %v503
  %505 = vdwg.mxu0
  %v506 = vld [vmem:[%s2] sm:$0x1]
  %v508 = vperm.slane %v506, 0
  %v510 = vmul.f32 %v347, %v508
  %v511 = vmul.f32 %v349, %v508
  %v512 = vmul.f32 %v352, %v508
  %v513 = vmul.f32 %v354, %v508
  %v514 = vmul.f32 %v357, %v508
  %v515 = vmul.f32 %v359, %v508
  %v516 = vmul.f32 %v362, %v508
  %v517 = vmul.f32 %v364, %v508
  %v518 = vmul.f32 %v367, %v508
  %v519 = vmul.f32 %v369, %v508
  %v520 = vmul.f32 %v372, %v508
  %v521 = vmul.f32 %v374, %v508
  %v522 = vmul.f32 %v377, %v508
  %v523 = vmul.f32 %v379, %v508
  %v524 = vmul.f32 %v382, %v508
  %v525 = vmul.f32 %v384, %v508
  %v526 = vmul.f32 %v387, %v508
  %v527 = vmul.f32 %v389, %v508
  %v528 = vmul.f32 %v392, %v508
  %v529 = vmul.f32 %v394, %v508
  %v530 = vmul.f32 %v397, %v508
  %v531 = vmul.f32 %v399, %v508
  %v532 = vmul.f32 %v402, %v508
  %v533 = vmul.f32 %v404, %v508
  %v534 = vmul.f32 %v407, %v508
  %v535 = vmul.f32 %v409, %v508
  %v536 = vmul.f32 %v412, %v508
  %v537 = vmul.f32 %v414, %v508
  %v538 = vmul.f32 %v417, %v508
  %v539 = vmul.f32 %v419, %v508
  %v540 = vmul.f32 %v422, %v508
  %v541 = vmul.f32 %v424, %v508
  %v542 = vmul.f32 %v427, %v508
  %v543 = vmul.f32 %v429, %v508
  %v544 = vmul.f32 %v432, %v508
  %v545 = vmul.f32 %v434, %v508
  %v546 = vmul.f32 %v437, %v508
  %v547 = vmul.f32 %v439, %v508
  %v548 = vmul.f32 %v442, %v508
  %v549 = vmul.f32 %v444, %v508
  %v550 = vmul.f32 %v447, %v508
  %v551 = vmul.f32 %v449, %v508
  %v552 = vmul.f32 %v452, %v508
  %v553 = vmul.f32 %v454, %v508
  %v554 = vmul.f32 %v457, %v508
  %v555 = vmul.f32 %v459, %v508
  %v556 = vmul.f32 %v462, %v508
  %v557 = vmul.f32 %v464, %v508
  %v558 = vmul.f32 %v467, %v508
  %v559 = vmul.f32 %v469, %v508
  %v560 = vmul.f32 %v472, %v508
  %v561 = vmul.f32 %v474, %v508
  %v562 = vmul.f32 %v477, %v508
  %v563 = vmul.f32 %v479, %v508
  %v564 = vmul.f32 %v482, %v508
  %v565 = vmul.f32 %v484, %v508
  %v566 = vmul.f32 %v487, %v508
  %v567 = vmul.f32 %v489, %v508
  %v568 = vmul.f32 %v492, %v508
  %v569 = vmul.f32 %v494, %v508
  %v570 = vmul.f32 %v497, %v508
  %v571 = vmul.f32 %v499, %v508
  %v572 = vmul.f32 %v502, %v508
  %v573 = vmul.f32 %v504, %v508
  %v574 = vld [vmem:[%s3] sm:$0x1]
  %v576 = vperm.slane %v574, 0
  %v578 = vadd.f32 %v510, %v576
  %v579 = vadd.f32 %v511, %v576
  %v580 = vadd.f32 %v512, %v576
  %v581 = vadd.f32 %v513, %v576
  %v582 = vadd.f32 %v514, %v576
  %v583 = vadd.f32 %v515, %v576
  %v584 = vadd.f32 %v516, %v576
  %v585 = vadd.f32 %v517, %v576
  %v586 = vadd.f32 %v518, %v576
  %v587 = vadd.f32 %v519, %v576
  %v588 = vadd.f32 %v520, %v576
  %v589 = vadd.f32 %v521, %v576
  %v590 = vadd.f32 %v522, %v576
  %v591 = vadd.f32 %v523, %v576
  %v592 = vadd.f32 %v524, %v576
  %v593 = vadd.f32 %v525, %v576
  %v594 = vadd.f32 %v526, %v576
  %v595 = vadd.f32 %v527, %v576
  %v596 = vadd.f32 %v528, %v576
  %v597 = vadd.f32 %v529, %v576
  %v598 = vadd.f32 %v530, %v576
  %v599 = vadd.f32 %v531, %v576
  %v600 = vadd.f32 %v532, %v576
  %v601 = vadd.f32 %v533, %v576
  %v602 = vadd.f32 %v534, %v576
  %v603 = vadd.f32 %v535, %v576
  %v604 = vadd.f32 %v536, %v576
  %v605 = vadd.f32 %v537, %v576
  %v606 = vadd.f32 %v538, %v576
  %v607 = vadd.f32 %v539, %v576
  %v608 = vadd.f32 %v540, %v576
  %v609 = vadd.f32 %v541, %v576
  %v610 = vadd.f32 %v542, %v576
  %v611 = vadd.f32 %v543, %v576
  %v612 = vadd.f32 %v544, %v576
  %v613 = vadd.f32 %v545, %v576
  %v614 = vadd.f32 %v546, %v576
  %v615 = vadd.f32 %v547, %v576
  %v616 = vadd.f32 %v548, %v576
  %v617 = vadd.f32 %v549, %v576
  %v618 = vadd.f32 %v550, %v576
  %v619 = vadd.f32 %v551, %v576
  %v620 = vadd.f32 %v552, %v576
  %v621 = vadd.f32 %v553, %v576
  %v622 = vadd.f32 %v554, %v576
  %v623 = vadd.f32 %v555, %v576
  %v624 = vadd.f32 %v556, %v576
  %v625 = vadd.f32 %v557, %v576
  %v626 = vadd.f32 %v558, %v576
  %v627 = vadd.f32 %v559, %v576
  %v628 = vadd.f32 %v560, %v576
  %v629 = vadd.f32 %v561, %v576
  %v630 = vadd.f32 %v562, %v576
  %v631 = vadd.f32 %v563, %v576
  %v632 = vadd.f32 %v564, %v576
  %v633 = vadd.f32 %v565, %v576
  %v634 = vadd.f32 %v566, %v576
  %v635 = vadd.f32 %v567, %v576
  %v636 = vadd.f32 %v568, %v576
  %v637 = vadd.f32 %v569, %v576
  %v638 = vadd.f32 %v570, %v576
  %v639 = vadd.f32 %v571, %v576
  %v640 = vadd.f32 %v572, %v576
  %v641 = vadd.f32 %v573, %v576
  %v642 = vmax.f32 %v578, 0.0
  %v643 = vmax.f32 %v579, 0.0
  %v644 = vmax.f32 %v580, 0.0
  %v645 = vmax.f32 %v581, 0.0
  %v646 = vmax.f32 %v582, 0.0
  %v647 = vmax.f32 %v583, 0.0
  %v648 = vmax.f32 %v584, 0.0
  %v649 = vmax.f32 %v585, 0.0
  %v650 = vmax.f32 %v586, 0.0
  %v651 = vmax.f32 %v587, 0.0
  %v652 = vmax.f32 %v588, 0.0
  %v653 = vmax.f32 %v589, 0.0
  %v654 = vmax.f32 %v590, 0.0
  %v655 = vmax.f32 %v591, 0.0
  %v656 = vmax.f32 %v592, 0.0
  %v657 = vmax.f32 %v593, 0.0
  %v658 = vmax.f32 %v594, 0.0
  %v659 = vmax.f32 %v595, 0.0
  %v660 = vmax.f32 %v596, 0.0
  %v661 = vmax.f32 %v597, 0.0
  %v662 = vmax.f32 %v598, 0.0
  %v663 = vmax.f32 %v599, 0.0
  %v664 = vmax.f32 %v600, 0.0
  %v665 = vmax.f32 %v601, 0.0
  %v666 = vmax.f32 %v602, 0.0
  %v667 = vmax.f32 %v603, 0.0
  %v668 = vmax.f32 %v604, 0.0
  %v669 = vmax.f32 %v605, 0.0
  %v670 = vmax.f32 %v606, 0.0
  %v671 = vmax.f32 %v607, 0.0
  %v672 = vmax.f32 %v608, 0.0
  %v673 = vmax.f32 %v609, 0.0
  %v674 = vmax.f32 %v610, 0.0
  %v675 = vmax.f32 %v611, 0.0
  %v676 = vmax.f32 %v612, 0.0
  %v677 = vmax.f32 %v613, 0.0
  %v678 = vmax.f32 %v614, 0.0
  %v679 = vmax.f32 %v615, 0.0
  %v680 = vmax.f32 %v616, 0.0
  %v681 = vmax.f32 %v617, 0.0
  %v682 = vmax.f32 %v618, 0.0
  %v683 = vmax.f32 %v619, 0.0
  %v684 = vmax.f32 %v620, 0.0
  %v685 = vmax.f32 %v621, 0.0
  %v686 = vmax.f32 %v622, 0.0
  %v687 = vmax.f32 %v623, 0.0
  %v688 = vmax.f32 %v624, 0.0
  %v689 = vmax.f32 %v625, 0.0
  %v690 = vmax.f32 %v626, 0.0
  %v691 = vmax.f32 %v627, 0.0
  %v692 = vmax.f32 %v628, 0.0
  %v693 = vmax.f32 %v629, 0.0
  %v694 = vmax.f32 %v630, 0.0
  %v695 = vmax.f32 %v631, 0.0
  %v696 = vmax.f32 %v632, 0.0
  %v697 = vmax.f32 %v633, 0.0
  %v698 = vmax.f32 %v634, 0.0
  %v699 = vmax.f32 %v635, 0.0
  %v700 = vmax.f32 %v636, 0.0
  %v701 = vmax.f32 %v637, 0.0
  %v702 = vmax.f32 %v638, 0.0
  %v703 = vmax.f32 %v639, 0.0
  %v704 = vmax.f32 %v640, 0.0
  %v705 = vmax.f32 %v641, 0.0
  %v706 = vpack.c.bf16 %v642, %v642
  %v707 = vpack.c.bf16 %v643, %v643
  %v708 = vpack.c.bf16 %v644, %v644
  %v709 = vpack.c.bf16 %v645, %v645
  %v710 = vpack.c.bf16 %v646, %v646
  %v711 = vpack.c.bf16 %v647, %v647
  %v712 = vpack.c.bf16 %v648, %v648
  %v713 = vpack.c.bf16 %v649, %v649
  %v714 = vpack.c.bf16 %v650, %v650
  %v715 = vpack.c.bf16 %v651, %v651
  %v716 = vpack.c.bf16 %v652, %v652
  %v717 = vpack.c.bf16 %v653, %v653
  %v718 = vpack.c.bf16 %v654, %v654
  %v719 = vpack.c.bf16 %v655, %v655
  %v720 = vpack.c.bf16 %v656, %v656
  %v721 = vpack.c.bf16 %v657, %v657
  %v722 = vpack.c.bf16 %v658, %v658
  %v723 = vpack.c.bf16 %v659, %v659
  %v724 = vpack.c.bf16 %v660, %v660
  %v725 = vpack.c.bf16 %v661, %v661
  %v726 = vpack.c.bf16 %v662, %v662
  %v727 = vpack.c.bf16 %v663, %v663
  %v728 = vpack.c.bf16 %v664, %v664
  %v729 = vpack.c.bf16 %v665, %v665
  %v730 = vpack.c.bf16 %v666, %v666
  %v731 = vpack.c.bf16 %v667, %v667
  %v732 = vpack.c.bf16 %v668, %v668
  %v733 = vpack.c.bf16 %v669, %v669
  %v734 = vpack.c.bf16 %v670, %v670
  %v735 = vpack.c.bf16 %v671, %v671
  %v736 = vpack.c.bf16 %v672, %v672
  %v737 = vpack.c.bf16 %v673, %v673
  %v738 = vpack.c.bf16 %v674, %v674
  %v739 = vpack.c.bf16 %v675, %v675
  %v740 = vpack.c.bf16 %v676, %v676
  %v741 = vpack.c.bf16 %v677, %v677
  %v742 = vpack.c.bf16 %v678, %v678
  %v743 = vpack.c.bf16 %v679, %v679
  %v744 = vpack.c.bf16 %v680, %v680
  %v745 = vpack.c.bf16 %v681, %v681
  %v746 = vpack.c.bf16 %v682, %v682
  %v747 = vpack.c.bf16 %v683, %v683
  %v748 = vpack.c.bf16 %v684, %v684
  %v749 = vpack.c.bf16 %v685, %v685
  %v750 = vpack.c.bf16 %v686, %v686
  %v751 = vpack.c.bf16 %v687, %v687
  %v752 = vpack.c.bf16 %v688, %v688
  %v753 = vpack.c.bf16 %v689, %v689
  %v754 = vpack.c.bf16 %v690, %v690
  %v755 = vpack.c.bf16 %v691, %v691
  %v756 = vpack.c.bf16 %v692, %v692
  %v757 = vpack.c.bf16 %v693, %v693
  %v758 = vpack.c.bf16 %v694, %v694
  %v759 = vpack.c.bf16 %v695, %v695
  %v760 = vpack.c.bf16 %v696, %v696
  %v761 = vpack.c.bf16 %v697, %v697
  %v762 = vpack.c.bf16 %v698, %v698
  %v763 = vpack.c.bf16 %v699, %v699
  %v764 = vpack.c.bf16 %v700, %v700
  %v765 = vpack.c.bf16 %v701, %v701
  %v766 = vpack.c.bf16 %v702, %v702
  %v767 = vpack.c.bf16 %v703, %v703
  %v768 = vpack.c.bf16 %v704, %v704
  %v769 = vpack.c.bf16 %v705, %v705
  %770 = vst [vmem:[%s4] sm:$0xf] %v706
  %771 = vst [vmem:[%s4 + $0x4] sm:$0xf] %v707
  %772 = vst [vmem:[%s4 + $0x8] sm:$0xf] %v708
  %773 = vst [vmem:[%s4 + $0xc] sm:$0xf] %v709
  %774 = vst [vmem:[%s4 + $0x10] sm:$0xf] %v710
  %775 = vst [vmem:[%s4 + $0x14] sm:$0xf] %v711
  %776 = vst [vmem:[%s4 + $0x18] sm:$0xf] %v712
  %777 = vst [vmem:[%s4 + $0x1c] sm:$0xf] %v713
  %778 = vst [vmem:[%s4 + $0x20] sm:$0xf] %v714
  %779 = vst [vmem:[%s4 + $0x24] sm:$0xf] %v715
  %780 = vst [vmem:[%s4 + $0x28] sm:$0xf] %v716
  %781 = vst [vmem:[%s4 + $0x2c] sm:$0xf] %v717
  %782 = vst [vmem:[%s4 + $0x30] sm:$0xf] %v718
  %783 = vst [vmem:[%s4 + $0x34] sm:$0xf] %v719
  %784 = vst [vmem:[%s4 + $0x38] sm:$0xf] %v720
  %785 = vst [vmem:[%s4 + $0x3c] sm:$0xf] %v721
  %786 = vst [vmem:[%s4 + $0x40] sm:$0xf] %v722
  %787 = vst [vmem:[%s4 + $0x44] sm:$0xf] %v723
  %788 = vst [vmem:[%s4 + $0x48] sm:$0xf] %v724
  %789 = vst [vmem:[%s4 + $0x4c] sm:$0xf] %v725
  %790 = vst [vmem:[%s4 + $0x50] sm:$0xf] %v726
  %791 = vst [vmem:[%s4 + $0x54] sm:$0xf] %v727
  %792 = vst [vmem:[%s4 + $0x58] sm:$0xf] %v728
  %793 = vst [vmem:[%s4 + $0x5c] sm:$0xf] %v729
  %794 = vst [vmem:[%s4 + $0x60] sm:$0xf] %v730
  %795 = vst [vmem:[%s4 + $0x64] sm:$0xf] %v731
  %796 = vst [vmem:[%s4 + $0x68] sm:$0xf] %v732
  %797 = vst [vmem:[%s4 + $0x6c] sm:$0xf] %v733
  %798 = vst [vmem:[%s4 + $0x70] sm:$0xf] %v734
  %799 = vst [vmem:[%s4 + $0x74] sm:$0xf] %v735
  %800 = vst [vmem:[%s4 + $0x78] sm:$0xf] %v736
  %801 = vst [vmem:[%s4 + $0x7c] sm:$0xf] %v737
  %802 = vst [vmem:[%s4 + $0x80] sm:$0xf] %v738
  %803 = vst [vmem:[%s4 + $0x84] sm:$0xf] %v739
  %804 = vst [vmem:[%s4 + $0x88] sm:$0xf] %v740
  %805 = vst [vmem:[%s4 + $0x8c] sm:$0xf] %v741
  %806 = vst [vmem:[%s4 + $0x90] sm:$0xf] %v742
  %807 = vst [vmem:[%s4 + $0x94] sm:$0xf] %v743
  %808 = vst [vmem:[%s4 + $0x98] sm:$0xf] %v744
  %809 = vst [vmem:[%s4 + $0x9c] sm:$0xf] %v745
  %810 = vst [vmem:[%s4 + $0xa0] sm:$0xf] %v746
  %811 = vst [vmem:[%s4 + $0xa4] sm:$0xf] %v747
  %812 = vst [vmem:[%s4 + $0xa8] sm:$0xf] %v748
  %813 = vst [vmem:[%s4 + $0xac] sm:$0xf] %v749
  %814 = vst [vmem:[%s4 + $0xb0] sm:$0xf] %v750
  %815 = vst [vmem:[%s4 + $0xb4] sm:$0xf] %v751
  %816 = vst [vmem:[%s4 + $0xb8] sm:$0xf] %v752
  %817 = vst [vmem:[%s4 + $0xbc] sm:$0xf] %v753
  %818 = vst [vmem:[%s4 + $0xc0] sm:$0xf] %v754
  %819 = vst [vmem:[%s4 + $0xc4] sm:$0xf] %v755
  %820 = vst [vmem:[%s4 + $0xc8] sm:$0xf] %v756
  %821 = vst [vmem:[%s4 + $0xcc] sm:$0xf] %v757
  %822 = vst [vmem:[%s4 + $0xd0] sm:$0xf] %v758
  %823 = vst [vmem:[%s4 + $0xd4] sm:$0xf] %v759
  %824 = vst [vmem:[%s4 + $0xd8] sm:$0xf] %v760
  %825 = vst [vmem:[%s4 + $0xdc] sm:$0xf] %v761
  %826 = vst [vmem:[%s4 + $0xe0] sm:$0xf] %v762
  %827 = vst [vmem:[%s4 + $0xe4] sm:$0xf] %v763
  %828 = vst [vmem:[%s4 + $0xe8] sm:$0xf] %v764
  %829 = vst [vmem:[%s4 + $0xec] sm:$0xf] %v765
  %830 = vst [vmem:[%s4 + $0xf0] sm:$0xf] %v766
  %831 = vst [vmem:[%s4 + $0xf4] sm:$0xf] %v767
  %832 = vst [vmem:[%s4 + $0xf8] sm:$0xf] %v768
  %833 = vst [vmem:[%s4 + $0xfc] sm:$0xf] %v769
  // Predicated region
  $region18: #{bottleneck_forward.4} parent=0 // pred_check
    _
  $region19: #{bottleneck_forward.4} parent=0 // pred_check_branch
    %835 = sbr.rel (0) target = $region21
  $region20: #{bottleneck_forward.4} parent=0 // pred_region
    _
  $region21: #{bottleneck_forward.4} parent=0 // pred_fallthru
    _
  // Predicated region
  $region22: #{bottleneck_forward.4} parent=0 // pred_check
    _
  $region23: #{bottleneck_forward.4} parent=0 // pred_check_branch
    %837 = sbr.rel (0) target = $region25
  $region24: #{bottleneck_forward.4} parent=0 // pred_region
    _
  $region25: #{bottleneck_forward.4} parent=0 // pred_fallthru
    _

// kernel: bottleneck_forward.5
$region0: #{bottleneck_forward.5}
  #allocation0 [shape = 'u32[]', space=smem, size = 0x4, offset = 0x4, fixed_abs, tag = 'smem constant byte address 0x4 - core index']
  #allocation1 [shape = 'u32[72,128]{1,0:T(1,128)}', space=vmem, size = 0x9000, scoped, tag = 'internal scratch']
  #allocation2 [shape = 'bf16[8,8,384]{2,1,0:T(8,128)(2,1)}', space=vmem, size = 0xc000, scoped, tag = 'scratch operand']
  #allocation3 [shape = 'bf16[8,8,384]{2,1,0:T(8,128)(2,1)}', space=vmem, size = 0xc000, scoped, tag = 'scratch operand']
  #allocation4 [shape = 'f32[64,128]{1,0:T(8,128)}', space=vmem, size = 0x8000, scoped, tag = 'scratch operand']
  %s0 = inlined_call_operand.vmem [shape: bf16[2,8,2,8,128], index: 0, kind: input, shape index: {}]
  %s1 = inlined_call_operand.vmem [shape: bf16[2,8,2,8,128], index: 1, kind: input, shape index: {}]
  %s2 = inlined_call_operand.vmem [shape: bf16[3,384,128], index: 2, kind: input, shape index: {}]
  %s3 = inlined_call_operand.vmem [shape: f32[1,128], index: 3, kind: input, shape index: {}]
  %s4 = inlined_call_operand.vmem [shape: f32[1,128], index: 4, kind: input, shape index: {}]
  %s5 = inlined_call_operand.vmem [shape: bf16[2,64,128], index: 5, kind: output, shape index: {}]
  %s6 = sld [smem:[#allocation0]]
  $region53: #{bottleneck_forward.5} parent=0
    _
  %s8 = ssub.s32 1, %s6
  %s9 = scalar_select 0, %s8, %s6
  loop: start=0, step=1, limit=4
  $region2: #{bottleneck_forward.5} parent=0 // loop_pre_header
    _
  $region3: #{bottleneck_forward.5} parent=0 // loop_header
    %s11 = sphi 0, %s15
    %p12 = scmp.ge.s32.totalorder %s11, 4
    %s21 = sphi 0, %s23
    %s24 = sphi 0, %s21
    %s25 = sphi 0, %s24
    %s41 = sphi 0, %s25
    %s47 = sphi 0, %s49
    %s50 = sphi 0, %s47
    %s51 = sphi 0, %s50
    %s67 = sphi 0, %s51
    %s71 = sphi 0, %s71
    %s73 = sphi 0, %s71
    %s74 = sphi 0, %s73
    %s88 = sphi 0, %s74
    %s92 = sphi 0, %s92
    %s94 = sphi 0, %s92
    %s95 = sphi 0, %s94
    %s109 = sphi 0, %s95
    %s113 = sphi 0, %s113
    %s115 = sphi 0, %s113
    %s116 = sphi 0, %s115
    %s130 = sphi 0, %s116
    %s136 = sphi 0, %s138
    %s139 = sphi 0, %s136
    %s140 = sphi 0, %s139
    %s156 = sphi 0, %s140
  $region4: #{bottleneck_forward.5} parent=0 // loop_header_branch
    %14 = sbr.rel (%p12) target = $region8
  $region5: #{bottleneck_forward.5} parent=0 // loop_body
    %s16 = ssub.s32 %s11, 1
    %s17 = ssub.s32 %s11, 2
    %s18 = sadd.s32 %s11, 1
    %s19 = ssub.s32 %s11, %s18
    %p20 = scmp.eq.s32.totalorder %s19, 0
    %s22 = sadd.s32 %s21, 1
    %s23 = scalar_select %p20, %s21, %s22
    %p26 = pneg %p20
    %p27 = scmp.eq.s32.totalorder %s11, 1
    %p28 = por %p26, %p27
    %p29 = scmp.ne.s32.totalorder %s21, %s24
    %p30 = scmp.eq.s32.totalorder %s11, 0
    %p31 = por %p29, %p30
    %p32 = scmp.ne.s32.totalorder %s21, %s24
    %p33 = scmp.eq.s32.totalorder %s16, 1
    %p34 = por %p32, %p33
    %p35 = scmp.ne.s32.totalorder %s24, %s25
    %p36 = scmp.eq.s32.totalorder %s16, 0
    %p37 = por %p35, %p36
    %p38 = scmp.ne.s32.totalorder %s24, %s25
    %p39 = scmp.eq.s32.totalorder %s17, 1
    %p40 = por %p38, %p39
    %p42 = scmp.ne.s32.totalorder %s25, %s41
    %p43 = scmp.eq.s32.totalorder %s17, 0
    %p44 = por %p42, %p43
    %s45 = ssub.s32 %s11, %s18
    %p46 = scmp.eq.s32.totalorder %s45, 0
    %s48 = sadd.s32 %s47, 1
    %s49 = scalar_select %p46, %s47, %s48
    %p52 = pneg %p46
    %p53 = scmp.eq.s32.totalorder %s11, 1
    %p54 = por %p52, %p53
    %p55 = scmp.ne.s32.totalorder %s47, %s50
    %p56 = scmp.eq.s32.totalorder %s11, 0
    %p57 = por %p55, %p56
    %p58 = scmp.ne.s32.totalorder %s47, %s50
    %p59 = scmp.eq.s32.totalorder %s16, 1
    %p60 = por %p58, %p59
    %p61 = scmp.ne.s32.totalorder %s50, %s51
    %p62 = scmp.eq.s32.totalorder %s16, 0
    %p63 = por %p61, %p62
    %p64 = scmp.ne.s32.totalorder %s50, %s51
    %p65 = scmp.eq.s32.totalorder %s17, 1
    %p66 = por %p64, %p65
    %p68 = scmp.ne.s32.totalorder %s51, %s67
    %p69 = scmp.eq.s32.totalorder %s17, 0
    %p70 = por %p68, %p69
    %s72 = sadd.s32 %s71, 1
    %p75 = scmp.eq.s32.totalorder %s11, 1
    %p76 = scmp.ne.s32.totalorder %s71, %s73
    %p77 = scmp.eq.s32.totalorder %s11, 0
    %p78 = por %p76, %p77
    %p79 = scmp.ne.s32.totalorder %s71, %s73
    %p80 = scmp.eq.s32.totalorder %s16, 1
    %p81 = por %p79, %p80
    %p82 = scmp.ne.s32.totalorder %s73, %s74
    %p83 = scmp.eq.s32.totalorder %s16, 0
    %p84 = por %p82, %p83
    %p85 = scmp.ne.s32.totalorder %s73, %s74
    %p86 = scmp.eq.s32.totalorder %s17, 1
    %p87 = por %p85, %p86
    %p89 = scmp.ne.s32.totalorder %s74, %s88
    %p90 = scmp.eq.s32.totalorder %s17, 0
    %p91 = por %p89, %p90
    %s93 = sadd.s32 %s92, 1
    %p96 = scmp.eq.s32.totalorder %s11, 1
    %p97 = scmp.ne.s32.totalorder %s92, %s94
    %p98 = scmp.eq.s32.totalorder %s11, 0
    %p99 = por %p97, %p98
    %p100 = scmp.ne.s32.totalorder %s92, %s94
    %p101 = scmp.eq.s32.totalorder %s16, 1
    %p102 = por %p100, %p101
    %p103 = scmp.ne.s32.totalorder %s94, %s95
    %p104 = scmp.eq.s32.totalorder %s16, 0
    %p105 = por %p103, %p104
    %p106 = scmp.ne.s32.totalorder %s94, %s95
    %p107 = scmp.eq.s32.totalorder %s17, 1
    %p108 = por %p106, %p107
    %p110 = scmp.ne.s32.totalorder %s95, %s109
    %p111 = scmp.eq.s32.totalorder %s17, 0
    %p112 = por %p110, %p111
    %s114 = sadd.s32 %s113, 1
    %p117 = scmp.eq.s32.totalorder %s11, 1
    %p118 = scmp.ne.s32.totalorder %s113, %s115
    %p119 = scmp.eq.s32.totalorder %s11, 0
    %p120 = por %p118, %p119
    %p121 = scmp.ne.s32.totalorder %s113, %s115
    %p122 = scmp.eq.s32.totalorder %s16, 1
    %p123 = por %p121, %p122
    %p124 = scmp.ne.s32.totalorder %s115, %s116
    %p125 = scmp.eq.s32.totalorder %s16, 0
    %p126 = por %p124, %p125
    %p127 = scmp.ne.s32.totalorder %s115, %s116
    %p128 = scmp.eq.s32.totalorder %s17, 1
    %p129 = por %p127, %p128
    %p131 = scmp.ne.s32.totalorder %s116, %s130
    %p132 = scmp.eq.s32.totalorder %s17, 0
    %p133 = por %p131, %p132
    %s134 = ssub.s32 %s11, %s18
    %p135 = scmp.eq.s32.totalorder %s134, 0
    %s137 = sadd.s32 %s136, 1
    %s138 = scalar_select %p135, %s136, %s137
    %p141 = pneg %p135
    %p142 = scmp.eq.s32.totalorder %s11, 1
    %p143 = por %p141, %p142
    %p144 = scmp.ne.s32.totalorder %s136, %s139
    %p145 = scmp.eq.s32.totalorder %s11, 0
    %p146 = por %p144, %p145
    %p147 = scmp.ne.s32.totalorder %s136, %s139
    %p148 = scmp.eq.s32.totalorder %s16, 1
    %p149 = por %p147, %p148
    %p150 = scmp.ne.s32.totalorder %s139, %s140
    %p151 = scmp.eq.s32.totalorder %s16, 0
    %p152 = por %p150, %p151
    %p153 = scmp.ne.s32.totalorder %s139, %s140
    %p154 = scmp.eq.s32.totalorder %s17, 1
    %p155 = por %p153, %p154
    %p157 = scmp.ne.s32.totalorder %s140, %s156
    %p158 = scmp.eq.s32.totalorder %s17, 0
    %p159 = por %p157, %p158
    %p160 = scmp.le.s32.totalorder 1, %s11
    %p161 = scmp.lt.s32.totalorder %s11, 3
    %p162 = pnand %p160, %p161
    %p163 = pneg %p162
    // Predicated region
    $region9: #{bottleneck_forward.5} parent=5 // pred_check
      _
    $region10: #{bottleneck_forward.5} parent=5 // pred_check_branch
      %165 = sbr.rel (%p162) target = $region12
    $region11: #{bottleneck_forward.5} parent=5 // pred_region
      %s166 = ssub.s32 %s11, 1
      // Predicated region
      $region13: #{bottleneck_forward.5} parent=11 // pred_check
        %p167 = pneg %p84
      $region14: #{bottleneck_forward.5} parent=11 // pred_check_branch
        %169 = sbr.rel (%p167) target = $region16
      $region15: #{bottleneck_forward.5} parent=11 // pred_region
        _
      $region16: #{bottleneck_forward.5} parent=11 // pred_fallthru
        _
      // Predicated region
      $region17: #{bottleneck_forward.5} parent=11 // pred_check
        %p170 = pneg %p105
      $region18: #{bottleneck_forward.5} parent=11 // pred_check_branch
        %172 = sbr.rel (%p170) target = $region20
      $region19: #{bottleneck_forward.5} parent=11 // pred_region
        _
      $region20: #{bottleneck_forward.5} parent=11 // pred_fallthru
        _
      // Predicated region
      $region21: #{bottleneck_forward.5} parent=11 // pred_check
        %p173 = pneg %p126
      $region22: #{bottleneck_forward.5} parent=11 // pred_check_branch
        %175 = sbr.rel (%p173) target = $region24
      $region23: #{bottleneck_forward.5} parent=11 // pred_region
        _
      $region24: #{bottleneck_forward.5} parent=11 // pred_fallthru
        _
    $region12: #{bottleneck_forward.5} parent=5 // pred_fallthru
      _
    %p176 = scmp.lt.s32.totalorder %s11, 2
    // Predicated region
    $region25: #{bottleneck_forward.5} parent=5 // pred_check
      %p177 = pneg %p176
    $region26: #{bottleneck_forward.5} parent=5 // pred_check_branch
      %179 = sbr.rel (%p177) target = $region28
    $region27: #{bottleneck_forward.5} parent=5 // pred_region
      // Predicated region
      $region29: #{bottleneck_forward.5} parent=27 // pred_check
        %p180 = pneg %p31
      $region30: #{bottleneck_forward.5} parent=27 // pred_check_branch
        %182 = sbr.rel (%p180) target = $region32
      $region31: #{bottleneck_forward.5} parent=27 // pred_region
        %p183 = scmp.lt.s32.totalorder %s11, 1
        %s184 = scalar_select %p183, %s11, 1
        %s185 = smul.addr %s184, 16
        %s186 = smul.addr %s185, 4
        %s187 = scalar_lea.vmem %s0, %s186
      $region32: #{bottleneck_forward.5} parent=27 // pred_fallthru
        _
      // Predicated region
      $region33: #{bottleneck_forward.5} parent=27 // pred_check
        %p188 = pneg %p57
      $region34: #{bottleneck_forward.5} parent=27 // pred_check_branch
        %190 = sbr.rel (%p188) target = $region36
      $region35: #{bottleneck_forward.5} parent=27 // pred_region
        %p191 = scmp.lt.s32.totalorder %s11, 1
        %s192 = scalar_select %p191, %s11, 1
        %s193 = smul.addr %s192, 16
        %s194 = smul.addr %s193, 4
        %s195 = scalar_lea.vmem %s1, %s194
      $region36: #{bottleneck_forward.5} parent=27 // pred_fallthru
        _
    $region28: #{bottleneck_forward.5} parent=5 // pred_fallthru
      _
    %p196 = scmp.le.s32.totalorder 1, %s11
    %p197 = scmp.lt.s32.totalorder %s11, 3
    %p198 = pnand %p196, %p197
    %p199 = pneg %p198
    // Predicated region
    $region37: #{bottleneck_forward.5} parent=5 // pred_check
      _
    $region38: #{bottleneck_forward.5} parent=5 // pred_check_branch
      %201 = sbr.rel (%p198) target = $region40
    $region39: #{bottleneck_forward.5} parent=5 // pred_region
      %s202 = ssub.s32 %s11, 1
      %p203 = scmp.lt.s32.totalorder %s16, 1
      %s204 = scalar_select %p203, %s16, 1
      %s205 = smul.addr %s204, 16
      %s206 = smul.addr %s205, 4
      %s207 = scalar_lea.vmem %s0, %s206
      %p208 = pneg %p37
      %p209 = pneg %p34
      %p210 = scmp.lt.s32.totalorder %s16, 1
      %s211 = scalar_select %p210, %s16, 1
      %s212 = smul.addr %s211, 16
      %s213 = smul.addr %s212, 4
      %s214 = scalar_lea.vmem %s1, %s213
      %p215 = pneg %p63
      %p216 = pneg %p60
      %p217 = pneg %p84
      %p218 = pneg %p81
      %p219 = pneg %p105
      %p220 = pneg %p102
      %p221 = pneg %p126
      %p222 = pneg %p123
      %p223 = pneg %p152
      %p224 = pneg %p149
      %p225 = scmp.lt.s32.totalorder %s16, 1
      %s226 = scalar_select %p225, %s16, 1
      %s227 = smul.addr %s226, 8
      %s228 = smul.addr %s227, 4
      %s229 = scalar_lea.vmem %s5, %s228
      %p230 = scmp.lt.s32.totalorder %s16, 1
      %s231 = scalar_select %p230, %s16, 1
      %s232 = smul.addr %s231, 16
      %s233 = smul.addr %s232, 4
      %s234 = scalar_lea.vmem %s0, %s233
      %p235 = scmp.lt.s32.totalorder %s16, 1
      %s236 = scalar_select %p235, %s16, 1
      %s237 = smul.addr %s236, 16
      %s238 = smul.addr %s237, 4
      %s239 = scalar_lea.vmem %s1, %s238
      %p240 = scmp.lt.s32.totalorder %s16, 1
      %s241 = scalar_select %p240, %s16, 1
      %s242 = smul.addr %s241, 8
      %s243 = smul.addr %s242, 4
      %s244 = scalar_lea.vmem %s5, %s243
      %s246 = scalar_lea.vmem %s234, 4
      %v247 = vld [vmem:[%s246] sm:$0xf]
      %v248 = vld [vmem:[%s246 + $0x8] sm:$0xf]
      %v249 = vld [vmem:[%s246 + $0x10] sm:$0xf]
      %v250 = vld [vmem:[%s246 + $0x18] sm:$0xf]
      %v251 = vld [vmem:[%s246 + $0x20] sm:$0xf]
      %v252 = vld [vmem:[%s246 + $0x28] sm:$0xf]
      %v253 = vld [vmem:[%s246 + $0x30] sm:$0xf]
      %s254 = scalar_lea.vmem %s239, 4
      %v255 = vld [vmem:[%s254] sm:$0xf]
      %v256 = vld [vmem:[%s254 + $0x8] sm:$0xf]
      %v257 = vld [vmem:[%s254 + $0x10] sm:$0xf]
      %v258 = vld [vmem:[%s254 + $0x18] sm:$0xf]
      %v259 = vld [vmem:[%s254 + $0x20] sm:$0xf]
      %v260 = vld [vmem:[%s254 + $0x28] sm:$0xf]
      %v261 = vld [vmem:[%s254 + $0x30] sm:$0xf]
      %262 = vst [vmem:[#allocation2] sm:$0xff] 0
      %263 = vst [vmem:[#allocation2 + $0x8] sm:$0xf] 0
      %vm264 = vcmask 1040384
      %vm265 = vsmask.f32 256
      %vm266 = vmand %vm264, %vm265
      %v267 = vld [vmem:[#allocation2] sm:$0x1]
      %v268 = vsel %vm266, 0, %v267
      %269 = vst [vmem:[#allocation2] sm:$0x1] %v268
      %v270 = vld [vmem:[#allocation2 + $0xc] sm:$0x1]
      %v271 = vsel %vm266, 0, %v270
      %272 = vst [vmem:[#allocation2 + $0xc] sm:$0x1] %v271
      %v273 = vld [vmem:[#allocation2 + $0x18] sm:$0x1]
      %v274 = vsel %vm266, 0, %v273
      %275 = vst [vmem:[#allocation2 + $0x18] sm:$0x1] %v274
      %v276 = vld [vmem:[#allocation2 + $0x24] sm:$0x1]
      %v277 = vsel %vm266, 0, %v276
      %278 = vst [vmem:[#allocation2 + $0x24] sm:$0x1] %v277
      %v279 = vld [vmem:[#allocation2 + $0x30] sm:$0x1]
      %v280 = vsel %vm266, 0, %v279
      %281 = vst [vmem:[#allocation2 + $0x30] sm:$0x1] %v280
      %v282 = vld [vmem:[#allocation2 + $0x3c] sm:$0x1]
      %v283 = vsel %vm266, 0, %v282
      %284 = vst [vmem:[#allocation2 + $0x3c] sm:$0x1] %v283
      %v285 = vld [vmem:[#allocation2 + $0x48] sm:$0x1]
      %v286 = vsel %vm266, 0, %v285
      %287 = vst [vmem:[#allocation2 + $0x48] sm:$0x1] %v286
      %v288 = vld [vmem:[#allocation2 + $0x54] sm:$0x1]
      %v289 = vsel %vm266, 0, %v288
      %290 = vst [vmem:[#allocation2 + $0x54] sm:$0x1] %v289
      %v292 = vshrl.u32 %v255, 16
      %v294 = vrot.slane %v292, 7
      %v295 = vshll.u32 %v255, 16
      %v297 = vor.u32 %v294, %v295
      %v299 = vshrl.u32 %v256, 16
      %v301 = vrot.slane %v299, 7
      %v302 = vshll.u32 %v256, 16
      %v304 = vor.u32 %v301, %v302
      %v306 = vshrl.u32 %v257, 16
      %v308 = vrot.slane %v306, 7
      %v309 = vshll.u32 %v257, 16
      %v311 = vor.u32 %v308, %v309
      %v313 = vshrl.u32 %v258, 16
      %v315 = vrot.slane %v313, 7
      %v316 = vshll.u32 %v258, 16
      %v318 = vor.u32 %v315, %v316
      %v320 = vshrl.u32 %v259, 16
      %v322 = vrot.slane %v320, 7
      %v323 = vshll.u32 %v259, 16
      %v325 = vor.u32 %v322, %v323
      %v327 = vshrl.u32 %v260, 16
      %v329 = vrot.slane %v327, 7
      %v330 = vshll.u32 %v260, 16
      %v332 = vor.u32 %v329, %v330
      %v334 = vshrl.u32 %v261, 16
      %v336 = vrot.slane %v334, 7
      %v337 = vshll.u32 %v261, 16
      %v339 = vor.u32 %v336, %v337
      %s347 = scalar_lea.vmem [#allocation2], 12
      %vm348 = vcmask 1043456
      %vm349 = vsmask.f32 7938
      %vm350 = vmand %vm348, %vm349
      %v351 = vld [vmem:[%s347] sm:$0xf]
      %v352 = vsel %vm350, %v297, %v351
      %353 = vst [vmem:[%s347] sm:$0xf] %v352
      %v354 = vld [vmem:[%s347 + $0xc] sm:$0xf]
      %v355 = vsel %vm350, %v304, %v354
      %356 = vst [vmem:[%s347 + $0xc] sm:$0xf] %v355
      %v357 = vld [vmem:[%s347 + $0x18] sm:$0xf]
      %v358 = vsel %vm350, %v311, %v357
      %359 = vst [vmem:[%s347 + $0x18] sm:$0xf] %v358
      %v360 = vld [vmem:[%s347 + $0x24] sm:$0xf]
      %v361 = vsel %vm350, %v318, %v360
      %362 = vst [vmem:[%s347 + $0x24] sm:$0xf] %v361
      %v363 = vld [vmem:[%s347 + $0x30] sm:$0xf]
      %v364 = vsel %vm350, %v325, %v363
      %365 = vst [vmem:[%s347 + $0x30] sm:$0xf] %v364
      %v366 = vld [vmem:[%s347 + $0x3c] sm:$0xf]
      %v367 = vsel %vm350, %v332, %v366
      %368 = vst [vmem:[%s347 + $0x3c] sm:$0xf] %v367
      %v369 = vld [vmem:[%s347 + $0x48] sm:$0xf]
      %v370 = vsel %vm350, %v339, %v369
      %371 = vst [vmem:[%s347 + $0x48] sm:$0xf] %v370
      %372 = vst [vmem:[%s347 + $0x4] sm:$0xf] %v247
      %373 = vst [vmem:[%s347 + $0x10] sm:$0xf] %v248
      %374 = vst [vmem:[%s347 + $0x1c] sm:$0xf] %v249
      %375 = vst [vmem:[%s347 + $0x28] sm:$0xf] %v250
      %376 = vst [vmem:[%s347 + $0x34] sm:$0xf] %v251
      %377 = vst [vmem:[%s347 + $0x40] sm:$0xf] %v252
      %378 = vst [vmem:[%s347 + $0x4c] sm:$0xf] %v253
      %379 = vst [vmem:[%s347 + $0x8] sm:$0xf] %v255
      %380 = vst [vmem:[%s347 + $0x14] sm:$0xf] %v256
      %381 = vst [vmem:[%s347 + $0x20] sm:$0xf] %v257
      %382 = vst [vmem:[%s347 + $0x2c] sm:$0xf] %v258
      %383 = vst [vmem:[%s347 + $0x38] sm:$0xf] %v259
      %384 = vst [vmem:[%s347 + $0x44] sm:$0xf] %v260
      %385 = vst [vmem:[%s347 + $0x50] sm:$0xf] %v261
      %v386 = vld [vmem:[#allocation2] sm:$0xff]
      %v387 = vld [vmem:[#allocation2 + $0x8] sm:$0xf]
      %v388 = vld [vmem:[#allocation2 + $0xc] sm:$0xff]
      %v389 = vld [vmem:[#allocation2 + $0x14] sm:$0xf]
      %v390 = vld [vmem:[#allocation2 + $0x18] sm:$0xff]
      %v391 = vld [vmem:[#allocation2 + $0x20] sm:$0xf]
      %v392 = vld [vmem:[#allocation2 + $0x24] sm:$0xff]
      %v393 = vld [vmem:[#allocation2 + $0x2c] sm:$0xf]
      %v394 = vld [vmem:[#allocation2 + $0x30] sm:$0xff]
      %v395 = vld [vmem:[#allocation2 + $0x38] sm:$0xf]
      %v396 = vld [vmem:[#allocation2 + $0x3c] sm:$0xff]
      %v397 = vld [vmem:[#allocation2 + $0x44] sm:$0xf]
      %v398 = vld [vmem:[#allocation2 + $0x48] sm:$0xff]
      %v399 = vld [vmem:[#allocation2 + $0x50] sm:$0xf]
      %v400 = vld [vmem:[#allocation2 + $0x54] sm:$0xff]
      %v401 = vld [vmem:[#allocation2 + $0x5c] sm:$0xf]
      %v402 = vld [vmem:[%s2] sm:$0xf]
      %v403 = vld [vmem:[%s2 + $0x4] sm:$0xf]
      %v404 = vld [vmem:[%s2 + $0x8] sm:$0xf]
      %v405 = vld [vmem:[%s2 + $0xc] sm:$0xf]
      %v406 = vld [vmem:[%s2 + $0x10] sm:$0xf]
      %v407 = vld [vmem:[%s2 + $0x14] sm:$0xf]
      %v408 = vld [vmem:[%s2 + $0x18] sm:$0xf]
      %v409 = vld [vmem:[%s2 + $0x1c] sm:$0xf]
      %v410 = vld [vmem:[%s2 + $0x20] sm:$0xf]
      %v411 = vld [vmem:[%s2 + $0x24] sm:$0xf]
      %v412 = vld [vmem:[%s2 + $0x28] sm:$0xf]
      %v413 = vld [vmem:[%s2 + $0x2c] sm:$0xf]
      %v414 = vld [vmem:[%s2 + $0x30] sm:$0xf]
      %v415 = vld [vmem:[%s2 + $0x34] sm:$0xf]
      %v416 = vld [vmem:[%s2 + $0x38] sm:$0xf]
      %v417 = vld [vmem:[%s2 + $0x3c] sm:$0xf]
      %v418 = vld [vmem:[%s2 + $0x40] sm:$0xf]
      %v419 = vld [vmem:[%s2 + $0x44] sm:$0xf]
      %v420 = vld [vmem:[%s2 + $0x48] sm:$0xf]
      %v421 = vld [vmem:[%s2 + $0x4c] sm:$0xf]
      %v422 = vld [vmem:[%s2 + $0x50] sm:$0xf]
      %v423 = vld [vmem:[%s2 + $0x54] sm:$0xf]
      %v424 = vld [vmem:[%s2 + $0x58] sm:$0xf]
      %v425 = vld [vmem:[%s2 + $0x5c] sm:$0xf]
      %v426 = vld [vmem:[%s2 + $0x60] sm:$0xf]
      %v427 = vld [vmem:[%s2 + $0x64] sm:$0xf]
      %v428 = vld [vmem:[%s2 + $0x68] sm:$0xf]
      %v429 = vld [vmem:[%s2 + $0x6c] sm:$0xf]
      %v430 = vld [vmem:[%s2 + $0x70] sm:$0xf]
      %v431 = vld [vmem:[%s2 + $0x74] sm:$0xf]
      %v432 = vld [vmem:[%s2 + $0x78] sm:$0xf]
      %v433 = vld [vmem:[%s2 + $0x7c] sm:$0xf]
      %v434 = vld [vmem:[%s2 + $0x80] sm:$0xf]
      %v435 = vld [vmem:[%s2 + $0x84] sm:$0xf]
      %v436 = vld [vmem:[%s2 + $0x88] sm:$0xf]
      %v437 = vld [vmem:[%s2 + $0x8c] sm:$0xf]
      %v438 = vld [vmem:[%s2 + $0x90] sm:$0xf]
      %v439 = vld [vmem:[%s2 + $0x94] sm:$0xf]
      %v440 = vld [vmem:[%s2 + $0x98] sm:$0xf]
      %v441 = vld [vmem:[%s2 + $0x9c] sm:$0xf]
      %v442 = vld [vmem:[%s2 + $0xa0] sm:$0xf]
      %v443 = vld [vmem:[%s2 + $0xa4] sm:$0xf]
      %v444 = vld [vmem:[%s2 + $0xa8] sm:$0xf]
      %v445 = vld [vmem:[%s2 + $0xac] sm:$0xf]
      %v446 = vld [vmem:[%s2 + $0xb0] sm:$0xf]
      %v447 = vld [vmem:[%s2 + $0xb4] sm:$0xf]
      %v448 = vld [vmem:[%s2 + $0xb8] sm:$0xf]
      %v449 = vld [vmem:[%s2 + $0xbc] sm:$0xf]
      %v466 = vunpack.c.l.b16 %v386
      %v467 = vunpack.c.h.b16 %v386
      %v468 = vunpack.c.l.b16 %v387
      %v469 = vunpack.c.l.b16 %v388
      %v470 = vunpack.c.h.b16 %v388
      %v471 = vunpack.c.l.b16 %v389
      %v472 = vunpack.c.l.b16 %v390
      %v473 = vunpack.c.h.b16 %v390
      %v474 = vunpack.c.l.b16 %v391
      %v475 = vunpack.c.l.b16 %v392
      %v476 = vunpack.c.h.b16 %v392
      %v477 = vunpack.c.l.b16 %v393
      %v478 = vunpack.c.l.b16 %v394
      %v479 = vunpack.c.h.b16 %v394
      %v480 = vunpack.c.l.b16 %v395
      %v481 = vunpack.c.l.b16 %v396
      %v482 = vunpack.c.h.b16 %v396
      %v483 = vunpack.c.l.b16 %v397
      %v484 = vunpack.c.l.b16 %v398
      %v485 = vunpack.c.h.b16 %v398
      %v486 = vunpack.c.l.b16 %v399
      %v487 = vunpack.c.l.b16 %v400
      %v488 = vunpack.c.h.b16 %v400
      %v489 = vunpack.c.l.b16 %v401
      %v490 = vpack.c.b16 %v469, %v466
      %v491 = vpack.c.b16 %v470, %v467
      %v492 = vpack.c.b16 %v471, %v468
      %v493 = vpack.c.b16 %v475, %v472
      %v494 = vpack.c.b16 %v476, %v473
      %v495 = vpack.c.b16 %v477, %v474
      %v496 = vpack.c.b16 %v481, %v478
      %v497 = vpack.c.b16 %v482, %v479
      %v498 = vpack.c.b16 %v483, %v480
      %v499 = vpack.c.b16 %v487, %v484
      %v500 = vpack.c.b16 %v488, %v485
      %v501 = vpack.c.b16 %v489, %v486
      %v562 = vunpack.c.l.b16 %v402
      %v563 = vunpack.c.l.b16 %v403
      %v564 = vunpack.c.l.b16 %v404
      %v565 = vunpack.c.l.b16 %v405
      %v566 = vunpack.c.l.b16 %v406
      %v567 = vunpack.c.l.b16 %v407
      %v568 = vunpack.c.l.b16 %v408
      %v569 = vunpack.c.l.b16 %v409
      %v570 = vunpack.c.l.b16 %v410
      %v571 = vunpack.c.l.b16 %v411
      %v572 = vunpack.c.l.b16 %v412
      %v573 = vunpack.c.l.b16 %v413
      %v574 = vunpack.c.l.b16 %v414
      %v575 = vunpack.c.l.b16 %v415
      %v576 = vunpack.c.l.b16 %v416
      %v577 = vunpack.c.l.b16 %v417
      %v578 = vunpack.c.l.b16 %v418
      %v579 = vunpack.c.l.b16 %v419
      %v580 = vunpack.c.l.b16 %v420
      %v581 = vunpack.c.l.b16 %v421
      %v582 = vunpack.c.l.b16 %v422
      %v583 = vunpack.c.l.b16 %v423
      %v584 = vunpack.c.l.b16 %v424
      %v585 = vunpack.c.l.b16 %v425
      %v586 = vunpack.c.l.b16 %v426
      %v587 = vunpack.c.l.b16 %v427
      %v588 = vunpack.c.l.b16 %v428
      %v589 = vunpack.c.l.b16 %v429
      %v590 = vunpack.c.l.b16 %v430
      %v591 = vunpack.c.l.b16 %v431
      %v592 = vunpack.c.l.b16 %v432
      %v593 = vunpack.c.l.b16 %v433
      %v594 = vunpack.c.l.b16 %v434
      %v595 = vunpack.c.l.b16 %v435
      %v596 = vunpack.c.l.b16 %v436
      %v597 = vunpack.c.l.b16 %v437
      %v598 = vunpack.c.l.b16 %v438
      %v599 = vunpack.c.l.b16 %v439
      %v600 = vunpack.c.l.b16 %v440
      %v601 = vunpack.c.l.b16 %v441
      %v602 = vunpack.c.l.b16 %v442
      %v603 = vunpack.c.l.b16 %v443
      %v604 = vunpack.c.l.b16 %v444
      %v605 = vunpack.c.l.b16 %v445
      %v606 = vunpack.c.l.b16 %v446
      %v607 = vunpack.c.l.b16 %v447
      %v608 = vunpack.c.l.b16 %v448
      %v609 = vunpack.c.l.b16 %v449
      %v610 = vpack.c.b16 %v563, %v562
      %v611 = vpack.c.b16 %v565, %v564
      %v612 = vpack.c.b16 %v567, %v566
      %v613 = vpack.c.b16 %v569, %v568
      %v614 = vpack.c.b16 %v571, %v570
      %v615 = vpack.c.b16 %v573, %v572
      %v616 = vpack.c.b16 %v575, %v574
      %v617 = vpack.c.b16 %v577, %v576
      %v618 = vpack.c.b16 %v579, %v578
      %v619 = vpack.c.b16 %v581, %v580
      %v620 = vpack.c.b16 %v583, %v582
      %v621 = vpack.c.b16 %v585, %v584
      %v622 = vpack.c.b16 %v587, %v586
      %v623 = vpack.c.b16 %v589, %v588
      %v624 = vpack.c.b16 %v591, %v590
      %v625 = vpack.c.b16 %v593, %v592
      %v626 = vpack.c.b16 %v595, %v594
      %v627 = vpack.c.b16 %v597, %v596
      %v628 = vpack.c.b16 %v599, %v598
      %v629 = vpack.c.b16 %v601, %v600
      %v630 = vpack.c.b16 %v603, %v602
      %v631 = vpack.c.b16 %v605, %v604
      %v632 = vpack.c.b16 %v607, %v606
      %v633 = vpack.c.b16 %v609, %v608
      %658 = vmatpush.bf16.msra.mxu0 %v617
      %659 = vmatpush.bf16.msra.mxu0 %v616
      %660 = vmatpush.bf16.msra.mxu0 %v615
      %661 = vmatpush.bf16.msra.mxu0 %v614
      %662 = vmatpush.bf16.msra.mxu0 %v613
      %663 = vmatpush.bf16.msra.mxu0 %v612
      %664 = vmatpush.bf16.msra.mxu0 %v611
      %665 = vmatpush.bf16.msra.mxu0 %v610
      %666 = vmatmul.bf16.gmra.mxu0 %v490
      %v667 = vpop.f32.mrf.mxu0
      %v668 = vadd.f32 0.0, %v667
      %v669 = vpop.f32.mrf.mxu0
      %v670 = vadd.f32 0.0, %v669
      %671 = vmatmul.bf16.gmra.mxu0 %v493
      %v672 = vpop.f32.mrf.mxu0
      %v673 = vadd.f32 0.0, %v672
      %v674 = vpop.f32.mrf.mxu0
      %v675 = vadd.f32 0.0, %v674
      %676 = vmatmul.bf16.gmra.mxu0 %v496
      %v677 = vpop.f32.mrf.mxu0
      %v678 = vadd.f32 0.0, %v677
      %v679 = vpop.f32.mrf.mxu0
      %v680 = vadd.f32 0.0, %v679
      %681 = vmatmul.bf16.gmra.mxu0 %v499
      %v682 = vpop.f32.mrf.mxu0
      %v683 = vadd.f32 0.0, %v682
      %v684 = vpop.f32.mrf.mxu0
      %v685 = vadd.f32 0.0, %v684
      %686 = vdwg.mxu0
      %687 = vmatpush.bf16.msra.mxu0 %v625
      %688 = vmatpush.bf16.msra.mxu0 %v624
      %689 = vmatpush.bf16.msra.mxu0 %v623
      %690 = vmatpush.bf16.msra.mxu0 %v622
      %691 = vmatpush.bf16.msra.mxu0 %v621
      %692 = vmatpush.bf16.msra.mxu0 %v620
      %693 = vmatpush.bf16.msra.mxu0 %v619
      %694 = vmatpush.bf16.msra.mxu0 %v618
      %695 = vmatmul.bf16.gmra.mxu0 %v491
      %v696 = vpop.f32.mrf.mxu0
      %v697 = vadd.f32 %v668, %v696
      %v698 = vpop.f32.mrf.mxu0
      %v699 = vadd.f32 %v670, %v698
      %700 = vmatmul.bf16.gmra.mxu0 %v494
      %v701 = vpop.f32.mrf.mxu0
      %v702 = vadd.f32 %v673, %v701
      %v703 = vpop.f32.mrf.mxu0
      %v704 = vadd.f32 %v675, %v703
      %705 = vmatmul.bf16.gmra.mxu0 %v497
      %v706 = vpop.f32.mrf.mxu0
      %v707 = vadd.f32 %v678, %v706
      %v708 = vpop.f32.mrf.mxu0
      %v709 = vadd.f32 %v680, %v708
      %710 = vmatmul.bf16.gmra.mxu0 %v500
      %v711 = vpop.f32.mrf.mxu0
      %v712 = vadd.f32 %v683, %v711
      %v713 = vpop.f32.mrf.mxu0
      %v714 = vadd.f32 %v685, %v713
      %715 = vdwg.mxu0
      %716 = vmatpush.bf16.msra.mxu0 %v633
      %717 = vmatpush.bf16.msra.mxu0 %v632
      %718 = vmatpush.bf16.msra.mxu0 %v631
      %719 = vmatpush.bf16.msra.mxu0 %v630
      %720 = vmatpush.bf16.msra.mxu0 %v629
      %721 = vmatpush.bf16.msra.mxu0 %v628
      %722 = vmatpush.bf16.msra.mxu0 %v627
      %723 = vmatpush.bf16.msra.mxu0 %v626
      %724 = vmatmul.bf16.gmra.mxu0 %v492
      %v725 = vpop.f32.mrf.mxu0
      %v726 = vadd.f32 %v697, %v725
      %v727 = vpop.f32.mrf.mxu0
      %v728 = vadd.f32 %v699, %v727
      %729 = vmatmul.bf16.gmra.mxu0 %v495
      %v730 = vpop.f32.mrf.mxu0
      %v731 = vadd.f32 %v702, %v730
      %v732 = vpop.f32.mrf.mxu0
      %v733 = vadd.f32 %v704, %v732
      %734 = vmatmul.bf16.gmra.mxu0 %v498
      %v735 = vpop.f32.mrf.mxu0
      %v736 = vadd.f32 %v707, %v735
      %v737 = vpop.f32.mrf.mxu0
      %v738 = vadd.f32 %v709, %v737
      %739 = vmatmul.bf16.gmra.mxu0 %v501
      %v740 = vpop.f32.mrf.mxu0
      %v741 = vadd.f32 %v712, %v740
      %v742 = vpop.f32.mrf.mxu0
      %v743 = vadd.f32 %v714, %v742
      %744 = vdwg.mxu0
      %745 = vst [vmem:[#allocation4] sm:$0xff] %v726
      %746 = vst [vmem:[#allocation4 + $0x8] sm:$0xff] %v728
      %747 = vst [vmem:[#allocation4 + $0x10] sm:$0xff] %v731
      %748 = vst [vmem:[#allocation4 + $0x18] sm:$0xff] %v733
      %749 = vst [vmem:[#allocation4 + $0x20] sm:$0xff] %v736
      %750 = vst [vmem:[#allocation4 + $0x28] sm:$0xff] %v738
      %751 = vst [vmem:[#allocation4 + $0x30] sm:$0xff] %v741
      %752 = vst [vmem:[#allocation4 + $0x38] sm:$0xff] %v743
      %v753 = vld [vmem:[%s234] sm:$0xf]
      %v754 = vld [vmem:[%s234 + $0x8] sm:$0xf]
      %v755 = vld [vmem:[%s234 + $0x10] sm:$0xf]
      %v756 = vld [vmem:[%s234 + $0x18] sm:$0xf]
      %v757 = vld [vmem:[%s234 + $0x20] sm:$0xf]
      %v758 = vld [vmem:[%s234 + $0x28] sm:$0xf]
      %v759 = vld [vmem:[%s234 + $0x30] sm:$0xf]
      %v760 = vld [vmem:[%s234 + $0x38] sm:$0xf]
      %v761 = vld [vmem:[%s239] sm:$0xf]
      %v762 = vld [vmem:[%s239 + $0x8] sm:$0xf]
      %v763 = vld [vmem:[%s239 + $0x10] sm:$0xf]
      %v764 = vld [vmem:[%s239 + $0x18] sm:$0xf]
      %v765 = vld [vmem:[%s239 + $0x20] sm:$0xf]
      %v766 = vld [vmem:[%s239 + $0x28] sm:$0xf]
      %v767 = vld [vmem:[%s239 + $0x30] sm:$0xf]
      %v768 = vld [vmem:[%s239 + $0x38] sm:$0xf]
      %v769 = vld [vmem:[#allocation3] sm:$0x1]
      %v770 = vsel %vm266, 0, %v769
      %771 = vst [vmem:[#allocation3] sm:$0x1] %v770
      %v772 = vld [vmem:[#allocation3 + $0xc] sm:$0x1]
      %v773 = vsel %vm266, 0, %v772
      %774 = vst [vmem:[#allocation3 + $0xc] sm:$0x1] %v773
      %v775 = vld [vmem:[#allocation3 + $0x18] sm:$0x1]
      %v776 = vsel %vm266, 0, %v775
      %777 = vst [vmem:[#allocation3 + $0x18] sm:$0x1] %v776
      %v778 = vld [vmem:[#allocation3 + $0x24] sm:$0x1]
      %v779 = vsel %vm266, 0, %v778
      %780 = vst [vmem:[#allocation3 + $0x24] sm:$0x1] %v779
      %v781 = vld [vmem:[#allocation3 + $0x30] sm:$0x1]
      %v782 = vsel %vm266, 0, %v781
      %783 = vst [vmem:[#allocation3 + $0x30] sm:$0x1] %v782
      %v784 = vld [vmem:[#allocation3 + $0x3c] sm:$0x1]
      %v785 = vsel %vm266, 0, %v784
      %786 = vst [vmem:[#allocation3 + $0x3c] sm:$0x1] %v785
      %v787 = vld [vmem:[#allocation3 + $0x48] sm:$0x1]
      %v788 = vsel %vm266, 0, %v787
      %789 = vst [vmem:[#allocation3 + $0x48] sm:$0x1] %v788
      %v790 = vld [vmem:[#allocation3 + $0x54] sm:$0x1]
      %v791 = vsel %vm266, 0, %v790
      %792 = vst [vmem:[#allocation3 + $0x54] sm:$0x1] %v791
      %v794 = vshrl.u32 %v761, 16
      %v796 = vrot.slane %v794, 7
      %v797 = vshll.u32 %v761, 16
      %v799 = vor.u32 %v796, %v797
      %v801 = vshrl.u32 %v762, 16
      %v803 = vrot.slane %v801, 7
      %v804 = vshll.u32 %v762, 16
      %v806 = vor.u32 %v803, %v804
      %v808 = vshrl.u32 %v763, 16
      %v810 = vrot.slane %v808, 7
      %v811 = vshll.u32 %v763, 16
      %v813 = vor.u32 %v810, %v811
      %v815 = vshrl.u32 %v764, 16
      %v817 = vrot.slane %v815, 7
      %v818 = vshll.u32 %v764, 16
      %v820 = vor.u32 %v817, %v818
      %v822 = vshrl.u32 %v765, 16
      %v824 = vrot.slane %v822, 7
      %v825 = vshll.u32 %v765, 16
      %v827 = vor.u32 %v824, %v825
      %v829 = vshrl.u32 %v766, 16
      %v831 = vrot.slane %v829, 7
      %v832 = vshll.u32 %v766, 16
      %v834 = vor.u32 %v831, %v832
      %v836 = vshrl.u32 %v767, 16
      %v838 = vrot.slane %v836, 7
      %v839 = vshll.u32 %v767, 16
      %v841 = vor.u32 %v838, %v839
      %v843 = vshrl.u32 %v768, 16
      %v845 = vrot.slane %v843, 7
      %v846 = vshll.u32 %v768, 16
      %v848 = vor.u32 %v845, %v846
      %v857 = vld [vmem:[#allocation3] sm:$0xf]
      %v858 = vsel %vm350, %v799, %v857
      %859 = vst [vmem:[#allocation3] sm:$0xf] %v858
      %v860 = vld [vmem:[#allocation3 + $0xc] sm:$0xf]
      %v861 = vsel %vm350, %v806, %v860
      %862 = vst [vmem:[#allocation3 + $0xc] sm:$0xf] %v861
      %v863 = vld [vmem:[#allocation3 + $0x18] sm:$0xf]
      %v864 = vsel %vm350, %v813, %v863
      %865 = vst [vmem:[#allocation3 + $0x18] sm:$0xf] %v864
      %v866 = vld [vmem:[#allocation3 + $0x24] sm:$0xf]
      %v867 = vsel %vm350, %v820, %v866
      %868 = vst [vmem:[#allocation3 + $0x24] sm:$0xf] %v867
      %v869 = vld [vmem:[#allocation3 + $0x30] sm:$0xf]
      %v870 = vsel %vm350, %v827, %v869
      %871 = vst [vmem:[#allocation3 + $0x30] sm:$0xf] %v870
      %v872 = vld [vmem:[#allocation3 + $0x3c] sm:$0xf]
      %v873 = vsel %vm350, %v834, %v872
      %874 = vst [vmem:[#allocation3 + $0x3c] sm:$0xf] %v873
      %v875 = vld [vmem:[#allocation3 + $0x48] sm:$0xf]
      %v876 = vsel %vm350, %v841, %v875
      %877 = vst [vmem:[#allocation3 + $0x48] sm:$0xf] %v876
      %v878 = vld [vmem:[#allocation3 + $0x54] sm:$0xf]
      %v879 = vsel %vm350, %v848, %v878
      %880 = vst [vmem:[#allocation3 + $0x54] sm:$0xf] %v879
      %881 = vst [vmem:[#allocation3 + $0x4] sm:$0xf] %v753
      %882 = vst [vmem:[#allocation3 + $0x10] sm:$0xf] %v754
      %883 = vst [vmem:[#allocation3 + $0x1c] sm:$0xf] %v755
      %884 = vst [vmem:[#allocation3 + $0x28] sm:$0xf] %v756
      %885 = vst [vmem:[#allocation3 + $0x34] sm:$0xf] %v757
      %886 = vst [vmem:[#allocation3 + $0x40] sm:$0xf] %v758
      %887 = vst [vmem:[#allocation3 + $0x4c] sm:$0xf] %v759
      %888 = vst [vmem:[#allocation3 + $0x58] sm:$0xf] %v760
      %889 = vst [vmem:[#allocation3 + $0x8] sm:$0xf] %v761
      %890 = vst [vmem:[#allocation3 + $0x14] sm:$0xf] %v762
      %891 = vst [vmem:[#allocation3 + $0x20] sm:$0xf] %v763
      %892 = vst [vmem:[#allocation3 + $0x2c] sm:$0xf] %v764
      %893 = vst [vmem:[#allocation3 + $0x38] sm:$0xf] %v765
      %894 = vst [vmem:[#allocation3 + $0x44] sm:$0xf] %v766
      %895 = vst [vmem:[#allocation3 + $0x50] sm:$0xf] %v767
      %896 = vst [vmem:[#allocation3 + $0x5c] sm:$0xf] %v768
      %v897 = vld [vmem:[#allocation3] sm:$0xff]
      %v898 = vld [vmem:[#allocation3 + $0x8] sm:$0xf]
      %v899 = vld [vmem:[#allocation3 + $0xc] sm:$0xff]
      %v900 = vld [vmem:[#allocation3 + $0x14] sm:$0xf]
      %v901 = vld [vmem:[#allocation3 + $0x18] sm:$0xff]
      %v902 = vld [vmem:[#allocation3 + $0x20] sm:$0xf]
      %v903 = vld [vmem:[#allocation3 + $0x24] sm:$0xff]
      %v904 = vld [vmem:[#allocation3 + $0x2c] sm:$0xf]
      %v905 = vld [vmem:[#allocation3 + $0x30] sm:$0xff]
      %v906 = vld [vmem:[#allocation3 + $0x38] sm:$0xf]
      %v907 = vld [vmem:[#allocation3 + $0x3c] sm:$0xff]
      %v908 = vld [vmem:[#allocation3 + $0x44] sm:$0xf]
      %v909 = vld [vmem:[#allocation3 + $0x48] sm:$0xff]
      %v910 = vld [vmem:[#allocation3 + $0x50] sm:$0xf]
      %v911 = vld [vmem:[#allocation3 + $0x54] sm:$0xff]
      %v912 = vld [vmem:[#allocation3 + $0x5c] sm:$0xf]
      %s913 = scalar_lea.vmem %s2, 192
      %v914 = vld [vmem:[%s913] sm:$0xf]
      %v915 = vld [vmem:[%s913 + $0x4] sm:$0xf]
      %v916 = vld [vmem:[%s913 + $0x8] sm:$0xf]
      %v917 = vld [vmem:[%s913 + $0xc] sm:$0xf]
      %v918 = vld [vmem:[%s913 + $0x10] sm:$0xf]
      %v919 = vld [vmem:[%s913 + $0x14] sm:$0xf]
      %v920 = vld [vmem:[%s913 + $0x18] sm:$0xf]
      %v921 = vld [vmem:[%s913 + $0x1c] sm:$0xf]
      %v922 = vld [vmem:[%s913 + $0x20] sm:$0xf]
      %v923 = vld [vmem:[%s913 + $0x24] sm:$0xf]
      %v924 = vld [vmem:[%s913 + $0x28] sm:$0xf]
      %v925 = vld [vmem:[%s913 + $0x2c] sm:$0xf]
      %v926 = vld [vmem:[%s913 + $0x30] sm:$0xf]
      %v927 = vld [vmem:[%s913 + $0x34] sm:$0xf]
      %v928 = vld [vmem:[%s913 + $0x38] sm:$0xf]
      %v929 = vld [vmem:[%s913 + $0x3c] sm:$0xf]
      %v930 = vld [vmem:[%s913 + $0x40] sm:$0xf]
      %v931 = vld [vmem:[%s913 + $0x44] sm:$0xf]
      %v932 = vld [vmem:[%s913 + $0x48] sm:$0xf]
      %v933 = vld [vmem:[%s913 + $0x4c] sm:$0xf]
      %v934 = vld [vmem:[%s913 + $0x50] sm:$0xf]
      %v935 = vld [vmem:[%s913 + $0x54] sm:$0xf]
      %v936 = vld [vmem:[%s913 + $0x58] sm:$0xf]
      %v937 = vld [vmem:[%s913 + $0x5c] sm:$0xf]
      %v938 = vld [vmem:[%s913 + $0x60] sm:$0xf]
      %v939 = vld [vmem:[%s913 + $0x64] sm:$0xf]
      %v940 = vld [vmem:[%s913 + $0x68] sm:$0xf]
      %v941 = vld [vmem:[%s913 + $0x6c] sm:$0xf]
      %v942 = vld [vmem:[%s913 + $0x70] sm:$0xf]
      %v943 = vld [vmem:[%s913 + $0x74] sm:$0xf]
      %v944 = vld [vmem:[%s913 + $0x78] sm:$0xf]
      %v945 = vld [vmem:[%s913 + $0x7c] sm:$0xf]
      %v946 = vld [vmem:[%s913 + $0x80] sm:$0xf]
      %v947 = vld [vmem:[%s913 + $0x84] sm:$0xf]
      %v948 = vld [vmem:[%s913 + $0x88] sm:$0xf]
      %v949 = vld [vmem:[%s913 + $0x8c] sm:$0xf]
      %v950 = vld [vmem:[%s913 + $0x90] sm:$0xf]
      %v951 = vld [vmem:[%s913 + $0x94] sm:$0xf]
      %v952 = vld [vmem:[%s913 + $0x98] sm:$0xf]
      %v953 = vld [vmem:[%s913 + $0x9c] sm:$0xf]
      %v954 = vld [vmem:[%s913 + $0xa0] sm:$0xf]
      %v955 = vld [vmem:[%s913 + $0xa4] sm:$0xf]
      %v956 = vld [vmem:[%s913 + $0xa8] sm:$0xf]
      %v957 = vld [vmem:[%s913 + $0xac] sm:$0xf]
      %v958 = vld [vmem:[%s913 + $0xb0] sm:$0xf]
      %v959 = vld [vmem:[%s913 + $0xb4] sm:$0xf]
      %v960 = vld [vmem:[%s913 + $0xb8] sm:$0xf]
      %v961 = vld [vmem:[%s913 + $0xbc] sm:$0xf]
      %v978 = vunpack.c.l.b16 %v897
      %v979 = vunpack.c.h.b16 %v897
      %v980 = vunpack.c.l.b16 %v898
      %v981 = vunpack.c.l.b16 %v899
      %v982 = vunpack.c.h.b16 %v899
      %v983 = vunpack.c.l.b16 %v900
      %v984 = vunpack.c.l.b16 %v901
      %v985 = vunpack.c.h.b16 %v901
      %v986 = vunpack.c.l.b16 %v902
      %v987 = vunpack.c.l.b16 %v903
      %v988 = vunpack.c.h.b16 %v903
      %v989 = vunpack.c.l.b16 %v904
      %v990 = vunpack.c.l.b16 %v905
      %v991 = vunpack.c.h.b16 %v905
      %v992 = vunpack.c.l.b16 %v906
      %v993 = vunpack.c.l.b16 %v907
      %v994 = vunpack.c.h.b16 %v907
      %v995 = vunpack.c.l.b16 %v908
      %v996 = vunpack.c.l.b16 %v909
      %v997 = vunpack.c.h.b16 %v909
      %v998 = vunpack.c.l.b16 %v910
      %v999 = vunpack.c.l.b16 %v911
      %v1000 = vunpack.c.h.b16 %v911
      %v1001 = vunpack.c.l.b16 %v912
      %v1002 = vpack.c.b16 %v981, %v978
      %v1003 = vpack.c.b16 %v982, %v979
      %v1004 = vpack.c.b16 %v983, %v980
      %v1005 = vpack.c.b16 %v987, %v984
      %v1006 = vpack.c.b16 %v988, %v985
      %v1007 = vpack.c.b16 %v989, %v986
      %v1008 = vpack.c.b16 %v993, %v990
      %v1009 = vpack.c.b16 %v994, %v991
      %v1010 = vpack.c.b16 %v995, %v992
      %v1011 = vpack.c.b16 %v999, %v996
      %v1012 = vpack.c.b16 %v1000, %v997
      %v1013 = vpack.c.b16 %v1001, %v998
      %v1074 = vunpack.c.l.b16 %v914
      %v1075 = vunpack.c.l.b16 %v915
      %v1076 = vunpack.c.l.b16 %v916
      %v1077 = vunpack.c.l.b16 %v917
      %v1078 = vunpack.c.l.b16 %v918
      %v1079 = vunpack.c.l.b16 %v919
      %v1080 = vunpack.c.l.b16 %v920
      %v1081 = vunpack.c.l.b16 %v921
      %v1082 = vunpack.c.l.b16 %v922
      %v1083 = vunpack.c.l.b16 %v923
      %v1084 = vunpack.c.l.b16 %v924
      %v1085 = vunpack.c.l.b16 %v925
      %v1086 = vunpack.c.l.b16 %v926
      %v1087 = vunpack.c.l.b16 %v927
      %v1088 = vunpack.c.l.b16 %v928
      %v1089 = vunpack.c.l.b16 %v929
      %v1090 = vunpack.c.l.b16 %v930
      %v1091 = vunpack.c.l.b16 %v931
      %v1092 = vunpack.c.l.b16 %v932
      %v1093 = vunpack.c.l.b16 %v933
      %v1094 = vunpack.c.l.b16 %v934
      %v1095 = vunpack.c.l.b16 %v935
      %v1096 = vunpack.c.l.b16 %v936
      %v1097 = vunpack.c.l.b16 %v937
      %v1098 = vunpack.c.l.b16 %v938
      %v1099 = vunpack.c.l.b16 %v939
      %v1100 = vunpack.c.l.b16 %v940
      %v1101 = vunpack.c.l.b16 %v941
      %v1102 = vunpack.c.l.b16 %v942
      %v1103 = vunpack.c.l.b16 %v943
      %v1104 = vunpack.c.l.b16 %v944
      %v1105 = vunpack.c.l.b16 %v945
      %v1106 = vunpack.c.l.b16 %v946
      %v1107 = vunpack.c.l.b16 %v947
      %v1108 = vunpack.c.l.b16 %v948
      %v1109 = vunpack.c.l.b16 %v949
      %v1110 = vunpack.c.l.b16 %v950
      %v1111 = vunpack.c.l.b16 %v951
      %v1112 = vunpack.c.l.b16 %v952
      %v1113 = vunpack.c.l.b16 %v953
      %v1114 = vunpack.c.l.b16 %v954
      %v1115 = vunpack.c.l.b16 %v955
      %v1116 = vunpack.c.l.b16 %v956
      %v1117 = vunpack.c.l.b16 %v957
      %v1118 = vunpack.c.l.b16 %v958
      %v1119 = vunpack.c.l.b16 %v959
      %v1120 = vunpack.c.l.b16 %v960
      %v1121 = vunpack.c.l.b16 %v961
      %v1122 = vpack.c.b16 %v1075, %v1074
      %v1123 = vpack.c.b16 %v1077, %v1076
      %v1124 = vpack.c.b16 %v1079, %v1078
      %v1125 = vpack.c.b16 %v1081, %v1080
      %v1126 = vpack.c.b16 %v1083, %v1082
      %v1127 = vpack.c.b16 %v1085, %v1084
      %v1128 = vpack.c.b16 %v1087, %v1086
      %v1129 = vpack.c.b16 %v1089, %v1088
      %v1130 = vpack.c.b16 %v1091, %v1090
      %v1131 = vpack.c.b16 %v1093, %v1092
      %v1132 = vpack.c.b16 %v1095, %v1094
      %v1133 = vpack.c.b16 %v1097, %v1096
      %v1134 = vpack.c.b16 %v1099, %v1098
      %v1135 = vpack.c.b16 %v1101, %v1100
      %v1136 = vpack.c.b16 %v1103, %v1102
      %v1137 = vpack.c.b16 %v1105, %v1104
      %v1138 = vpack.c.b16 %v1107, %v1106
      %v1139 = vpack.c.b16 %v1109, %v1108
      %v1140 = vpack.c.b16 %v1111, %v1110
      %v1141 = vpack.c.b16 %v1113, %v1112
      %v1142 = vpack.c.b16 %v1115, %v1114
      %v1143 = vpack.c.b16 %v1117, %v1116
      %v1144 = vpack.c.b16 %v1119, %v1118
      %v1145 = vpack.c.b16 %v1121, %v1120
      %1170 = vmatpush.bf16.msra.mxu0 %v1129
      %1171 = vmatpush.bf16.msra.mxu0 %v1128
      %1172 = vmatpush.bf16.msra.mxu0 %v1127
      %1173 = vmatpush.bf16.msra.mxu0 %v1126
      %1174 = vmatpush.bf16.msra.mxu0 %v1125
      %1175 = vmatpush.bf16.msra.mxu0 %v1124
      %1176 = vmatpush.bf16.msra.mxu0 %v1123
      %1177 = vmatpush.bf16.msra.mxu0 %v1122
      %1178 = vmatmul.bf16.gmra.mxu0 %v1002
      %v1179 = vpop.f32.mrf.mxu0
      %v1180 = vadd.f32 0.0, %v1179
      %v1181 = vpop.f32.mrf.mxu0
      %v1182 = vadd.f32 0.0, %v1181
      %1183 = vmatmul.bf16.gmra.mxu0 %v1005
      %v1184 = vpop.f32.mrf.mxu0
      %v1185 = vadd.f32 0.0, %v1184
      %v1186 = vpop.f32.mrf.mxu0
      %v1187 = vadd.f32 0.0, %v1186
      %1188 = vmatmul.bf16.gmra.mxu0 %v1008
      %v1189 = vpop.f32.mrf.mxu0
      %v1190 = vadd.f32 0.0, %v1189
      %v1191 = vpop.f32.mrf.mxu0
      %v1192 = vadd.f32 0.0, %v1191
      %1193 = vmatmul.bf16.gmra.mxu0 %v1011
      %v1194 = vpop.f32.mrf.mxu0
      %v1195 = vadd.f32 0.0, %v1194
      %v1196 = vpop.f32.mrf.mxu0
      %v1197 = vadd.f32 0.0, %v1196
      %1198 = vdwg.mxu0
      %1199 = vmatpush.bf16.msra.mxu0 %v1137
      %1200 = vmatpush.bf16.msra.mxu0 %v1136
      %1201 = vmatpush.bf16.msra.mxu0 %v1135
      %1202 = vmatpush.bf16.msra.mxu0 %v1134
      %1203 = vmatpush.bf16.msra.mxu0 %v1133
      %1204 = vmatpush.bf16.msra.mxu0 %v1132
      %1205 = vmatpush.bf16.msra.mxu0 %v1131
      %1206 = vmatpush.bf16.msra.mxu0 %v1130
      %1207 = vmatmul.bf16.gmra.mxu0 %v1003
      %v1208 = vpop.f32.mrf.mxu0
      %v1209 = vadd.f32 %v1180, %v1208
      %v1210 = vpop.f32.mrf.mxu0
      %v1211 = vadd.f32 %v1182, %v1210
      %1212 = vmatmul.bf16.gmra.mxu0 %v1006
      %v1213 = vpop.f32.mrf.mxu0
      %v1214 = vadd.f32 %v1185, %v1213
      %v1215 = vpop.f32.mrf.mxu0
      %v1216 = vadd.f32 %v1187, %v1215
      %1217 = vmatmul.bf16.gmra.mxu0 %v1009
      %v1218 = vpop.f32.mrf.mxu0
      %v1219 = vadd.f32 %v1190, %v1218
      %v1220 = vpop.f32.mrf.mxu0
      %v1221 = vadd.f32 %v1192, %v1220
      %1222 = vmatmul.bf16.gmra.mxu0 %v1012
      %v1223 = vpop.f32.mrf.mxu0
      %v1224 = vadd.f32 %v1195, %v1223
      %v1225 = vpop.f32.mrf.mxu0
      %v1226 = vadd.f32 %v1197, %v1225
      %1227 = vdwg.mxu0
      %1228 = vmatpush.bf16.msra.mxu0 %v1145
      %1229 = vmatpush.bf16.msra.mxu0 %v1144
      %1230 = vmatpush.bf16.msra.mxu0 %v1143
      %1231 = vmatpush.bf16.msra.mxu0 %v1142
      %1232 = vmatpush.bf16.msra.mxu0 %v1141
      %1233 = vmatpush.bf16.msra.mxu0 %v1140
      %1234 = vmatpush.bf16.msra.mxu0 %v1139
      %1235 = vmatpush.bf16.msra.mxu0 %v1138
      %1236 = vmatmul.bf16.gmra.mxu0 %v1004
      %v1237 = vpop.f32.mrf.mxu0
      %v1238 = vadd.f32 %v1209, %v1237
      %v1239 = vpop.f32.mrf.mxu0
      %v1240 = vadd.f32 %v1211, %v1239
      %1241 = vmatmul.bf16.gmra.mxu0 %v1007
      %v1242 = vpop.f32.mrf.mxu0
      %v1243 = vadd.f32 %v1214, %v1242
      %v1244 = vpop.f32.mrf.mxu0
      %v1245 = vadd.f32 %v1216, %v1244
      %1246 = vmatmul.bf16.gmra.mxu0 %v1010
      %v1247 = vpop.f32.mrf.mxu0
      %v1248 = vadd.f32 %v1219, %v1247
      %v1249 = vpop.f32.mrf.mxu0
      %v1250 = vadd.f32 %v1221, %v1249
      %1251 = vmatmul.bf16.gmra.mxu0 %v1013
      %v1252 = vpop.f32.mrf.mxu0
      %v1253 = vadd.f32 %v1224, %v1252
      %v1254 = vpop.f32.mrf.mxu0
      %v1255 = vadd.f32 %v1226, %v1254
      %1256 = vdwg.mxu0
      %v1257 = vld [vmem:[#allocation4] sm:$0xff]
      %v1258 = vld [vmem:[#allocation4 + $0x8] sm:$0xff]
      %v1259 = vld [vmem:[#allocation4 + $0x10] sm:$0xff]
      %v1260 = vld [vmem:[#allocation4 + $0x18] sm:$0xff]
      %v1261 = vld [vmem:[#allocation4 + $0x20] sm:$0xff]
      %v1262 = vld [vmem:[#allocation4 + $0x28] sm:$0xff]
      %v1263 = vld [vmem:[#allocation4 + $0x30] sm:$0xff]
      %v1264 = vld [vmem:[#allocation4 + $0x38] sm:$0xff]
      %v1265 = vadd.f32 %v1257, %v1238
      %v1266 = vadd.f32 %v1258, %v1240
      %v1267 = vadd.f32 %v1259, %v1243
      %v1268 = vadd.f32 %v1260, %v1245
      %v1269 = vadd.f32 %v1261, %v1248
      %v1270 = vadd.f32 %v1262, %v1250
      %v1271 = vadd.f32 %v1263, %v1253
      %v1272 = vadd.f32 %v1264, %v1255
      %1273 = vst [vmem:[#allocation4] sm:$0xff] %v1265
      %1274 = vst [vmem:[#allocation4 + $0x8] sm:$0xff] %v1266
      %1275 = vst [vmem:[#allocation4 + $0x10] sm:$0xff] %v1267
      %1276 = vst [vmem:[#allocation4 + $0x18] sm:$0xff] %v1268
      %1277 = vst [vmem:[#allocation4 + $0x20] sm:$0xff] %v1269
      %1278 = vst [vmem:[#allocation4 + $0x28] sm:$0xff] %v1270
      %1279 = vst [vmem:[#allocation4 + $0x30] sm:$0xff] %v1271
      %1280 = vst [vmem:[#allocation4 + $0x38] sm:$0xff] %v1272
      %v1281 = vld [vmem:[%s246] sm:$0xf]
      %v1282 = vld [vmem:[%s246 + $0x8] sm:$0xf]
      %v1283 = vld [vmem:[%s246 + $0x10] sm:$0xf]
      %v1284 = vld [vmem:[%s246 + $0x18] sm:$0xf]
      %v1285 = vld [vmem:[%s246 + $0x20] sm:$0xf]
      %v1286 = vld [vmem:[%s246 + $0x28] sm:$0xf]
      %v1287 = vld [vmem:[%s246 + $0x30] sm:$0xf]
      %v1288 = vld [vmem:[%s246 + $0x38] sm:$0xf]
      %v1289 = vld [vmem:[%s254] sm:$0xf]
      %v1290 = vld [vmem:[%s254 + $0x8] sm:$0xf]
      %v1291 = vld [vmem:[%s254 + $0x10] sm:$0xf]
      %v1292 = vld [vmem:[%s254 + $0x18] sm:$0xf]
      %v1293 = vld [vmem:[%s254 + $0x20] sm:$0xf]
      %v1294 = vld [vmem:[%s254 + $0x28] sm:$0xf]
      %v1295 = vld [vmem:[%s254 + $0x30] sm:$0xf]
      %v1296 = vld [vmem:[%s254 + $0x38] sm:$0xf]
      %v1297 = vld [vmem:[#allocation2] sm:$0x1]
      %v1298 = vsel %vm266, 0, %v1297
      %1299 = vst [vmem:[#allocation2] sm:$0x1] %v1298
      %v1300 = vld [vmem:[#allocation2 + $0xc] sm:$0x1]
      %v1301 = vsel %vm266, 0, %v1300
      %1302 = vst [vmem:[#allocation2 + $0xc] sm:$0x1] %v1301
      %v1303 = vld [vmem:[#allocation2 + $0x18] sm:$0x1]
      %v1304 = vsel %vm266, 0, %v1303
      %1305 = vst [vmem:[#allocation2 + $0x18] sm:$0x1] %v1304
      %v1306 = vld [vmem:[#allocation2 + $0x24] sm:$0x1]
      %v1307 = vsel %vm266, 0, %v1306
      %1308 = vst [vmem:[#allocation2 + $0x24] sm:$0x1] %v1307
      %v1309 = vld [vmem:[#allocation2 + $0x30] sm:$0x1]
      %v1310 = vsel %vm266, 0, %v1309
      %1311 = vst [vmem:[#allocation2 + $0x30] sm:$0x1] %v1310
      %v1312 = vld [vmem:[#allocation2 + $0x3c] sm:$0x1]
      %v1313 = vsel %vm266, 0, %v1312
      %1314 = vst [vmem:[#allocation2 + $0x3c] sm:$0x1] %v1313
      %v1315 = vld [vmem:[#allocation2 + $0x48] sm:$0x1]
      %v1316 = vsel %vm266, 0, %v1315
      %1317 = vst [vmem:[#allocation2 + $0x48] sm:$0x1] %v1316
      %v1318 = vld [vmem:[#allocation2 + $0x54] sm:$0x1]
      %v1319 = vsel %vm266, 0, %v1318
      %1320 = vst [vmem:[#allocation2 + $0x54] sm:$0x1] %v1319
      %v1322 = vshrl.u32 %v1289, 16
      %v1324 = vrot.slane %v1322, 7
      %v1325 = vshll.u32 %v1289, 16
      %v1327 = vor.u32 %v1324, %v1325
      %v1329 = vshrl.u32 %v1290, 16
      %v1331 = vrot.slane %v1329, 7
      %v1332 = vshll.u32 %v1290, 16
      %v1334 = vor.u32 %v1331, %v1332
      %v1336 = vshrl.u32 %v1291, 16
      %v1338 = vrot.slane %v1336, 7
      %v1339 = vshll.u32 %v1291, 16
      %v1341 = vor.u32 %v1338, %v1339
      %v1343 = vshrl.u32 %v1292, 16
      %v1345 = vrot.slane %v1343, 7
      %v1346 = vshll.u32 %v1292, 16
      %v1348 = vor.u32 %v1345, %v1346
      %v1350 = vshrl.u32 %v1293, 16
      %v1352 = vrot.slane %v1350, 7
      %v1353 = vshll.u32 %v1293, 16
      %v1355 = vor.u32 %v1352, %v1353
      %v1357 = vshrl.u32 %v1294, 16
      %v1359 = vrot.slane %v1357, 7
      %v1360 = vshll.u32 %v1294, 16
      %v1362 = vor.u32 %v1359, %v1360
      %v1364 = vshrl.u32 %v1295, 16
      %v1366 = vrot.slane %v1364, 7
      %v1367 = vshll.u32 %v1295, 16
      %v1369 = vor.u32 %v1366, %v1367
      %v1371 = vshrl.u32 %v1296, 16
      %v1373 = vrot.slane %v1371, 7
      %v1374 = vshll.u32 %v1296, 16
      %v1376 = vor.u32 %v1373, %v1374
      %v1385 = vld [vmem:[#allocation2] sm:$0xf]
      %v1386 = vsel %vm350, %v1327, %v1385
      %1387 = vst [vmem:[#allocation2] sm:$0xf] %v1386
      %v1388 = vld [vmem:[#allocation2 + $0xc] sm:$0xf]
      %v1389 = vsel %vm350, %v1334, %v1388
      %1390 = vst [vmem:[#allocation2 + $0xc] sm:$0xf] %v1389
      %v1391 = vld [vmem:[#allocation2 + $0x18] sm:$0xf]
      %v1392 = vsel %vm350, %v1341, %v1391
      %1393 = vst [vmem:[#allocation2 + $0x18] sm:$0xf] %v1392
      %v1394 = vld [vmem:[#allocation2 + $0x24] sm:$0xf]
      %v1395 = vsel %vm350, %v1348, %v1394
      %1396 = vst [vmem:[#allocation2 + $0x24] sm:$0xf] %v1395
      %v1397 = vld [vmem:[#allocation2 + $0x30] sm:$0xf]
      %v1398 = vsel %vm350, %v1355, %v1397
      %1399 = vst [vmem:[#allocation2 + $0x30] sm:$0xf] %v1398
      %v1400 = vld [vmem:[#allocation2 + $0x3c] sm:$0xf]
      %v1401 = vsel %vm350, %v1362, %v1400
      %1402 = vst [vmem:[#allocation2 + $0x3c] sm:$0xf] %v1401
      %v1403 = vld [vmem:[#allocation2 + $0x48] sm:$0xf]
      %v1404 = vsel %vm350, %v1369, %v1403
      %1405 = vst [vmem:[#allocation2 + $0x48] sm:$0xf] %v1404
      %v1406 = vld [vmem:[#allocation2 + $0x54] sm:$0xf]
      %v1407 = vsel %vm350, %v1376, %v1406
      %1408 = vst [vmem:[#allocation2 + $0x54] sm:$0xf] %v1407
      %1409 = vst [vmem:[#allocation2 + $0x4] sm:$0xf] %v1281
      %1410 = vst [vmem:[#allocation2 + $0x10] sm:$0xf] %v1282
      %1411 = vst [vmem:[#allocation2 + $0x1c] sm:$0xf] %v1283
      %1412 = vst [vmem:[#allocation2 + $0x28] sm:$0xf] %v1284
      %1413 = vst [vmem:[#allocation2 + $0x34] sm:$0xf] %v1285
      %1414 = vst [vmem:[#allocation2 + $0x40] sm:$0xf] %v1286
      %1415 = vst [vmem:[#allocation2 + $0x4c] sm:$0xf] %v1287
      %1416 = vst [vmem:[#allocation2 + $0x58] sm:$0xf] %v1288
      %1417 = vst [vmem:[#allocation2 + $0x8] sm:$0xf] %v1289
      %1418 = vst [vmem:[#allocation2 + $0x14] sm:$0xf] %v1290
      %1419 = vst [vmem:[#allocation2 + $0x20] sm:$0xf] %v1291
      %1420 = vst [vmem:[#allocation2 + $0x2c] sm:$0xf] %v1292
      %1421 = vst [vmem:[#allocation2 + $0x38] sm:$0xf] %v1293
      %1422 = vst [vmem:[#allocation2 + $0x44] sm:$0xf] %v1294
      %1423 = vst [vmem:[#allocation2 + $0x50] sm:$0xf] %v1295
      %1424 = vst [vmem:[#allocation2 + $0x5c] sm:$0xf] %v1296
      %v1425 = vld [vmem:[#allocation2] sm:$0xff]
      %v1426 = vld [vmem:[#allocation2 + $0x8] sm:$0xf]
      %v1427 = vld [vmem:[#allocation2 + $0xc] sm:$0xff]
      %v1428 = vld [vmem:[#allocation2 + $0x14] sm:$0xf]
      %v1429 = vld [vmem:[#allocation2 + $0x18] sm:$0xff]
      %v1430 = vld [vmem:[#allocation2 + $0x20] sm:$0xf]
      %v1431 = vld [vmem:[#allocation2 + $0x24] sm:$0xff]
      %v1432 = vld [vmem:[#allocation2 + $0x2c] sm:$0xf]
      %v1433 = vld [vmem:[#allocation2 + $0x30] sm:$0xff]
      %v1434 = vld [vmem:[#allocation2 + $0x38] sm:$0xf]
      %v1435 = vld [vmem:[#allocation2 + $0x3c] sm:$0xff]
      %v1436 = vld [vmem:[#allocation2 + $0x44] sm:$0xf]
      %v1437 = vld [vmem:[#allocation2 + $0x48] sm:$0xff]
      %v1438 = vld [vmem:[#allocation2 + $0x50] sm:$0xf]
      %v1439 = vld [vmem:[#allocation2 + $0x54] sm:$0xff]
      %v1440 = vld [vmem:[#allocation2 + $0x5c] sm:$0xf]
      %s1441 = scalar_lea.vmem %s2, 384
      %v1442 = vld [vmem:[%s1441] sm:$0xf]
      %v1443 = vld [vmem:[%s1441 + $0x4] sm:$0xf]
      %v1444 = vld [vmem:[%s1441 + $0x8] sm:$0xf]
      %v1445 = vld [vmem:[%s1441 + $0xc] sm:$0xf]
      %v1446 = vld [vmem:[%s1441 + $0x10] sm:$0xf]
      %v1447 = vld [vmem:[%s1441 + $0x14] sm:$0xf]
      %v1448 = vld [vmem:[%s1441 + $0x18] sm:$0xf]
      %v1449 = vld [vmem:[%s1441 + $0x1c] sm:$0xf]
      %v1450 = vld [vmem:[%s1441 + $0x20] sm:$0xf]
      %v1451 = vld [vmem:[%s1441 + $0x24] sm:$0xf]
      %v1452 = vld [vmem:[%s1441 + $0x28] sm:$0xf]
      %v1453 = vld [vmem:[%s1441 + $0x2c] sm:$0xf]
      %v1454 = vld [vmem:[%s1441 + $0x30] sm:$0xf]
      %v1455 = vld [vmem:[%s1441 + $0x34] sm:$0xf]
      %v1456 = vld [vmem:[%s1441 + $0x38] sm:$0xf]
      %v1457 = vld [vmem:[%s1441 + $0x3c] sm:$0xf]
      %v1458 = vld [vmem:[%s1441 + $0x40] sm:$0xf]
      %v1459 = vld [vmem:[%s1441 + $0x44] sm:$0xf]
      %v1460 = vld [vmem:[%s1441 + $0x48] sm:$0xf]
      %v1461 = vld [vmem:[%s1441 + $0x4c] sm:$0xf]
      %v1462 = vld [vmem:[%s1441 + $0x50] sm:$0xf]
      %v1463 = vld [vmem:[%s1441 + $0x54] sm:$0xf]
      %v1464 = vld [vmem:[%s1441 + $0x58] sm:$0xf]
      %v1465 = vld [vmem:[%s1441 + $0x5c] sm:$0xf]
      %v1466 = vld [vmem:[%s1441 + $0x60] sm:$0xf]
      %v1467 = vld [vmem:[%s1441 + $0x64] sm:$0xf]
      %v1468 = vld [vmem:[%s1441 + $0x68] sm:$0xf]
      %v1469 = vld [vmem:[%s1441 + $0x6c] sm:$0xf]
      %v1470 = vld [vmem:[%s1441 + $0x70] sm:$0xf]
      %v1471 = vld [vmem:[%s1441 + $0x74] sm:$0xf]
      %v1472 = vld [vmem:[%s1441 + $0x78] sm:$0xf]
      %v1473 = vld [vmem:[%s1441 + $0x7c] sm:$0xf]
      %v1474 = vld [vmem:[%s1441 + $0x80] sm:$0xf]
      %v1475 = vld [vmem:[%s1441 + $0x84] sm:$0xf]
      %v1476 = vld [vmem:[%s1441 + $0x88] sm:$0xf]
      %v1477 = vld [vmem:[%s1441 + $0x8c] sm:$0xf]
      %v1478 = vld [vmem:[%s1441 + $0x90] sm:$0xf]
      %v1479 = vld [vmem:[%s1441 + $0x94] sm:$0xf]
      %v1480 = vld [vmem:[%s1441 + $0x98] sm:$0xf]
      %v1481 = vld [vmem:[%s1441 + $0x9c] sm:$0xf]
      %v1482 = vld [vmem:[%s1441 + $0xa0] sm:$0xf]
      %v1483 = vld [vmem:[%s1441 + $0xa4] sm:$0xf]
      %v1484 = vld [vmem:[%s1441 + $0xa8] sm:$0xf]
      %v1485 = vld [vmem:[%s1441 + $0xac] sm:$0xf]
      %v1486 = vld [vmem:[%s1441 + $0xb0] sm:$0xf]
      %v1487 = vld [vmem:[%s1441 + $0xb4] sm:$0xf]
      %v1488 = vld [vmem:[%s1441 + $0xb8] sm:$0xf]
      %v1489 = vld [vmem:[%s1441 + $0xbc] sm:$0xf]
      %v1506 = vunpack.c.l.b16 %v1425
      %v1507 = vunpack.c.h.b16 %v1425
      %v1508 = vunpack.c.l.b16 %v1426
      %v1509 = vunpack.c.l.b16 %v1427
      %v1510 = vunpack.c.h.b16 %v1427
      %v1511 = vunpack.c.l.b16 %v1428
      %v1512 = vunpack.c.l.b16 %v1429
      %v1513 = vunpack.c.h.b16 %v1429
      %v1514 = vunpack.c.l.b16 %v1430
      %v1515 = vunpack.c.l.b16 %v1431
      %v1516 = vunpack.c.h.b16 %v1431
      %v1517 = vunpack.c.l.b16 %v1432
      %v1518 = vunpack.c.l.b16 %v1433
      %v1519 = vunpack.c.h.b16 %v1433
      %v1520 = vunpack.c.l.b16 %v1434
      %v1521 = vunpack.c.l.b16 %v1435
      %v1522 = vunpack.c.h.b16 %v1435
      %v1523 = vunpack.c.l.b16 %v1436
      %v1524 = vunpack.c.l.b16 %v1437
      %v1525 = vunpack.c.h.b16 %v1437
      %v1526 = vunpack.c.l.b16 %v1438
      %v1527 = vunpack.c.l.b16 %v1439
      %v1528 = vunpack.c.h.b16 %v1439
      %v1529 = vunpack.c.l.b16 %v1440
      %v1530 = vpack.c.b16 %v1509, %v1506
      %v1531 = vpack.c.b16 %v1510, %v1507
      %v1532 = vpack.c.b16 %v1511, %v1508
      %v1533 = vpack.c.b16 %v1515, %v1512
      %v1534 = vpack.c.b16 %v1516, %v1513
      %v1535 = vpack.c.b16 %v1517, %v1514
      %v1536 = vpack.c.b16 %v1521, %v1518
      %v1537 = vpack.c.b16 %v1522, %v1519
      %v1538 = vpack.c.b16 %v1523, %v1520
      %v1539 = vpack.c.b16 %v1527, %v1524
      %v1540 = vpack.c.b16 %v1528, %v1525
      %v1541 = vpack.c.b16 %v1529, %v1526
      %v1602 = vunpack.c.l.b16 %v1442
      %v1603 = vunpack.c.l.b16 %v1443
      %v1604 = vunpack.c.l.b16 %v1444
      %v1605 = vunpack.c.l.b16 %v1445
      %v1606 = vunpack.c.l.b16 %v1446
      %v1607 = vunpack.c.l.b16 %v1447
      %v1608 = vunpack.c.l.b16 %v1448
      %v1609 = vunpack.c.l.b16 %v1449
      %v1610 = vunpack.c.l.b16 %v1450
      %v1611 = vunpack.c.l.b16 %v1451
      %v1612 = vunpack.c.l.b16 %v1452
      %v1613 = vunpack.c.l.b16 %v1453
      %v1614 = vunpack.c.l.b16 %v1454
      %v1615 = vunpack.c.l.b16 %v1455
      %v1616 = vunpack.c.l.b16 %v1456
      %v1617 = vunpack.c.l.b16 %v1457
      %v1618 = vunpack.c.l.b16 %v1458
      %v1619 = vunpack.c.l.b16 %v1459
      %v1620 = vunpack.c.l.b16 %v1460
      %v1621 = vunpack.c.l.b16 %v1461
      %v1622 = vunpack.c.l.b16 %v1462
      %v1623 = vunpack.c.l.b16 %v1463
      %v1624 = vunpack.c.l.b16 %v1464
      %v1625 = vunpack.c.l.b16 %v1465
      %v1626 = vunpack.c.l.b16 %v1466
      %v1627 = vunpack.c.l.b16 %v1467
      %v1628 = vunpack.c.l.b16 %v1468
      %v1629 = vunpack.c.l.b16 %v1469
      %v1630 = vunpack.c.l.b16 %v1470
      %v1631 = vunpack.c.l.b16 %v1471
      %v1632 = vunpack.c.l.b16 %v1472
      %v1633 = vunpack.c.l.b16 %v1473
      %v1634 = vunpack.c.l.b16 %v1474
      %v1635 = vunpack.c.l.b16 %v1475
      %v1636 = vunpack.c.l.b16 %v1476
      %v1637 = vunpack.c.l.b16 %v1477
      %v1638 = vunpack.c.l.b16 %v1478
      %v1639 = vunpack.c.l.b16 %v1479
      %v1640 = vunpack.c.l.b16 %v1480
      %v1641 = vunpack.c.l.b16 %v1481
      %v1642 = vunpack.c.l.b16 %v1482
      %v1643 = vunpack.c.l.b16 %v1483
      %v1644 = vunpack.c.l.b16 %v1484
      %v1645 = vunpack.c.l.b16 %v1485
      %v1646 = vunpack.c.l.b16 %v1486
      %v1647 = vunpack.c.l.b16 %v1487
      %v1648 = vunpack.c.l.b16 %v1488
      %v1649 = vunpack.c.l.b16 %v1489
      %v1650 = vpack.c.b16 %v1603, %v1602
      %v1651 = vpack.c.b16 %v1605, %v1604
      %v1652 = vpack.c.b16 %v1607, %v1606
      %v1653 = vpack.c.b16 %v1609, %v1608
      %v1654 = vpack.c.b16 %v1611, %v1610
      %v1655 = vpack.c.b16 %v1613, %v1612
      %v1656 = vpack.c.b16 %v1615, %v1614
      %v1657 = vpack.c.b16 %v1617, %v1616
      %v1658 = vpack.c.b16 %v1619, %v1618
      %v1659 = vpack.c.b16 %v1621, %v1620
      %v1660 = vpack.c.b16 %v1623, %v1622
      %v1661 = vpack.c.b16 %v1625, %v1624
      %v1662 = vpack.c.b16 %v1627, %v1626
      %v1663 = vpack.c.b16 %v1629, %v1628
      %v1664 = vpack.c.b16 %v1631, %v1630
      %v1665 = vpack.c.b16 %v1633, %v1632
      %v1666 = vpack.c.b16 %v1635, %v1634
      %v1667 = vpack.c.b16 %v1637, %v1636
      %v1668 = vpack.c.b16 %v1639, %v1638
      %v1669 = vpack.c.b16 %v1641, %v1640
      %v1670 = vpack.c.b16 %v1643, %v1642
      %v1671 = vpack.c.b16 %v1645, %v1644
      %v1672 = vpack.c.b16 %v1647, %v1646
      %v1673 = vpack.c.b16 %v1649, %v1648
      %1698 = vmatpush.bf16.msra.mxu0 %v1657
      %1699 = vmatpush.bf16.msra.mxu0 %v1656
      %1700 = vmatpush.bf16.msra.mxu0 %v1655
      %1701 = vmatpush.bf16.msra.mxu0 %v1654
      %1702 = vmatpush.bf16.msra.mxu0 %v1653
      %1703 = vmatpush.bf16.msra.mxu0 %v1652
      %1704 = vmatpush.bf16.msra.mxu0 %v1651
      %1705 = vmatpush.bf16.msra.mxu0 %v1650
      %1706 = vmatmul.bf16.gmra.mxu0 %v1530
      %v1707 = vpop.f32.mrf.mxu0
      %v1708 = vadd.f32 0.0, %v1707
      %v1709 = vpop.f32.mrf.mxu0
      %v1710 = vadd.f32 0.0, %v1709
      %1711 = vmatmul.bf16.gmra.mxu0 %v1533
      %v1712 = vpop.f32.mrf.mxu0
      %v1713 = vadd.f32 0.0, %v1712
      %v1714 = vpop.f32.mrf.mxu0
      %v1715 = vadd.f32 0.0, %v1714
      %1716 = vmatmul.bf16.gmra.mxu0 %v1536
      %v1717 = vpop.f32.mrf.mxu0
      %v1718 = vadd.f32 0.0, %v1717
      %v1719 = vpop.f32.mrf.mxu0
      %v1720 = vadd.f32 0.0, %v1719
      %1721 = vmatmul.bf16.gmra.mxu0 %v1539
      %v1722 = vpop.f32.mrf.mxu0
      %v1723 = vadd.f32 0.0, %v1722
      %v1724 = vpop.f32.mrf.mxu0
      %v1725 = vadd.f32 0.0, %v1724
      %1726 = vdwg.mxu0
      %1727 = vmatpush.bf16.msra.mxu0 %v1665
      %1728 = vmatpush.bf16.msra.mxu0 %v1664
      %1729 = vmatpush.bf16.msra.mxu0 %v1663
      %1730 = vmatpush.bf16.msra.mxu0 %v1662
      %1731 = vmatpush.bf16.msra.mxu0 %v1661
      %1732 = vmatpush.bf16.msra.mxu0 %v1660
      %1733 = vmatpush.bf16.msra.mxu0 %v1659
      %1734 = vmatpush.bf16.msra.mxu0 %v1658
      %1735 = vmatmul.bf16.gmra.mxu0 %v1531
      %v1736 = vpop.f32.mrf.mxu0
      %v1737 = vadd.f32 %v1708, %v1736
      %v1738 = vpop.f32.mrf.mxu0
      %v1739 = vadd.f32 %v1710, %v1738
      %1740 = vmatmul.bf16.gmra.mxu0 %v1534
      %v1741 = vpop.f32.mrf.mxu0
      %v1742 = vadd.f32 %v1713, %v1741
      %v1743 = vpop.f32.mrf.mxu0
      %v1744 = vadd.f32 %v1715, %v1743
      %1745 = vmatmul.bf16.gmra.mxu0 %v1537
      %v1746 = vpop.f32.mrf.mxu0
      %v1747 = vadd.f32 %v1718, %v1746
      %v1748 = vpop.f32.mrf.mxu0
      %v1749 = vadd.f32 %v1720, %v1748
      %1750 = vmatmul.bf16.gmra.mxu0 %v1540
      %v1751 = vpop.f32.mrf.mxu0
      %v1752 = vadd.f32 %v1723, %v1751
      %v1753 = vpop.f32.mrf.mxu0
      %v1754 = vadd.f32 %v1725, %v1753
      %1755 = vdwg.mxu0
      %1756 = vmatpush.bf16.msra.mxu0 %v1673
      %1757 = vmatpush.bf16.msra.mxu0 %v1672
      %1758 = vmatpush.bf16.msra.mxu0 %v1671
      %1759 = vmatpush.bf16.msra.mxu0 %v1670
      %1760 = vmatpush.bf16.msra.mxu0 %v1669
      %1761 = vmatpush.bf16.msra.mxu0 %v1668
      %1762 = vmatpush.bf16.msra.mxu0 %v1667
      %1763 = vmatpush.bf16.msra.mxu0 %v1666
      %1764 = vmatmul.bf16.gmra.mxu0 %v1532
      %v1765 = vpop.f32.mrf.mxu0
      %v1766 = vadd.f32 %v1737, %v1765
      %v1767 = vpop.f32.mrf.mxu0
      %v1768 = vadd.f32 %v1739, %v1767
      %1769 = vmatmul.bf16.gmra.mxu0 %v1535
      %v1770 = vpop.f32.mrf.mxu0
      %v1771 = vadd.f32 %v1742, %v1770
      %v1772 = vpop.f32.mrf.mxu0
      %v1773 = vadd.f32 %v1744, %v1772
      %1774 = vmatmul.bf16.gmra.mxu0 %v1538
      %v1775 = vpop.f32.mrf.mxu0
      %v1776 = vadd.f32 %v1747, %v1775
      %v1777 = vpop.f32.mrf.mxu0
      %v1778 = vadd.f32 %v1749, %v1777
      %1779 = vmatmul.bf16.gmra.mxu0 %v1541
      %v1780 = vpop.f32.mrf.mxu0
      %v1781 = vadd.f32 %v1752, %v1780
      %v1782 = vpop.f32.mrf.mxu0
      %v1783 = vadd.f32 %v1754, %v1782
      %1784 = vdwg.mxu0
      %v1785 = vld [vmem:[#allocation4] sm:$0xff]
      %v1786 = vld [vmem:[#allocation4 + $0x8] sm:$0xff]
      %v1787 = vld [vmem:[#allocation4 + $0x10] sm:$0xff]
      %v1788 = vld [vmem:[#allocation4 + $0x18] sm:$0xff]
      %v1789 = vld [vmem:[#allocation4 + $0x20] sm:$0xff]
      %v1790 = vld [vmem:[#allocation4 + $0x28] sm:$0xff]
      %v1791 = vld [vmem:[#allocation4 + $0x30] sm:$0xff]
      %v1792 = vld [vmem:[#allocation4 + $0x38] sm:$0xff]
      %v1793 = vadd.f32 %v1785, %v1766
      %v1794 = vadd.f32 %v1786, %v1768
      %v1795 = vadd.f32 %v1787, %v1771
      %v1796 = vadd.f32 %v1788, %v1773
      %v1797 = vadd.f32 %v1789, %v1776
      %v1798 = vadd.f32 %v1790, %v1778
      %v1799 = vadd.f32 %v1791, %v1781
      %v1800 = vadd.f32 %v1792, %v1783
      %1801 = vst [vmem:[#allocation4] sm:$0xff] %v1793
      %1802 = vst [vmem:[#allocation4 + $0x8] sm:$0xff] %v1794
      %1803 = vst [vmem:[#allocation4 + $0x10] sm:$0xff] %v1795
      %1804 = vst [vmem:[#allocation4 + $0x18] sm:$0xff] %v1796
      %1805 = vst [vmem:[#allocation4 + $0x20] sm:$0xff] %v1797
      %1806 = vst [vmem:[#allocation4 + $0x28] sm:$0xff] %v1798
      %1807 = vst [vmem:[#allocation4 + $0x30] sm:$0xff] %v1799
      %1808 = vst [vmem:[#allocation4 + $0x38] sm:$0xff] %v1800
      %v1809 = vld [vmem:[#allocation4] sm:$0xff]
      %v1810 = vld [vmem:[#allocation4 + $0x8] sm:$0xff]
      %v1811 = vld [vmem:[#allocation4 + $0x10] sm:$0xff]
      %v1812 = vld [vmem:[#allocation4 + $0x18] sm:$0xff]
      %v1813 = vld [vmem:[#allocation4 + $0x20] sm:$0xff]
      %v1814 = vld [vmem:[#allocation4 + $0x28] sm:$0xff]
      %v1815 = vld [vmem:[#allocation4 + $0x30] sm:$0xff]
      %v1816 = vld [vmem:[#allocation4 + $0x38] sm:$0xff]
      %v1817 = vld [vmem:[%s3] sm:$0x1]
      %v1819 = vperm.slane %v1817, 0
      %v1821 = vmul.f32 %v1809, %v1819
      %v1822 = vmul.f32 %v1810, %v1819
      %v1823 = vmul.f32 %v1811, %v1819
      %v1824 = vmul.f32 %v1812, %v1819
      %v1825 = vmul.f32 %v1813, %v1819
      %v1826 = vmul.f32 %v1814, %v1819
      %v1827 = vmul.f32 %v1815, %v1819
      %v1828 = vmul.f32 %v1816, %v1819
      %v1829 = vld [vmem:[%s4] sm:$0x1]
      %v1831 = vperm.slane %v1829, 0
      %v1833 = vadd.f32 %v1821, %v1831
      %v1834 = vadd.f32 %v1822, %v1831
      %v1835 = vadd.f32 %v1823, %v1831
      %v1836 = vadd.f32 %v1824, %v1831
      %v1837 = vadd.f32 %v1825, %v1831
      %v1838 = vadd.f32 %v1826, %v1831
      %v1839 = vadd.f32 %v1827, %v1831
      %v1840 = vadd.f32 %v1828, %v1831
      %v1841 = vmax.f32 %v1833, 0.0
      %v1842 = vmax.f32 %v1834, 0.0
      %v1843 = vmax.f32 %v1835, 0.0
      %v1844 = vmax.f32 %v1836, 0.0
      %v1845 = vmax.f32 %v1837, 0.0
      %v1846 = vmax.f32 %v1838, 0.0
      %v1847 = vmax.f32 %v1839, 0.0
      %v1848 = vmax.f32 %v1840, 0.0
      %v1849 = vpack.c.bf16 %v1841, %v1841
      %v1850 = vpack.c.bf16 %v1842, %v1842
      %v1851 = vpack.c.bf16 %v1843, %v1843
      %v1852 = vpack.c.bf16 %v1844, %v1844
      %v1853 = vpack.c.bf16 %v1845, %v1845
      %v1854 = vpack.c.bf16 %v1846, %v1846
      %v1855 = vpack.c.bf16 %v1847, %v1847
      %v1856 = vpack.c.bf16 %v1848, %v1848
      %1857 = vst [vmem:[%s244] sm:$0xf] %v1849
      %1858 = vst [vmem:[%s244 + $0x4] sm:$0xf] %v1850
      %1859 = vst [vmem:[%s244 + $0x8] sm:$0xf] %v1851
      %1860 = vst [vmem:[%s244 + $0xc] sm:$0xf] %v1852
      %1861 = vst [vmem:[%s244 + $0x10] sm:$0xf] %v1853
      %1862 = vst [vmem:[%s244 + $0x14] sm:$0xf] %v1854
      %1863 = vst [vmem:[%s244 + $0x18] sm:$0xf] %v1855
      %1864 = vst [vmem:[%s244 + $0x1c] sm:$0xf] %v1856
      %p1865 = scmp.lt.s32.totalorder %s16, 1
      %s1866 = scalar_select %p1865, %s16, 1
      %s1867 = smul.addr %s1866, 8
      %s1868 = smul.addr %s1867, 4
      %s1869 = scalar_lea.vmem %s5, %s1868
      // Predicated region
      $region41: #{bottleneck_forward.5} parent=39 // pred_check
        %p1870 = pneg %p149
      $region42: #{bottleneck_forward.5} parent=39 // pred_check_branch
        %1872 = sbr.rel (%p1870) target = $region44
      $region43: #{bottleneck_forward.5} parent=39 // pred_region
        _
      $region44: #{bottleneck_forward.5} parent=39 // pred_fallthru
        _
    $region40: #{bottleneck_forward.5} parent=5 // pred_fallthru
      _
    %p1873 = scmp.le.s32.totalorder 2, %s11
    // Predicated region
    $region45: #{bottleneck_forward.5} parent=5 // pred_check
      %p1874 = pneg %p1873
    $region46: #{bottleneck_forward.5} parent=5 // pred_check_branch
      %1876 = sbr.rel (%p1874) target = $region48
    $region47: #{bottleneck_forward.5} parent=5 // pred_region
      %s1877 = ssub.s32 %s11, 2
      // Predicated region
      $region49: #{bottleneck_forward.5} parent=47 // pred_check
        %p1878 = pneg %p155
      $region50: #{bottleneck_forward.5} parent=47 // pred_check_branch
        %1880 = sbr.rel (%p1878) target = $region52
      $region51: #{bottleneck_forward.5} parent=47 // pred_region
        %p1881 = scmp.lt.s32.totalorder %s17, 1
        %s1882 = scalar_select %p1881, %s17, 1
        %s1883 = smul.addr %s1882, 8
        %s1884 = smul.addr %s1883, 4
        %s1885 = scalar_lea.vmem %s5, %s1884
      $region52: #{bottleneck_forward.5} parent=47 // pred_fallthru
        _
    $region48: #{bottleneck_forward.5} parent=5 // pred_fallthru
      _
  $region6: #{bottleneck_forward.5} parent=0 // loop_footer
    %s15 = sadd.s32 1, %s11
  $region7: #{bottleneck_forward.5} parent=0 // loop_footer_branch
    %10 = sbr.rel target = $region3
  $region8: #{bottleneck_forward.5} parent=0 // loop_exit
    _

// kernel: bottleneck_forward.6
$region0: #{bottleneck_forward.6}
  #allocation0 [shape = 'u32[]', space=smem, size = 0x4, offset = 0x4, fixed_abs, tag = 'smem constant byte address 0x4 - core index']
  #allocation1 [shape = 'u32[72,128]{1,0:T(1,128)}', space=vmem, size = 0x9000, scoped, tag = 'internal scratch']
  %s0 = inlined_call_operand.vmem [shape: bf16[128,128], index: 0, kind: input, shape index: {}]
  %s1 = inlined_call_operand.vmem [shape: bf16[128,128], index: 1, kind: input, shape index: {}]
  %s2 = inlined_call_operand.vmem [shape: f32[1,128], index: 2, kind: input, shape index: {}]
  %s3 = inlined_call_operand.vmem [shape: f32[1,128], index: 3, kind: input, shape index: {}]
  %s4 = inlined_call_operand.vmem [shape: bf16[128,128], index: 4, kind: output, shape index: {}]
  %s5 = sld [smem:[#allocation0]]
  $region26: #{bottleneck_forward.6} parent=0
    _
  %s7 = ssub.s32 1, %s5
  %s8 = scalar_select 0, %s7, %s5
  // Predicated region
  $region2: #{bottleneck_forward.6} parent=0 // pred_check
    _
  $region3: #{bottleneck_forward.6} parent=0 // pred_check_branch
    %10 = sbr.rel (0) target = $region5
  $region4: #{bottleneck_forward.6} parent=0 // pred_region
    _
  $region5: #{bottleneck_forward.6} parent=0 // pred_fallthru
    _
  // Predicated region
  $region6: #{bottleneck_forward.6} parent=0 // pred_check
    _
  $region7: #{bottleneck_forward.6} parent=0 // pred_check_branch
    %12 = sbr.rel (0) target = $region9
  $region8: #{bottleneck_forward.6} parent=0 // pred_region
    _
  $region9: #{bottleneck_forward.6} parent=0 // pred_fallthru
    _
  // Predicated region
  $region10: #{bottleneck_forward.6} parent=0 // pred_check
    _
  $region11: #{bottleneck_forward.6} parent=0 // pred_check_branch
    %14 = sbr.rel (0) target = $region13
  $region12: #{bottleneck_forward.6} parent=0 // pred_region
    _
  $region13: #{bottleneck_forward.6} parent=0 // pred_fallthru
    _
  // Predicated region
  $region14: #{bottleneck_forward.6} parent=0 // pred_check
    _
  $region15: #{bottleneck_forward.6} parent=0 // pred_check_branch
    %16 = sbr.rel (0) target = $region17
  $region16: #{bottleneck_forward.6} parent=0 // pred_region
    _
  $region17: #{bottleneck_forward.6} parent=0 // pred_fallthru
    _
  %v17 = vld [vmem:[%s0] sm:$0xf]
  %v18 = vld [vmem:[%s0 + $0x4] sm:$0xf]
  %v19 = vld [vmem:[%s0 + $0x8] sm:$0xf]
  %v20 = vld [vmem:[%s0 + $0xc] sm:$0xf]
  %v21 = vld [vmem:[%s0 + $0x10] sm:$0xf]
  %v22 = vld [vmem:[%s0 + $0x14] sm:$0xf]
  %v23 = vld [vmem:[%s0 + $0x18] sm:$0xf]
  %v24 = vld [vmem:[%s0 + $0x1c] sm:$0xf]
  %v25 = vld [vmem:[%s0 + $0x20] sm:$0xf]
  %v26 = vld [vmem:[%s0 + $0x24] sm:$0xf]
  %v27 = vld [vmem:[%s0 + $0x28] sm:$0xf]
  %v28 = vld [vmem:[%s0 + $0x2c] sm:$0xf]
  %v29 = vld [vmem:[%s0 + $0x30] sm:$0xf]
  %v30 = vld [vmem:[%s0 + $0x34] sm:$0xf]
  %v31 = vld [vmem:[%s0 + $0x38] sm:$0xf]
  %v32 = vld [vmem:[%s0 + $0x3c] sm:$0xf]
  %v33 = vld [vmem:[%s1] sm:$0xf]
  %v34 = vld [vmem:[%s1 + $0x4] sm:$0xf]
  %v35 = vld [vmem:[%s1 + $0x8] sm:$0xf]
  %v36 = vld [vmem:[%s1 + $0xc] sm:$0xf]
  %v37 = vld [vmem:[%s1 + $0x10] sm:$0xf]
  %v38 = vld [vmem:[%s1 + $0x14] sm:$0xf]
  %v39 = vld [vmem:[%s1 + $0x18] sm:$0xf]
  %v40 = vld [vmem:[%s1 + $0x1c] sm:$0xf]
  %v41 = vld [vmem:[%s1 + $0x20] sm:$0xf]
  %v42 = vld [vmem:[%s1 + $0x24] sm:$0xf]
  %v43 = vld [vmem:[%s1 + $0x28] sm:$0xf]
  %v44 = vld [vmem:[%s1 + $0x2c] sm:$0xf]
  %v45 = vld [vmem:[%s1 + $0x30] sm:$0xf]
  %v46 = vld [vmem:[%s1 + $0x34] sm:$0xf]
  %v47 = vld [vmem:[%s1 + $0x38] sm:$0xf]
  %v48 = vld [vmem:[%s1 + $0x3c] sm:$0xf]
  %v65 = vunpack.c.l.b16 %v17
  %v66 = vunpack.c.l.b16 %v18
  %v67 = vunpack.c.l.b16 %v19
  %v68 = vunpack.c.l.b16 %v20
  %v69 = vunpack.c.l.b16 %v21
  %v70 = vunpack.c.l.b16 %v22
  %v71 = vunpack.c.l.b16 %v23
  %v72 = vunpack.c.l.b16 %v24
  %v73 = vunpack.c.l.b16 %v25
  %v74 = vunpack.c.l.b16 %v26
  %v75 = vunpack.c.l.b16 %v27
  %v76 = vunpack.c.l.b16 %v28
  %v77 = vunpack.c.l.b16 %v29
  %v78 = vunpack.c.l.b16 %v30
  %v79 = vunpack.c.l.b16 %v31
  %v80 = vunpack.c.l.b16 %v32
  %v81 = vpack.c.b16 %v66, %v65
  %v82 = vpack.c.b16 %v68, %v67
  %v83 = vpack.c.b16 %v70, %v69
  %v84 = vpack.c.b16 %v72, %v71
  %v85 = vpack.c.b16 %v74, %v73
  %v86 = vpack.c.b16 %v76, %v75
  %v87 = vpack.c.b16 %v78, %v77
  %v88 = vpack.c.b16 %v80, %v79
  %v113 = vunpack.c.l.b16 %v33
  %v114 = vunpack.c.l.b16 %v34
  %v115 = vunpack.c.l.b16 %v35
  %v116 = vunpack.c.l.b16 %v36
  %v117 = vunpack.c.l.b16 %v37
  %v118 = vunpack.c.l.b16 %v38
  %v119 = vunpack.c.l.b16 %v39
  %v120 = vunpack.c.l.b16 %v40
  %v121 = vunpack.c.l.b16 %v41
  %v122 = vunpack.c.l.b16 %v42
  %v123 = vunpack.c.l.b16 %v43
  %v124 = vunpack.c.l.b16 %v44
  %v125 = vunpack.c.l.b16 %v45
  %v126 = vunpack.c.l.b16 %v46
  %v127 = vunpack.c.l.b16 %v47
  %v128 = vunpack.c.l.b16 %v48
  %v129 = vpack.c.b16 %v114, %v113
  %v130 = vpack.c.b16 %v116, %v115
  %v131 = vpack.c.b16 %v118, %v117
  %v132 = vpack.c.b16 %v120, %v119
  %v133 = vpack.c.b16 %v122, %v121
  %v134 = vpack.c.b16 %v124, %v123
  %v135 = vpack.c.b16 %v126, %v125
  %v136 = vpack.c.b16 %v128, %v127
  %145 = vmatpush.bf16.msra.mxu0 %v136
  %146 = vmatpush.bf16.msra.mxu0 %v135
  %147 = vmatpush.bf16.msra.mxu0 %v134
  %148 = vmatpush.bf16.msra.mxu0 %v133
  %149 = vmatpush.bf16.msra.mxu0 %v132
  %150 = vmatpush.bf16.msra.mxu0 %v131
  %151 = vmatpush.bf16.msra.mxu0 %v130
  %152 = vmatpush.bf16.msra.mxu0 %v129
  %153 = vmatmul.bf16.gmra.mxu0 %v81
  %v154 = vpop.f32.mrf.mxu0
  %v155 = vadd.f32 0.0, %v154
  %v156 = vpop.f32.mrf.mxu0
  %v157 = vadd.f32 0.0, %v156
  %158 = vmatmul.bf16.gmra.mxu0 %v82
  %v159 = vpop.f32.mrf.mxu0
  %v160 = vadd.f32 0.0, %v159
  %v161 = vpop.f32.mrf.mxu0
  %v162 = vadd.f32 0.0, %v161
  %163 = vmatmul.bf16.gmra.mxu0 %v83
  %v164 = vpop.f32.mrf.mxu0
  %v165 = vadd.f32 0.0, %v164
  %v166 = vpop.f32.mrf.mxu0
  %v167 = vadd.f32 0.0, %v166
  %168 = vmatmul.bf16.gmra.mxu0 %v84
  %v169 = vpop.f32.mrf.mxu0
  %v170 = vadd.f32 0.0, %v169
  %v171 = vpop.f32.mrf.mxu0
  %v172 = vadd.f32 0.0, %v171
  %173 = vmatmul.bf16.gmra.mxu0 %v85
  %v174 = vpop.f32.mrf.mxu0
  %v175 = vadd.f32 0.0, %v174
  %v176 = vpop.f32.mrf.mxu0
  %v177 = vadd.f32 0.0, %v176
  %178 = vmatmul.bf16.gmra.mxu0 %v86
  %v179 = vpop.f32.mrf.mxu0
  %v180 = vadd.f32 0.0, %v179
  %v181 = vpop.f32.mrf.mxu0
  %v182 = vadd.f32 0.0, %v181
  %183 = vmatmul.bf16.gmra.mxu0 %v87
  %v184 = vpop.f32.mrf.mxu0
  %v185 = vadd.f32 0.0, %v184
  %v186 = vpop.f32.mrf.mxu0
  %v187 = vadd.f32 0.0, %v186
  %188 = vmatmul.bf16.gmra.mxu0 %v88
  %v189 = vpop.f32.mrf.mxu0
  %v190 = vadd.f32 0.0, %v189
  %v191 = vpop.f32.mrf.mxu0
  %v192 = vadd.f32 0.0, %v191
  %193 = vdwg.mxu0
  %v194 = vld [vmem:[%s2] sm:$0x1]
  %v196 = vperm.slane %v194, 0
  %v198 = vmul.f32 %v155, %v196
  %v199 = vmul.f32 %v157, %v196
  %v200 = vmul.f32 %v160, %v196
  %v201 = vmul.f32 %v162, %v196
  %v202 = vmul.f32 %v165, %v196
  %v203 = vmul.f32 %v167, %v196
  %v204 = vmul.f32 %v170, %v196
  %v205 = vmul.f32 %v172, %v196
  %v206 = vmul.f32 %v175, %v196
  %v207 = vmul.f32 %v177, %v196
  %v208 = vmul.f32 %v180, %v196
  %v209 = vmul.f32 %v182, %v196
  %v210 = vmul.f32 %v185, %v196
  %v211 = vmul.f32 %v187, %v196
  %v212 = vmul.f32 %v190, %v196
  %v213 = vmul.f32 %v192, %v196
  %v214 = vld [vmem:[%s3] sm:$0x1]
  %v216 = vperm.slane %v214, 0
  %v218 = vadd.f32 %v198, %v216
  %v219 = vadd.f32 %v199, %v216
  %v220 = vadd.f32 %v200, %v216
  %v221 = vadd.f32 %v201, %v216
  %v222 = vadd.f32 %v202, %v216
  %v223 = vadd.f32 %v203, %v216
  %v224 = vadd.f32 %v204, %v216
  %v225 = vadd.f32 %v205, %v216
  %v226 = vadd.f32 %v206, %v216
  %v227 = vadd.f32 %v207, %v216
  %v228 = vadd.f32 %v208, %v216
  %v229 = vadd.f32 %v209, %v216
  %v230 = vadd.f32 %v210, %v216
  %v231 = vadd.f32 %v211, %v216
  %v232 = vadd.f32 %v212, %v216
  %v233 = vadd.f32 %v213, %v216
  %v234 = vpack.c.bf16 %v218, %v218
  %v235 = vpack.c.bf16 %v219, %v219
  %v236 = vpack.c.bf16 %v220, %v220
  %v237 = vpack.c.bf16 %v221, %v221
  %v238 = vpack.c.bf16 %v222, %v222
  %v239 = vpack.c.bf16 %v223, %v223
  %v240 = vpack.c.bf16 %v224, %v224
  %v241 = vpack.c.bf16 %v225, %v225
  %v242 = vpack.c.bf16 %v226, %v226
  %v243 = vpack.c.bf16 %v227, %v227
  %v244 = vpack.c.bf16 %v228, %v228
  %v245 = vpack.c.bf16 %v229, %v229
  %v246 = vpack.c.bf16 %v230, %v230
  %v247 = vpack.c.bf16 %v231, %v231
  %v248 = vpack.c.bf16 %v232, %v232
  %v249 = vpack.c.bf16 %v233, %v233
  %250 = vst [vmem:[%s4] sm:$0xf] %v234
  %251 = vst [vmem:[%s4 + $0x4] sm:$0xf] %v235
  %252 = vst [vmem:[%s4 + $0x8] sm:$0xf] %v236
  %253 = vst [vmem:[%s4 + $0xc] sm:$0xf] %v237
  %254 = vst [vmem:[%s4 + $0x10] sm:$0xf] %v238
  %255 = vst [vmem:[%s4 + $0x14] sm:$0xf] %v239
  %256 = vst [vmem:[%s4 + $0x18] sm:$0xf] %v240
  %257 = vst [vmem:[%s4 + $0x1c] sm:$0xf] %v241
  %258 = vst [vmem:[%s4 + $0x20] sm:$0xf] %v242
  %259 = vst [vmem:[%s4 + $0x24] sm:$0xf] %v243
  %260 = vst [vmem:[%s4 + $0x28] sm:$0xf] %v244
  %261 = vst [vmem:[%s4 + $0x2c] sm:$0xf] %v245
  %262 = vst [vmem:[%s4 + $0x30] sm:$0xf] %v246
  %263 = vst [vmem:[%s4 + $0x34] sm:$0xf] %v247
  %264 = vst [vmem:[%s4 + $0x38] sm:$0xf] %v248
  %265 = vst [vmem:[%s4 + $0x3c] sm:$0xf] %v249
  // Predicated region
  $region18: #{bottleneck_forward.6} parent=0 // pred_check
    _
  $region19: #{bottleneck_forward.6} parent=0 // pred_check_branch
    %267 = sbr.rel (0) target = $region21
  $region20: #{bottleneck_forward.6} parent=0 // pred_region
    _
  $region21: #{bottleneck_forward.6} parent=0 // pred_fallthru
    _
  // Predicated region
  $region22: #{bottleneck_forward.6} parent=0 // pred_check
    _
  $region23: #{bottleneck_forward.6} parent=0 // pred_check_branch
    %269 = sbr.rel (0) target = $region25
  $region24: #{bottleneck_forward.6} parent=0 // pred_region
    _
  $region25: #{bottleneck_forward.6} parent=0 // pred_fallthru
    _

// kernel: bottleneck_forward.7
$region0: #{bottleneck_forward.7}
  #allocation0 [shape = 'u32[]', space=smem, size = 0x4, offset = 0x4, fixed_abs, tag = 'smem constant byte address 0x4 - core index']
  #allocation1 [shape = 'u32[72,128]{1,0:T(1,128)}', space=vmem, size = 0x9000, scoped, tag = 'internal scratch']
  %s0 = inlined_call_operand.vmem [shape: bf16[128,128], index: 0, kind: input, shape index: {}]
  %s1 = inlined_call_operand.vmem [shape: bf16[128,128], index: 1, kind: input, shape index: {}]
  %s2 = inlined_call_operand.vmem [shape: f32[1,128], index: 2, kind: input, shape index: {}]
  %s3 = inlined_call_operand.vmem [shape: f32[1,128], index: 3, kind: input, shape index: {}]
  %s4 = inlined_call_operand.vmem [shape: bf16[128,128], index: 4, kind: input, shape index: {}]
  %s5 = inlined_call_operand.vmem [shape: f32[128,128], index: 5, kind: output, shape index: {}]
  %s6 = sld [smem:[#allocation0]]
  $region30: #{bottleneck_forward.7} parent=0
    _
  %s8 = ssub.s32 1, %s6
  %s9 = scalar_select 0, %s8, %s6
  // Predicated region
  $region2: #{bottleneck_forward.7} parent=0 // pred_check
    _
  $region3: #{bottleneck_forward.7} parent=0 // pred_check_branch
    %11 = sbr.rel (0) target = $region5
  $region4: #{bottleneck_forward.7} parent=0 // pred_region
    _
  $region5: #{bottleneck_forward.7} parent=0 // pred_fallthru
    _
  // Predicated region
  $region6: #{bottleneck_forward.7} parent=0 // pred_check
    _
  $region7: #{bottleneck_forward.7} parent=0 // pred_check_branch
    %13 = sbr.rel (0) target = $region9
  $region8: #{bottleneck_forward.7} parent=0 // pred_region
    _
  $region9: #{bottleneck_forward.7} parent=0 // pred_fallthru
    _
  // Predicated region
  $region10: #{bottleneck_forward.7} parent=0 // pred_check
    _
  $region11: #{bottleneck_forward.7} parent=0 // pred_check_branch
    %15 = sbr.rel (0) target = $region13
  $region12: #{bottleneck_forward.7} parent=0 // pred_region
    _
  $region13: #{bottleneck_forward.7} parent=0 // pred_fallthru
    _
  // Predicated region
  $region14: #{bottleneck_forward.7} parent=0 // pred_check
    _
  $region15: #{bottleneck_forward.7} parent=0 // pred_check_branch
    %17 = sbr.rel (0) target = $region17
  $region16: #{bottleneck_forward.7} parent=0 // pred_region
    _
  $region17: #{bottleneck_forward.7} parent=0 // pred_fallthru
    _
  // Predicated region
  $region18: #{bottleneck_forward.7} parent=0 // pred_check
    _
  $region19: #{bottleneck_forward.7} parent=0 // pred_check_branch
    %19 = sbr.rel (0) target = $region21
  $region20: #{bottleneck_forward.7} parent=0 // pred_region
    _
  $region21: #{bottleneck_forward.7} parent=0 // pred_fallthru
    _
  %v20 = vld [vmem:[%s0] sm:$0xf]
  %v21 = vld [vmem:[%s0 + $0x4] sm:$0xf]
  %v22 = vld [vmem:[%s0 + $0x8] sm:$0xf]
  %v23 = vld [vmem:[%s0 + $0xc] sm:$0xf]
  %v24 = vld [vmem:[%s0 + $0x10] sm:$0xf]
  %v25 = vld [vmem:[%s0 + $0x14] sm:$0xf]
  %v26 = vld [vmem:[%s0 + $0x18] sm:$0xf]
  %v27 = vld [vmem:[%s0 + $0x1c] sm:$0xf]
  %v28 = vld [vmem:[%s0 + $0x20] sm:$0xf]
  %v29 = vld [vmem:[%s0 + $0x24] sm:$0xf]
  %v30 = vld [vmem:[%s0 + $0x28] sm:$0xf]
  %v31 = vld [vmem:[%s0 + $0x2c] sm:$0xf]
  %v32 = vld [vmem:[%s0 + $0x30] sm:$0xf]
  %v33 = vld [vmem:[%s0 + $0x34] sm:$0xf]
  %v34 = vld [vmem:[%s0 + $0x38] sm:$0xf]
  %v35 = vld [vmem:[%s0 + $0x3c] sm:$0xf]
  %v36 = vld [vmem:[%s1] sm:$0xf]
  %v37 = vld [vmem:[%s1 + $0x4] sm:$0xf]
  %v38 = vld [vmem:[%s1 + $0x8] sm:$0xf]
  %v39 = vld [vmem:[%s1 + $0xc] sm:$0xf]
  %v40 = vld [vmem:[%s1 + $0x10] sm:$0xf]
  %v41 = vld [vmem:[%s1 + $0x14] sm:$0xf]
  %v42 = vld [vmem:[%s1 + $0x18] sm:$0xf]
  %v43 = vld [vmem:[%s1 + $0x1c] sm:$0xf]
  %v44 = vld [vmem:[%s1 + $0x20] sm:$0xf]
  %v45 = vld [vmem:[%s1 + $0x24] sm:$0xf]
  %v46 = vld [vmem:[%s1 + $0x28] sm:$0xf]
  %v47 = vld [vmem:[%s1 + $0x2c] sm:$0xf]
  %v48 = vld [vmem:[%s1 + $0x30] sm:$0xf]
  %v49 = vld [vmem:[%s1 + $0x34] sm:$0xf]
  %v50 = vld [vmem:[%s1 + $0x38] sm:$0xf]
  %v51 = vld [vmem:[%s1 + $0x3c] sm:$0xf]
  %v68 = vunpack.c.l.b16 %v20
  %v69 = vunpack.c.l.b16 %v21
  %v70 = vunpack.c.l.b16 %v22
  %v71 = vunpack.c.l.b16 %v23
  %v72 = vunpack.c.l.b16 %v24
  %v73 = vunpack.c.l.b16 %v25
  %v74 = vunpack.c.l.b16 %v26
  %v75 = vunpack.c.l.b16 %v27
  %v76 = vunpack.c.l.b16 %v28
  %v77 = vunpack.c.l.b16 %v29
  %v78 = vunpack.c.l.b16 %v30
  %v79 = vunpack.c.l.b16 %v31
  %v80 = vunpack.c.l.b16 %v32
  %v81 = vunpack.c.l.b16 %v33
  %v82 = vunpack.c.l.b16 %v34
  %v83 = vunpack.c.l.b16 %v35
  %v84 = vpack.c.b16 %v69, %v68
  %v85 = vpack.c.b16 %v71, %v70
  %v86 = vpack.c.b16 %v73, %v72
  %v87 = vpack.c.b16 %v75, %v74
  %v88 = vpack.c.b16 %v77, %v76
  %v89 = vpack.c.b16 %v79, %v78
  %v90 = vpack.c.b16 %v81, %v80
  %v91 = vpack.c.b16 %v83, %v82
  %v116 = vunpack.c.l.b16 %v36
  %v117 = vunpack.c.l.b16 %v37
  %v118 = vunpack.c.l.b16 %v38
  %v119 = vunpack.c.l.b16 %v39
  %v120 = vunpack.c.l.b16 %v40
  %v121 = vunpack.c.l.b16 %v41
  %v122 = vunpack.c.l.b16 %v42
  %v123 = vunpack.c.l.b16 %v43
  %v124 = vunpack.c.l.b16 %v44
  %v125 = vunpack.c.l.b16 %v45
  %v126 = vunpack.c.l.b16 %v46
  %v127 = vunpack.c.l.b16 %v47
  %v128 = vunpack.c.l.b16 %v48
  %v129 = vunpack.c.l.b16 %v49
  %v130 = vunpack.c.l.b16 %v50
  %v131 = vunpack.c.l.b16 %v51
  %v132 = vpack.c.b16 %v117, %v116
  %v133 = vpack.c.b16 %v119, %v118
  %v134 = vpack.c.b16 %v121, %v120
  %v135 = vpack.c.b16 %v123, %v122
  %v136 = vpack.c.b16 %v125, %v124
  %v137 = vpack.c.b16 %v127, %v126
  %v138 = vpack.c.b16 %v129, %v128
  %v139 = vpack.c.b16 %v131, %v130
  %148 = vmatpush.bf16.msra.mxu0 %v139
  %149 = vmatpush.bf16.msra.mxu0 %v138
  %150 = vmatpush.bf16.msra.mxu0 %v137
  %151 = vmatpush.bf16.msra.mxu0 %v136
  %152 = vmatpush.bf16.msra.mxu0 %v135
  %153 = vmatpush.bf16.msra.mxu0 %v134
  %154 = vmatpush.bf16.msra.mxu0 %v133
  %155 = vmatpush.bf16.msra.mxu0 %v132
  %156 = vmatmul.bf16.gmra.mxu0 %v84
  %v157 = vpop.f32.mrf.mxu0
  %v158 = vadd.f32 0.0, %v157
  %v159 = vpop.f32.mrf.mxu0
  %v160 = vadd.f32 0.0, %v159
  %161 = vmatmul.bf16.gmra.mxu0 %v85
  %v162 = vpop.f32.mrf.mxu0
  %v163 = vadd.f32 0.0, %v162
  %v164 = vpop.f32.mrf.mxu0
  %v165 = vadd.f32 0.0, %v164
  %166 = vmatmul.bf16.gmra.mxu0 %v86
  %v167 = vpop.f32.mrf.mxu0
  %v168 = vadd.f32 0.0, %v167
  %v169 = vpop.f32.mrf.mxu0
  %v170 = vadd.f32 0.0, %v169
  %171 = vmatmul.bf16.gmra.mxu0 %v87
  %v172 = vpop.f32.mrf.mxu0
  %v173 = vadd.f32 0.0, %v172
  %v174 = vpop.f32.mrf.mxu0
  %v175 = vadd.f32 0.0, %v174
  %176 = vmatmul.bf16.gmra.mxu0 %v88
  %v177 = vpop.f32.mrf.mxu0
  %v178 = vadd.f32 0.0, %v177
  %v179 = vpop.f32.mrf.mxu0
  %v180 = vadd.f32 0.0, %v179
  %181 = vmatmul.bf16.gmra.mxu0 %v89
  %v182 = vpop.f32.mrf.mxu0
  %v183 = vadd.f32 0.0, %v182
  %v184 = vpop.f32.mrf.mxu0
  %v185 = vadd.f32 0.0, %v184
  %186 = vmatmul.bf16.gmra.mxu0 %v90
  %v187 = vpop.f32.mrf.mxu0
  %v188 = vadd.f32 0.0, %v187
  %v189 = vpop.f32.mrf.mxu0
  %v190 = vadd.f32 0.0, %v189
  %191 = vmatmul.bf16.gmra.mxu0 %v91
  %v192 = vpop.f32.mrf.mxu0
  %v193 = vadd.f32 0.0, %v192
  %v194 = vpop.f32.mrf.mxu0
  %v195 = vadd.f32 0.0, %v194
  %196 = vdwg.mxu0
  %v197 = vld [vmem:[%s2] sm:$0x1]
  %v199 = vperm.slane %v197, 0
  %v201 = vmul.f32 %v158, %v199
  %v202 = vmul.f32 %v160, %v199
  %v203 = vmul.f32 %v163, %v199
  %v204 = vmul.f32 %v165, %v199
  %v205 = vmul.f32 %v168, %v199
  %v206 = vmul.f32 %v170, %v199
  %v207 = vmul.f32 %v173, %v199
  %v208 = vmul.f32 %v175, %v199
  %v209 = vmul.f32 %v178, %v199
  %v210 = vmul.f32 %v180, %v199
  %v211 = vmul.f32 %v183, %v199
  %v212 = vmul.f32 %v185, %v199
  %v213 = vmul.f32 %v188, %v199
  %v214 = vmul.f32 %v190, %v199
  %v215 = vmul.f32 %v193, %v199
  %v216 = vmul.f32 %v195, %v199
  %v217 = vld [vmem:[%s3] sm:$0x1]
  %v219 = vperm.slane %v217, 0
  %v221 = vadd.f32 %v201, %v219
  %v222 = vadd.f32 %v202, %v219
  %v223 = vadd.f32 %v203, %v219
  %v224 = vadd.f32 %v204, %v219
  %v225 = vadd.f32 %v205, %v219
  %v226 = vadd.f32 %v206, %v219
  %v227 = vadd.f32 %v207, %v219
  %v228 = vadd.f32 %v208, %v219
  %v229 = vadd.f32 %v209, %v219
  %v230 = vadd.f32 %v210, %v219
  %v231 = vadd.f32 %v211, %v219
  %v232 = vadd.f32 %v212, %v219
  %v233 = vadd.f32 %v213, %v219
  %v234 = vadd.f32 %v214, %v219
  %v235 = vadd.f32 %v215, %v219
  %v236 = vadd.f32 %v216, %v219
  %v237 = vld [vmem:[%s4] sm:$0xf]
  %v238 = vld [vmem:[%s4 + $0x4] sm:$0xf]
  %v239 = vld [vmem:[%s4 + $0x8] sm:$0xf]
  %v240 = vld [vmem:[%s4 + $0xc] sm:$0xf]
  %v241 = vld [vmem:[%s4 + $0x10] sm:$0xf]
  %v242 = vld [vmem:[%s4 + $0x14] sm:$0xf]
  %v243 = vld [vmem:[%s4 + $0x18] sm:$0xf]
  %v244 = vld [vmem:[%s4 + $0x1c] sm:$0xf]
  %v245 = vld [vmem:[%s4 + $0x20] sm:$0xf]
  %v246 = vld [vmem:[%s4 + $0x24] sm:$0xf]
  %v247 = vld [vmem:[%s4 + $0x28] sm:$0xf]
  %v248 = vld [vmem:[%s4 + $0x2c] sm:$0xf]
  %v249 = vld [vmem:[%s4 + $0x30] sm:$0xf]
  %v250 = vld [vmem:[%s4 + $0x34] sm:$0xf]
  %v251 = vld [vmem:[%s4 + $0x38] sm:$0xf]
  %v252 = vld [vmem:[%s4 + $0x3c] sm:$0xf]
  %v253 = vunpack.c.l.bf16 %v237
  %v254 = vunpack.c.l.bf16 %v238
  %v255 = vunpack.c.l.bf16 %v239
  %v256 = vunpack.c.l.bf16 %v240
  %v257 = vunpack.c.l.bf16 %v241
  %v258 = vunpack.c.l.bf16 %v242
  %v259 = vunpack.c.l.bf16 %v243
  %v260 = vunpack.c.l.bf16 %v244
  %v261 = vunpack.c.l.bf16 %v245
  %v262 = vunpack.c.l.bf16 %v246
  %v263 = vunpack.c.l.bf16 %v247
  %v264 = vunpack.c.l.bf16 %v248
  %v265 = vunpack.c.l.bf16 %v249
  %v266 = vunpack.c.l.bf16 %v250
  %v267 = vunpack.c.l.bf16 %v251
  %v268 = vunpack.c.l.bf16 %v252
  %v269 = vadd.f32 %v221, %v253
  %v270 = vadd.f32 %v222, %v254
  %v271 = vadd.f32 %v223, %v255
  %v272 = vadd.f32 %v224, %v256
  %v273 = vadd.f32 %v225, %v257
  %v274 = vadd.f32 %v226, %v258
  %v275 = vadd.f32 %v227, %v259
  %v276 = vadd.f32 %v228, %v260
  %v277 = vadd.f32 %v229, %v261
  %v278 = vadd.f32 %v230, %v262
  %v279 = vadd.f32 %v231, %v263
  %v280 = vadd.f32 %v232, %v264
  %v281 = vadd.f32 %v233, %v265
  %v282 = vadd.f32 %v234, %v266
  %v283 = vadd.f32 %v235, %v267
  %v284 = vadd.f32 %v236, %v268
  %v285 = vmax.f32 %v269, 0.0
  %v286 = vmax.f32 %v270, 0.0
  %v287 = vmax.f32 %v271, 0.0
  %v288 = vmax.f32 %v272, 0.0
  %v289 = vmax.f32 %v273, 0.0
  %v290 = vmax.f32 %v274, 0.0
  %v291 = vmax.f32 %v275, 0.0
  %v292 = vmax.f32 %v276, 0.0
  %v293 = vmax.f32 %v277, 0.0
  %v294 = vmax.f32 %v278, 0.0
  %v295 = vmax.f32 %v279, 0.0
  %v296 = vmax.f32 %v280, 0.0
  %v297 = vmax.f32 %v281, 0.0
  %v298 = vmax.f32 %v282, 0.0
  %v299 = vmax.f32 %v283, 0.0
  %v300 = vmax.f32 %v284, 0.0
  %301 = vst [vmem:[%s5] sm:$0xff] %v285
  %302 = vst [vmem:[%s5 + $0x8] sm:$0xff] %v286
  %303 = vst [vmem:[%s5 + $0x10] sm:$0xff] %v287
  %304 = vst [vmem:[%s5 + $0x18] sm:$0xff] %v288
  %305 = vst [vmem:[%s5 + $0x20] sm:$0xff] %v289
  %306 = vst [vmem:[%s5 + $0x28] sm:$0xff] %v290
  %307 = vst [vmem:[%s5 + $0x30] sm:$0xff] %v291
  %308 = vst [vmem:[%s5 + $0x38] sm:$0xff] %v292
  %309 = vst [vmem:[%s5 + $0x40] sm:$0xff] %v293
  %310 = vst [vmem:[%s5 + $0x48] sm:$0xff] %v294
  %311 = vst [vmem:[%s5 + $0x50] sm:$0xff] %v295
  %312 = vst [vmem:[%s5 + $0x58] sm:$0xff] %v296
  %313 = vst [vmem:[%s5 + $0x60] sm:$0xff] %v297
  %314 = vst [vmem:[%s5 + $0x68] sm:$0xff] %v298
  %315 = vst [vmem:[%s5 + $0x70] sm:$0xff] %v299
  %316 = vst [vmem:[%s5 + $0x78] sm:$0xff] %v300
  // Predicated region
  $region22: #{bottleneck_forward.7} parent=0 // pred_check
    _
  $region23: #{bottleneck_forward.7} parent=0 // pred_check_branch
    %318 = sbr.rel (0) target = $region25
  $region24: #{bottleneck_forward.7} parent=0 // pred_region
    _
  $region25: #{bottleneck_forward.7} parent=0 // pred_fallthru
    _
  // Predicated region
  $region26: #{bottleneck_forward.7} parent=0 // pred_check
    _
  $region27: #{bottleneck_forward.7} parent=0 // pred_check_branch
    %320 = sbr.rel (0) target = $region29
  $region28: #{bottleneck_forward.7} parent=0 // pred_region
    _
  $region29: #{bottleneck_forward.7} parent=0 // pred_fallthru
    _

</llo_original>
